<compile_context>
chip_gen: v5e
topology: v5e:2x2
jax: 0.10.0
libtpu: 0.0.40
codegen_flags: <defaults>
</compile_context>

<pallas_src>
import numpy as np
import jax
import jax.numpy as jnp
from jax.experimental import pallas as pl
from jax.experimental.pallas import tpu as pltpu


def _round_up(x, m):
    return ((x + m - 1) // m) * m


def _make_kernel(TB, na, ne, fs_a, fs_e, api, H, ed, use_bf16):
    """Build the APIQMixer kernel for one tile of TB (= b*t tile) rows."""
    R_a = TB * na
    f32 = jnp.float32
    cdt = jnp.bfloat16 if use_bf16 else jnp.float32   # MXU operand dtype

    def dot(a, b):
        return jnp.dot(a, b, preferred_element_type=f32)

    def kernel(ally_ref, enemy_ref, q_ref,
               wa1_ref, ba1_ref, wa2_ref, ba2_ref, eah_ref, sah_ref,
               we1_ref, be1_ref, we2_ref, be2_ref, eeh_ref, seh_ref,
               wq1_ref, bq1_ref, wq2_ref, bq2_ref, ehe_ref, se_ref,
               wm_ref, bm_ref,
               ga_ref, ge_ref, gat_ref, tq_ref,
               y_ref):
        ally = ally_ref[...].astype(cdt)     # [TB*na, fs_a]
        enemy = enemy_ref[...].astype(cdt)   # [TB*ne, fs_e]
        q = q_ref[...]                       # [TB, na]  (f32)

        # ---------------- ally hypernet -------------------------------------
        # w_ally rows in torch layout [f*H + h]; hid_a[i,h] = sum_{a,f} ally*w.
        ha = jnp.maximum(dot(ally, wa1_ref[...]) + ba1_ref[...], 0.0)   # [R_a, api]
        wrows_a = dot(ha.astype(cdt), wa2_ref[...]) + ba2_ref[...]      # [R_a, fs_a*H]
        a_exp = dot(ally, eah_ref[...])        # ally replicated per-H (MXU expand)
        z_a = (a_exp * wrows_a).astype(cdt)
        rows_a = dot(z_a, sah_ref[...])                                 # [R_a, H]
        hid_a = dot(ga_ref[...], rows_a.astype(cdt))                    # [TB, H]

        # ---------------- enemy hypernet ------------------------------------
        he = jnp.maximum(dot(enemy, we1_ref[...]) + be1_ref[...], 0.0)
        wrows_e = dot(he.astype(cdt), we2_ref[...]) + be2_ref[...]      # [R_e, fs_e*H]
        e_exp = dot(enemy, eeh_ref[...])
        z_e = (e_exp * wrows_e).astype(cdt)
        rows_e = dot(z_e, seh_ref[...])                                 # [R_e, H]
        hid_e = dot(ge_ref[...], rows_e.astype(cdt))                    # [TB, H]

        hyper_hidden = hid_a + hid_e                                    # [TB, H] f32

        # ---------------- softmax over agents (qvals.detach()) --------------
        qm = q - jnp.max(q, axis=-1, keepdims=True)
        eq = jnp.exp(qm)
        nq = eq * pl.reciprocal(jnp.sum(eq, axis=-1, keepdims=True),
                                approx=True)                            # [TB, na]

        # ---------------- hyper_w_q first layer (scalar input per row) ------
        hq = jnp.maximum(nq[:, :, None] * wq1_ref[...][None, :, :]
                         + bq1_ref[...][None, :, :], 0.0).reshape(R_a, api)

        # ---------------- main_w1 --------------------------------------------
        # main_w1[r,e] = sum_h hid[bt(r),h] * (hq@wq2+bq2)[r, h*ed+e]
        t_q = dot(hq.astype(cdt), wq2_ref[...]) + bq2_ref[...]          # [R_a, H*ed]
        hid_rep = dot(gat_ref[...], hyper_hidden.astype(cdt))           # [R_a, H]
        hid_exp = dot(hid_rep.astype(cdt), ehe_ref[...])                # [R_a, H*ed]
        z2 = (hid_exp * t_q).astype(cdt)
        w1 = jnp.abs(dot(z2, se_ref[...]))                              # [R_a, ed]

        # ---------------- main_w2 / main_b2 ----------------------------------
        m = dot(hyper_hidden, wm_ref[...]) + bm_ref[...]                # [TB, ed+1]
        w2 = jnp.abs(m[:, :ed])                                         # [TB, ed]
        b2 = m[:, ed:ed + 1]                                            # [TB, 1]

        # ---------------- mixing: ELU(q @ |w1|) @ |w2| + b2 -------------------
        # mix[i,e] = sum_a q[i,a] * w1[i*na+a, e]   (masked matmul, no reshapes)
        q_lanes = dot(q.astype(cdt), tq_ref[...])                       # [TB, R_a]
        gq = (ga_ref[...] * q_lanes).astype(cdt)
        mix = dot(gq, w1.astype(cdt))                                   # [TB, ed]
        hidden = jnp.where(mix > 0,
                           mix,
                           jnp.exp(jnp.minimum(mix, 0.0)) - 1.0)        # ELU(alpha=1)
        y_ref[...] = jnp.sum(hidden * w2, axis=-1, keepdims=True) + b2

    return kernel


def _prepare_params(p, na, ne, fs_a, fs_e, api, H, ed, TB, use_bf16):
    """Host-side (free) constant construction + dtype casts for the kernel."""
    cdt = jnp.bfloat16 if use_bf16 else jnp.float32
    f32 = np.float32

    def kron(a, b):
        return np.kron(a, b).astype(f32)

    # Expansion / segment-sum constants (exact 0/1 -> exact in bf16).
    EaH = kron(np.eye(fs_a), np.ones((1, H)))     # [fs_a, fs_a*H]
    SaH = kron(np.ones((fs_a, 1)), np.eye(H))     # [fs_a*H, H]
    EeH = kron(np.eye(fs_e), np.ones((1, H)))     # [fs_e, fs_e*H]
    SeH = kron(np.ones((fs_e, 1)), np.eye(H))     # [fs_e*H, H]
    EhE = kron(np.eye(H), np.ones((1, ed)))       # [H, H*ed]
    SE = kron(np.ones((H, 1)), np.eye(ed))        # [H*ed, ed]
    Ga = kron(np.eye(TB), np.ones((1, na)))       # [TB, TB*na]  segment sum (agents)
    Ge = kron(np.eye(TB), np.ones((1, ne)))       # [TB, TB*ne]  segment sum (enemies)
    GaT = np.ascontiguousarray(Ga.T)              # [TB*na, TB]  row replication
    Tq = np.tile(np.eye(na, dtype=f32), (1, TB))  # [na, TB*na]  q lane-tiling

    def c(x):
        return jnp.asarray(x, dtype=cdt)

    def f(x):
        return jnp.asarray(x, dtype=jnp.float32)

    return [
        c(p["wa1"]), f(p["ba1"]), c(p["wa2"]), f(p["ba2"]), c(EaH), c(SaH),
        c(p["we1"]), f(p["be1"]), c(p["we2"]), f(p["be2"]), c(EeH), c(SeH),
        f(p["wq1"]), f(p["bq1"]), c(p["wq2"]), f(p["bq2"]), c(EhE), c(SE),
        f(p["wm"]), f(p["bm"]),
        c(Ga), c(Ge), c(GaT), c(Tq),
    ]


def init_params(key, fs_a, fs_e, api, H, ed):
    ks = jax.random.split(key, 14)

    def w(k, shape, scale=0.1):
        return (scale * jax.random.normal(k, shape)).astype(jnp.float32)

    return dict(
        wa1=w(ks[0], (fs_a, api)),       ba1=w(ks[1], (1, api), 0.01),
        wa2=w(ks[2], (api, fs_a * H)),   ba2=w(ks[3], (1, fs_a * H), 0.01),
        we1=w(ks[4], (fs_e, api)),       be1=w(ks[5], (1, api), 0.01),
        we2=w(ks[6], (api, fs_e * H)),   be2=w(ks[7], (1, fs_e * H), 0.01),
        wq1=w(ks[8], (1, api)),          bq1=w(ks[9], (1, api), 0.01),
        wq2=w(ks[10], (api, H * ed)),    bq2=w(ks[11], (1, H * ed), 0.01),
        wm=w(ks[12], (H, ed + 1)),       bm=w(ks[13], (1, ed + 1), 0.01),
    )


def api_qmix_forward(qvals, states, params, *, n_agents, n_enemies,
                     fs_a, fs_e, api, H, ed, TB=256, use_bf16=True,
                     vmem_limit_bytes=None):
    """Pallas forward of APIQMixer.

    TB: batch (b*t) tile.  Default 256 fits v7x's 64 MiB VMEM with headroom
    after the restructure; v5e/v6e (128 MiB) can pass TB=512 together with a
    larger vmem_limit_bytes.  TB is clamped so the grid has >= 2 steps (v7x
    shards the "parallel" axis over its two TensorCores).
    """
    b, t, na = qvals.shape
    assert na == n_agents
    BT = b * t

    TB_req = max(8, _round_up(TB, 8))
    TB_cap = _round_up(max(1, (BT + 1) // 2), 8)   # ensure >= 2 grid steps
    TB_eff = min(TB_req, TB_cap)
    BT_pad = _round_up(BT, TB_eff)
    pad = BT_pad - BT
    grid = BT_pad // TB_eff

    if vmem_limit_bytes is None:
        # Rough usage estimate (big f32 temporaries + bf16 copies + constants)
        # with headroom; capped at 64 MiB so it is valid on v7x too.
        R = TB_eff * n_agents
        est = (5 * R * H * ed
               + 5 * R * fs_a * H + 5 * TB_eff * n_enemies * fs_e * H
               + 6 * TB_eff * R
               + 4 * R * api) * 4 + (8 << 20)
        vmem_limit_bytes = int(min(max(est, 32 << 20), 64 << 20))

    q2d = qvals.reshape(BT, n_agents).astype(jnp.float32)
    states_flat = states.reshape(BT, -1).astype(jnp.float32)
    if pad:
        q2d = jnp.pad(q2d, ((0, pad), (0, 0)))
        states_flat = jnp.pad(states_flat, ((0, pad), (0, 0)))

    ally = states_flat[:, :n_agents * fs_a].reshape(BT_pad * n_agents, fs_a)
    enemy = states_flat[:, n_agents * fs_a:
                        n_agents * fs_a + n_enemies * fs_e].reshape(
                            BT_pad * n_enemies, fs_e)

    pvals = _prepare_params(params, n_agents, n_enemies, fs_a, fs_e,
                            api, H, ed, TB_eff, use_bf16)
    kernel = _make_kernel(TB_eff, n_agents, n_enemies, fs_a, fs_e, api, H, ed,
                          use_bf16)

    in_specs = [
        pl.BlockSpec((TB_eff * n_agents, fs_a), lambda i: (i, 0)),
        pl.BlockSpec((TB_eff * n_enemies, fs_e), lambda i: (i, 0)),
        pl.BlockSpec((TB_eff, n_agents), lambda i: (i, 0)),
    ] + [pl.BlockSpec(tuple(p.shape), lambda i: (0, 0)) for p in pvals]

    # Output is only BT f32 values total -> a single (masked) store per tile;
    # keeping the proven (TB, 1) block avoids an in-kernel sublane->lane
    # relayout for negligible gain.
    out_spec = pl.BlockSpec((TB_eff, 1), lambda i: (i, 0))

    y = pl.pallas_call(
        kernel,
        out_shape=jax.ShapeDtypeStruct((BT_pad, 1), jnp.float32),
        grid_spec=pltpu.PrefetchScalarGridSpec(
            num_scalar_prefetch=0,
            grid=(grid,),
            in_specs=in_specs,
            out_specs=out_spec),
        compiler_params=pltpu.CompilerParams(
            dimension_semantics=("parallel",),
            vmem_limit_bytes=vmem_limit_bytes),
    )(ally, enemy, q2d, *pvals)
    return y[:BT].reshape(b, t, 1)


def reference_forward(qvals, states, p, *, n_agents, n_enemies,
                      fs_a, fs_e, api, H, ed):
    """Pure-JAX mirror of the PyTorch APIQMixer.forward for verification."""
    b, t, na = qvals.shape
    BT = b * t
    sf = states.reshape(BT, -1)
    ally = sf[:, :na * fs_a].reshape(BT * na, fs_a)
    enemy = sf[:, na * fs_a:na * fs_a + n_enemies * fs_e].reshape(BT * n_enemies, fs_e)

    ha = jax.nn.relu(ally @ p["wa1"] + p["ba1"])
    w_ally = (ha @ p["wa2"] + p["ba2"]).reshape(BT * na, fs_a, H)
    hid_a = jnp.einsum("rf,rfh->rh", ally, w_ally).reshape(BT, na, H).sum(1)

    he = jax.nn.relu(enemy @ p["we1"] + p["be1"])
    w_enemy = (he @ p["we2"] + p["be2"]).reshape(BT * n_enemies, fs_e, H)
    hid_e = jnp.einsum("rf,rfh->rh", enemy, w_enemy).reshape(BT, n_enemies, H).sum(1)

    hyper_hidden = hid_a + hid_e                                  # [BT, H]

    nq = jax.nn.softmax(qvals.reshape(BT, na), axis=-1).reshape(BT * na, 1)
    hq = jax.nn.relu(nq @ p["wq1"] + p["bq1"])
    w2flat = hq @ p["wq2"] + p["bq2"]                             # [BT*na, H*ed]
    hyper_w2 = w2flat.reshape(BT, na, H, ed).transpose(0, 2, 1, 3).reshape(BT, H, na * ed)
    main_w1 = jnp.einsum("bh,bhk->bk", hyper_hidden, hyper_w2).reshape(BT, na, ed)

    m = hyper_hidden @ p["wm"] + p["bm"]
    main_w2 = m[:, :ed][:, :, None]
    main_b2 = m[:, ed:][:, :, None]

    main_w1 = jnp.abs(main_w1)
    main_w2 = jnp.abs(main_w2)

    q3 = qvals.reshape(BT, 1, na)
    pre = jnp.einsum("bia,bae->bie", q3, main_w1)
    hidden = jnp.where(pre > 0, pre, jnp.exp(jnp.minimum(pre, 0.0)) - 1.0)
    y = jnp.einsum("bie,bej->bij", hidden, main_w2) + main_b2
    return y.reshape(b, t, -1)


if __name__ == "__main__":
    # Small synthetic config (args): n_agents=4, n_enemies=4,
    # state_ally_feats_size=6, state_enemy_feats_size=5,
    # api_hyper_dim=64, hypernet_embed=32, mixing_embed_dim=32,
    # state_component=[24, 20] -> state_dim=44.
    n_agents, n_enemies = 4, 4
    fs_a, fs_e = 6, 5
    api, H, ed = 64, 32, 32
    b, t = 2, 8

    key = jax.random.PRNGKey(0)
    k1, k2, k3 = jax.random.split(key, 3)
    params = init_params(k1, fs_a, fs_e, api, H, ed)
    qvals = jax.random.normal(k2, (b, t, n_agents), jnp.float32)
    state_dim = n_agents * fs_a + n_enemies * fs_e
    states = jax.random.normal(k3, (b, t, state_dim), jnp.float32)

    with jax.default_matmul_precision("highest"):
        y_ref = reference_forward(qvals, states, params,
                                  n_agents=n_agents, n_enemies=n_enemies,
                                  fs_a=fs_a, fs_e=fs_e, api=api, H=H, ed=ed)

    # f32 MXU path: verifies the restructured contractions are numerically
    # faithful (only the approximate EUP reciprocal in the softmax differs).
    y32 = api_qmix_forward(qvals, states, params,
                           n_agents=n_agents, n_enemies=n_enemies,
                           fs_a=fs_a, fs_e=fs_e, api=api, H=H, ed=ed,
                           use_bf16=False)
    y32 = jax.block_until_ready(y32)
    np.testing.assert_allclose(np.asarray(y32), np.asarray(y_ref),
                               rtol=5e-3, atol=5e-3)

    # bf16-operand MXU path (default / fast): f32 accumulation, 0/1 expansion
    # matrices exact in bf16; tolerance covers bf16 operand rounding.
    y16 = api_qmix_forward(qvals, states, params,
                           n_agents=n_agents, n_enemies=n_enemies,
                           fs_a=fs_a, fs_e=fs_e, api=api, H=H, ed=ed,
                           use_bf16=True)
    y16 = jax.block_until_ready(y16)
    np.testing.assert_allclose(np.asarray(y16), np.asarray(y_ref),
                               rtol=3e-2, atol=3e-2)

    print("KERNEL_OK")
</pallas_src>

<mosaic_0001>
module attributes {stable_mosaic.version = 11 : i64} {
  func.func @kernel(%arg0: i32, %arg1: memref<32x6xf32, #tpu.memory_space<vmem>>, %arg2: memref<32x5xf32, #tpu.memory_space<vmem>>, %arg3: memref<8x4xf32, #tpu.memory_space<vmem>>, %arg4: memref<6x64xf32, #tpu.memory_space<vmem>>, %arg5: memref<1x64xf32, #tpu.memory_space<vmem>>, %arg6: memref<64x192xf32, #tpu.memory_space<vmem>>, %arg7: memref<1x192xf32, #tpu.memory_space<vmem>>, %arg8: memref<6x192xf32, #tpu.memory_space<vmem>>, %arg9: memref<192x32xf32, #tpu.memory_space<vmem>>, %arg10: memref<5x64xf32, #tpu.memory_space<vmem>>, %arg11: memref<1x64xf32, #tpu.memory_space<vmem>>, %arg12: memref<64x160xf32, #tpu.memory_space<vmem>>, %arg13: memref<1x160xf32, #tpu.memory_space<vmem>>, %arg14: memref<5x160xf32, #tpu.memory_space<vmem>>, %arg15: memref<160x32xf32, #tpu.memory_space<vmem>>, %arg16: memref<1x64xf32, #tpu.memory_space<vmem>>, %arg17: memref<1x64xf32, #tpu.memory_space<vmem>>, %arg18: memref<64x1024xf32, #tpu.memory_space<vmem>>, %arg19: memref<1x1024xf32, #tpu.memory_space<vmem>>, %arg20: memref<32x1024xf32, #tpu.memory_space<vmem>>, %arg21: memref<1024x32xf32, #tpu.memory_space<vmem>>, %arg22: memref<32x33xf32, #tpu.memory_space<vmem>>, %arg23: memref<1x33xf32, #tpu.memory_space<vmem>>, %arg24: memref<8x32xf32, #tpu.memory_space<vmem>>, %arg25: memref<8x32xf32, #tpu.memory_space<vmem>>, %arg26: memref<32x8xf32, #tpu.memory_space<vmem>>, %arg27: memref<4x32xf32, #tpu.memory_space<vmem>>, %arg28: memref<8x1xf32, #tpu.memory_space<vmem>>) attributes {dimension_semantics = [#tpu.dimension_semantics<parallel>], iteration_bounds = array<i64: 2>, scalar_prefetch = 0 : i64, scratch_operands = 0 : i64, tpu.core_type = #tpu.core_type<tc>, window_params = [{transform_indices = @transform_0, window_bounds = array<i64: 32, 6>}, {transform_indices = @transform_1, window_bounds = array<i64: 32, 5>}, {transform_indices = @transform_2, window_bounds = array<i64: 8, 4>}, {pipeline_mode = #tpu.pipeline_mode<synchronous>, transform_indices = @transform_3, window_bounds = array<i64: 6, 64>}, {pipeline_mode = #tpu.pipeline_mode<synchronous>, transform_indices = @transform_4, window_bounds = array<i64: 1, 64>}, {pipeline_mode = #tpu.pipeline_mode<synchronous>, transform_indices = @transform_5, window_bounds = array<i64: 64, 192>}, {pipeline_mode = #tpu.pipeline_mode<synchronous>, transform_indices = @transform_6, window_bounds = array<i64: 1, 192>}, {pipeline_mode = #tpu.pipeline_mode<synchronous>, transform_indices = @transform_7, window_bounds = array<i64: 6, 192>}, {pipeline_mode = #tpu.pipeline_mode<synchronous>, transform_indices = @transform_8, window_bounds = array<i64: 192, 32>}, {pipeline_mode = #tpu.pipeline_mode<synchronous>, transform_indices = @transform_9, window_bounds = array<i64: 5, 64>}, {pipeline_mode = #tpu.pipeline_mode<synchronous>, transform_indices = @transform_10, window_bounds = array<i64: 1, 64>}, {pipeline_mode = #tpu.pipeline_mode<synchronous>, transform_indices = @transform_11, window_bounds = array<i64: 64, 160>}, {pipeline_mode = #tpu.pipeline_mode<synchronous>, transform_indices = @transform_12, window_bounds = array<i64: 1, 160>}, {pipeline_mode = #tpu.pipeline_mode<synchronous>, transform_indices = @transform_13, window_bounds = array<i64: 5, 160>}, {pipeline_mode = #tpu.pipeline_mode<synchronous>, transform_indices = @transform_14, window_bounds = array<i64: 160, 32>}, {pipeline_mode = #tpu.pipeline_mode<synchronous>, transform_indices = @transform_15, window_bounds = array<i64: 1, 64>}, {pipeline_mode = #tpu.pipeline_mode<synchronous>, transform_indices = @transform_16, window_bounds = array<i64: 1, 64>}, {pipeline_mode = #tpu.pipeline_mode<synchronous>, transform_indices = @transform_17, window_bounds = array<i64: 64, 1024>}, {pipeline_mode = #tpu.pipeline_mode<synchronous>, transform_indices = @transform_18, window_bounds = array<i64: 1, 1024>}, {pipeline_mode = #tpu.pipeline_mode<synchronous>, transform_indices = @transform_19, window_bounds = array<i64: 32, 1024>}, {pipeline_mode = #tpu.pipeline_mode<synchronous>, transform_indices = @transform_20, window_bounds = array<i64: 1024, 32>}, {pipeline_mode = #tpu.pipeline_mode<synchronous>, transform_indices = @transform_21, window_bounds = array<i64: 32, 33>}, {pipeline_mode = #tpu.pipeline_mode<synchronous>, transform_indices = @transform_22, window_bounds = array<i64: 1, 33>}, {pipeline_mode = #tpu.pipeline_mode<synchronous>, transform_indices = @transform_23, window_bounds = array<i64: 8, 32>}, {pipeline_mode = #tpu.pipeline_mode<synchronous>, transform_indices = @transform_24, window_bounds = array<i64: 8, 32>}, {pipeline_mode = #tpu.pipeline_mode<synchronous>, transform_indices = @transform_25, window_bounds = array<i64: 32, 8>}, {pipeline_mode = #tpu.pipeline_mode<synchronous>, transform_indices = @transform_26, window_bounds = array<i64: 4, 32>}, {transform_indices = @transform_27, window_bounds = array<i64: 8, 1>}]} {
    %c0 = arith.constant 0 : index
    %c0_0 = arith.constant 0 : index
    %0 = vector.load %arg1[%c0, %c0_0] : memref<32x6xf32, #tpu.memory_space<vmem>>, vector<32x6xf32>
    %c0_1 = arith.constant 0 : index
    %c0_2 = arith.constant 0 : index
    %1 = vector.load %arg2[%c0_1, %c0_2] : memref<32x5xf32, #tpu.memory_space<vmem>>, vector<32x5xf32>
    %c0_3 = arith.constant 0 : index
    %c0_4 = arith.constant 0 : index
    %2 = vector.load %arg3[%c0_3, %c0_4] : memref<8x4xf32, #tpu.memory_space<vmem>>, vector<8x4xf32>
    %c0_5 = arith.constant 0 : index
    %c0_6 = arith.constant 0 : index
    %3 = vector.load %arg4[%c0_5, %c0_6] : memref<6x64xf32, #tpu.memory_space<vmem>>, vector<6x64xf32>
    %cst = arith.constant dense<0.000000e+00> : vector<32x64xf32>
    %4 = tpu.matmul %0, %3, %cst {dimension_numbers = #tpu.dot_dimension_numbers<[1], [0], [0], [1], [0, 0, 1, 1], [], []>} : vector<32x6xf32>, vector<6x64xf32>, vector<32x64xf32> -> vector<32x64xf32>
    %c0_7 = arith.constant 0 : index
    %c0_8 = arith.constant 0 : index
    %5 = vector.load %arg5[%c0_7, %c0_8] : memref<1x64xf32, #tpu.memory_space<vmem>>, vector<1x64xf32>
    %6 = vector.broadcast %5 : vector<1x64xf32> to vector<32x64xf32>
    %7 = arith.addf %4, %6 : vector<32x64xf32>
    %cst_9 = arith.constant 0.000000e+00 : f32
    %8 = vector.broadcast %cst_9 : f32 to vector<32x64xf32>
    %9 = arith.maximumf %7, %8 : vector<32x64xf32>
    %c0_10 = arith.constant 0 : index
    %c0_11 = arith.constant 0 : index
    %10 = vector.load %arg6[%c0_10, %c0_11] : memref<64x192xf32, #tpu.memory_space<vmem>>, vector<64x192xf32>
    %cst_12 = arith.constant dense<0.000000e+00> : vector<32x192xf32>
    %11 = tpu.matmul %9, %10, %cst_12 {dimension_numbers = #tpu.dot_dimension_numbers<[1], [0], [0], [1], [0, 0, 1, 1], [], []>} : vector<32x64xf32>, vector<64x192xf32>, vector<32x192xf32> -> vector<32x192xf32>
    %c0_13 = arith.constant 0 : index
    %c0_14 = arith.constant 0 : index
    %12 = vector.load %arg7[%c0_13, %c0_14] : memref<1x192xf32, #tpu.memory_space<vmem>>, vector<1x192xf32>
    %13 = vector.broadcast %12 : vector<1x192xf32> to vector<32x192xf32>
    %14 = arith.addf %11, %13 : vector<32x192xf32>
    %c0_15 = arith.constant 0 : index
    %c0_16 = arith.constant 0 : index
    %15 = vector.load %arg8[%c0_15, %c0_16] : memref<6x192xf32, #tpu.memory_space<vmem>>, vector<6x192xf32>
    %cst_17 = arith.constant dense<0.000000e+00> : vector<32x192xf32>
    %16 = tpu.matmul %0, %15, %cst_17 {dimension_numbers = #tpu.dot_dimension_numbers<[1], [0], [0], [1], [0, 0, 1, 1], [], []>} : vector<32x6xf32>, vector<6x192xf32>, vector<32x192xf32> -> vector<32x192xf32>
    %17 = arith.mulf %16, %14 : vector<32x192xf32>
    %c0_18 = arith.constant 0 : index
    %c0_19 = arith.constant 0 : index
    %18 = vector.load %arg9[%c0_18, %c0_19] : memref<192x32xf32, #tpu.memory_space<vmem>>, vector<192x32xf32>
    %cst_20 = arith.constant dense<0.000000e+00> : vector<32x32xf32>
    %19 = tpu.matmul %17, %18, %cst_20 {dimension_numbers = #tpu.dot_dimension_numbers<[1], [0], [0], [1], [0, 0, 1, 1], [], []>} : vector<32x192xf32>, vector<192x32xf32>, vector<32x32xf32> -> vector<32x32xf32>
    %c0_21 = arith.constant 0 : index
    %c0_22 = arith.constant 0 : index
    %20 = vector.load %arg24[%c0_21, %c0_22] : memref<8x32xf32, #tpu.memory_space<vmem>>, vector<8x32xf32>
    %cst_23 = arith.constant dense<0.000000e+00> : vector<8x32xf32>
    %21 = tpu.matmul %20, %19, %cst_23 {dimension_numbers = #tpu.dot_dimension_numbers<[1], [0], [0], [1], [0, 0, 1, 1], [], []>} : vector<8x32xf32>, vector<32x32xf32>, vector<8x32xf32> -> vector<8x32xf32>
    %c0_24 = arith.constant 0 : index
    %c0_25 = arith.constant 0 : index
    %22 = vector.load %arg10[%c0_24, %c0_25] : memref<5x64xf32, #tpu.memory_space<vmem>>, vector<5x64xf32>
    %cst_26 = arith.constant dense<0.000000e+00> : vector<32x64xf32>
    %23 = tpu.matmul %1, %22, %cst_26 {dimension_numbers = #tpu.dot_dimension_numbers<[1], [0], [0], [1], [0, 0, 1, 1], [], []>} : vector<32x5xf32>, vector<5x64xf32>, vector<32x64xf32> -> vector<32x64xf32>
    %c0_27 = arith.constant 0 : index
    %c0_28 = arith.constant 0 : index
    %24 = vector.load %arg11[%c0_27, %c0_28] : memref<1x64xf32, #tpu.memory_space<vmem>>, vector<1x64xf32>
    %25 = vector.broadcast %24 : vector<1x64xf32> to vector<32x64xf32>
    %26 = arith.addf %23, %25 : vector<32x64xf32>
    %cst_29 = arith.constant 0.000000e+00 : f32
    %27 = vector.broadcast %cst_29 : f32 to vector<32x64xf32>
    %28 = arith.maximumf %26, %27 : vector<32x64xf32>
    %c0_30 = arith.constant 0 : index
    %c0_31 = arith.constant 0 : index
    %29 = vector.load %arg12[%c0_30, %c0_31] : memref<64x160xf32, #tpu.memory_space<vmem>>, vector<64x160xf32>
    %cst_32 = arith.constant dense<0.000000e+00> : vector<32x160xf32>
    %30 = tpu.matmul %28, %29, %cst_32 {dimension_numbers = #tpu.dot_dimension_numbers<[1], [0], [0], [1], [0, 0, 1, 1], [], []>} : vector<32x64xf32>, vector<64x160xf32>, vector<32x160xf32> -> vector<32x160xf32>
    %c0_33 = arith.constant 0 : index
    %c0_34 = arith.constant 0 : index
    %31 = vector.load %arg13[%c0_33, %c0_34] : memref<1x160xf32, #tpu.memory_space<vmem>>, vector<1x160xf32>
    %32 = vector.broadcast %31 : vector<1x160xf32> to vector<32x160xf32>
    %33 = arith.addf %30, %32 : vector<32x160xf32>
    %c0_35 = arith.constant 0 : index
    %c0_36 = arith.constant 0 : index
    %34 = vector.load %arg14[%c0_35, %c0_36] : memref<5x160xf32, #tpu.memory_space<vmem>>, vector<5x160xf32>
    %cst_37 = arith.constant dense<0.000000e+00> : vector<32x160xf32>
    %35 = tpu.matmul %1, %34, %cst_37 {dimension_numbers = #tpu.dot_dimension_numbers<[1], [0], [0], [1], [0, 0, 1, 1], [], []>} : vector<32x5xf32>, vector<5x160xf32>, vector<32x160xf32> -> vector<32x160xf32>
    %36 = arith.mulf %35, %33 : vector<32x160xf32>
    %c0_38 = arith.constant 0 : index
    %c0_39 = arith.constant 0 : index
    %37 = vector.load %arg15[%c0_38, %c0_39] : memref<160x32xf32, #tpu.memory_space<vmem>>, vector<160x32xf32>
    %cst_40 = arith.constant dense<0.000000e+00> : vector<32x32xf32>
    %38 = tpu.matmul %36, %37, %cst_40 {dimension_numbers = #tpu.dot_dimension_numbers<[1], [0], [0], [1], [0, 0, 1, 1], [], []>} : vector<32x160xf32>, vector<160x32xf32>, vector<32x32xf32> -> vector<32x32xf32>
    %c0_41 = arith.constant 0 : index
    %c0_42 = arith.constant 0 : index
    %39 = vector.load %arg25[%c0_41, %c0_42] : memref<8x32xf32, #tpu.memory_space<vmem>>, vector<8x32xf32>
    %cst_43 = arith.constant dense<0.000000e+00> : vector<8x32xf32>
    %40 = tpu.matmul %39, %38, %cst_43 {dimension_numbers = #tpu.dot_dimension_numbers<[1], [0], [0], [1], [0, 0, 1, 1], [], []>} : vector<8x32xf32>, vector<32x32xf32>, vector<8x32xf32> -> vector<8x32xf32>
    %41 = arith.addf %21, %40 : vector<8x32xf32>
    %cst_44 = arith.constant dense<0xFF800000> : vector<8xf32>
    %42 = vector.multi_reduction <maximumf>, %2, %cst_44 [1] : vector<8x4xf32> to vector<8xf32>
    %43 = vector.shape_cast %42 : vector<8xf32> to vector<8x1xf32>
    %44 = vector.broadcast %43 : vector<8x1xf32> to vector<8x4xf32>
    %45 = arith.subf %2, %44 : vector<8x4xf32>
    %46 = math.exp %45 : vector<8x4xf32>
    %cst_45 = arith.constant dense<0.000000e+00> : vector<8xf32>
    %47 = vector.multi_reduction <add>, %46, %cst_45 [1] : vector<8x4xf32> to vector<8xf32>
    %48 = vector.shape_cast %47 : vector<8xf32> to vector<8x1xf32>
    %49 = tpu.reciprocal %48 {approx = true} : vector<8x1xf32> -> vector<8x1xf32>
    %50 = vector.broadcast %49 : vector<8x1xf32> to vector<8x4xf32>
    %51 = arith.mulf %46, %50 : vector<8x4xf32>
    %52 = vector.shape_cast %51 : vector<8x4xf32> to vector<8x4x1xf32>
    %c0_46 = arith.constant 0 : index
    %c0_47 = arith.constant 0 : index
    %53 = vector.load %arg16[%c0_46, %c0_47] : memref<1x64xf32, #tpu.memory_space<vmem>>, vector<1x64xf32>
    %54 = vector.shape_cast %53 : vector<1x64xf32> to vector<1x1x64xf32>
    %55 = vector.broadcast %52 : vector<8x4x1xf32> to vector<8x4x64xf32>
    %56 = vector.broadcast %54 : vector<1x1x64xf32> to vector<8x4x64xf32>
    %57 = arith.mulf %55, %56 : vector<8x4x64xf32>
    %c0_48 = arith.constant 0 : index
    %c0_49 = arith.constant 0 : index
    %58 = vector.load %arg17[%c0_48, %c0_49] : memref<1x64xf32, #tpu.memory_space<vmem>>, vector<1x64xf32>
    %59 = vector.shape_cast %58 : vector<1x64xf32> to vector<1x1x64xf32>
    %60 = vector.broadcast %59 : vector<1x1x64xf32> to vector<8x4x64xf32>
    %61 = arith.addf %57, %60 : vector<8x4x64xf32>
    %cst_50 = arith.constant 0.000000e+00 : f32
    %62 = vector.broadcast %cst_50 : f32 to vector<8x4x64xf32>
    %63 = arith.maximumf %61, %62 : vector<8x4x64xf32>
    %64 = vector.shape_cast %63 : vector<8x4x64xf32> to vector<32x64xf32>
    %c0_51 = arith.constant 0 : index
    %c0_52 = arith.constant 0 : index
    %65 = vector.load %arg18[%c0_51, %c0_52] : memref<64x1024xf32, #tpu.memory_space<vmem>>, vector<64x1024xf32>
    %cst_53 = arith.constant dense<0.000000e+00> : vector<32x1024xf32>
    %66 = tpu.matmul %64, %65, %cst_53 {dimension_numbers = #tpu.dot_dimension_numbers<[1], [0], [0], [1], [0, 0, 1, 1], [], []>} : vector<32x64xf32>, vector<64x1024xf32>, vector<32x1024xf32> -> vector<32x1024xf32>
    %c0_54 = arith.constant 0 : index
    %c0_55 = arith.constant 0 : index
    %67 = vector.load %arg19[%c0_54, %c0_55] : memref<1x1024xf32, #tpu.memory_space<vmem>>, vector<1x1024xf32>
    %68 = vector.broadcast %67 : vector<1x1024xf32> to vector<32x1024xf32>
    %69 = arith.addf %66, %68 : vector<32x1024xf32>
    %c0_56 = arith.constant 0 : index
    %c0_57 = arith.constant 0 : index
    %70 = vector.load %arg26[%c0_56, %c0_57] : memref<32x8xf32, #tpu.memory_space<vmem>>, vector<32x8xf32>
    %cst_58 = arith.constant dense<0.000000e+00> : vector<32x32xf32>
    %71 = tpu.matmul %70, %41, %cst_58 {dimension_numbers = #tpu.dot_dimension_numbers<[1], [0], [0], [1], [0, 0, 1, 1], [], []>} : vector<32x8xf32>, vector<8x32xf32>, vector<32x32xf32> -> vector<32x32xf32>
    %c0_59 = arith.constant 0 : index
    %c0_60 = arith.constant 0 : index
    %72 = vector.load %arg20[%c0_59, %c0_60] : memref<32x1024xf32, #tpu.memory_space<vmem>>, vector<32x1024xf32>
    %cst_61 = arith.constant dense<0.000000e+00> : vector<32x1024xf32>
    %73 = tpu.matmul %71, %72, %cst_61 {dimension_numbers = #tpu.dot_dimension_numbers<[1], [0], [0], [1], [0, 0, 1, 1], [], []>} : vector<32x32xf32>, vector<32x1024xf32>, vector<32x1024xf32> -> vector<32x1024xf32>
    %74 = arith.mulf %73, %69 : vector<32x1024xf32>
    %c0_62 = arith.constant 0 : index
    %c0_63 = arith.constant 0 : index
    %75 = vector.load %arg21[%c0_62, %c0_63] : memref<1024x32xf32, #tpu.memory_space<vmem>>, vector<1024x32xf32>
    %cst_64 = arith.constant dense<0.000000e+00> : vector<32x32xf32>
    %76 = tpu.matmul %74, %75, %cst_64 {dimension_numbers = #tpu.dot_dimension_numbers<[1], [0], [0], [1], [0, 0, 1, 1], [], []>} : vector<32x1024xf32>, vector<1024x32xf32>, vector<32x32xf32> -> vector<32x32xf32>
    %77 = math.absf %76 : vector<32x32xf32>
    %c0_65 = arith.constant 0 : index
    %c0_66 = arith.constant 0 : index
    %78 = vector.load %arg22[%c0_65, %c0_66] : memref<32x33xf32, #tpu.memory_space<vmem>>, vector<32x33xf32>
    %cst_67 = arith.constant dense<0.000000e+00> : vector<8x33xf32>
    %79 = tpu.matmul %41, %78, %cst_67 {dimension_numbers = #tpu.dot_dimension_numbers<[1], [0], [0], [1], [0, 0, 1, 1], [], []>} : vector<8x32xf32>, vector<32x33xf32>, vector<8x33xf32> -> vector<8x33xf32>
    %c0_68 = arith.constant 0 : index
    %c0_69 = arith.constant 0 : index
    %80 = vector.load %arg23[%c0_68, %c0_69] : memref<1x33xf32, #tpu.memory_space<vmem>>, vector<1x33xf32>
    %81 = vector.broadcast %80 : vector<1x33xf32> to vector<8x33xf32>
    %82 = arith.addf %79, %81 : vector<8x33xf32>
    %83 = vector.extract_strided_slice %82 {offsets = [0, 0], sizes = [8, 32], strides = [1, 1]} : vector<8x33xf32> to vector<8x32xf32>
    %84 = math.absf %83 : vector<8x32xf32>
    %85 = vector.extract_strided_slice %82 {offsets = [0, 32], sizes = [8, 1], strides = [1, 1]} : vector<8x33xf32> to vector<8x1xf32>
    %c0_70 = arith.constant 0 : index
    %c0_71 = arith.constant 0 : index
    %86 = vector.load %arg27[%c0_70, %c0_71] : memref<4x32xf32, #tpu.memory_space<vmem>>, vector<4x32xf32>
    %cst_72 = arith.constant dense<0.000000e+00> : vector<8x32xf32>
    %87 = tpu.matmul %2, %86, %cst_72 {dimension_numbers = #tpu.dot_dimension_numbers<[1], [0], [0], [1], [0, 0, 1, 1], [], []>} : vector<8x4xf32>, vector<4x32xf32>, vector<8x32xf32> -> vector<8x32xf32>
    %c0_73 = arith.constant 0 : index
    %c0_74 = arith.constant 0 : index
    %88 = vector.load %arg24[%c0_73, %c0_74] : memref<8x32xf32, #tpu.memory_space<vmem>>, vector<8x32xf32>
    %89 = arith.mulf %88, %87 : vector<8x32xf32>
    %cst_75 = arith.constant dense<0.000000e+00> : vector<8x32xf32>
    %90 = tpu.matmul %89, %77, %cst_75 {dimension_numbers = #tpu.dot_dimension_numbers<[1], [0], [0], [1], [0, 0, 1, 1], [], []>} : vector<8x32xf32>, vector<32x32xf32>, vector<8x32xf32> -> vector<8x32xf32>
    %cst_76 = arith.constant 0.000000e+00 : f32
    %91 = vector.broadcast %cst_76 : f32 to vector<8x32xf32>
    %92 = arith.cmpf ogt, %90, %91 : vector<8x32xf32>
    %cst_77 = arith.constant 0.000000e+00 : f32
    %93 = vector.broadcast %cst_77 : f32 to vector<8x32xf32>
    %94 = arith.minimumf %90, %93 : vector<8x32xf32>
    %95 = math.exp %94 : vector<8x32xf32>
    %cst_78 = arith.constant 1.000000e+00 : f32
    %96 = vector.broadcast %cst_78 : f32 to vector<8x32xf32>
    %97 = arith.subf %95, %96 : vector<8x32xf32>
    %98 = arith.select %92, %90, %97 : vector<8x32xi1>, vector<8x32xf32>
    %99 = arith.mulf %98, %84 : vector<8x32xf32>
    %cst_79 = arith.constant dense<0.000000e+00> : vector<8xf32>
    %100 = vector.multi_reduction <add>, %99, %cst_79 [1] : vector<8x32xf32> to vector<8xf32>
    %101 = vector.shape_cast %100 : vector<8xf32> to vector<8x1xf32>
    %102 = arith.addf %101, %85 : vector<8x1xf32>
    %c0_80 = arith.constant 0 : index
    %c0_81 = arith.constant 0 : index
    %103 = vector.load %arg28[%c0_80, %c0_81] : memref<8x1xf32, #tpu.memory_space<vmem>>, vector<8x1xf32>
    tpu.vector_store %arg28[%c0_80, %c0_81], %102 {strides = array<i32>} : memref<8x1xf32, #tpu.memory_space<vmem>>, vector<8x1xf32>,
    return
  }
  func.func @transform_0(%arg0: i32) -> (i32, i32) {
    %c0_i32 = arith.constant 0 : i32
    %c0_i32_0 = arith.constant 0 : i32
    return %arg0, %c0_i32 : i32, i32
  }
  func.func @transform_1(%arg0: i32) -> (i32, i32) {
    %c0_i32 = arith.constant 0 : i32
    %c0_i32_0 = arith.constant 0 : i32
    return %arg0, %c0_i32 : i32, i32
  }
  func.func @transform_2(%arg0: i32) -> (i32, i32) {
    %c0_i32 = arith.constant 0 : i32
    %c0_i32_0 = arith.constant 0 : i32
    return %arg0, %c0_i32 : i32, i32
  }
  func.func @transform_3(%arg0: i32) -> (i32, i32) {
    %c0_i32 = arith.constant 0 : i32
    %c0_i32_0 = arith.constant 0 : i32
    %c0_i32_1 = arith.constant 0 : i32
    return %c0_i32, %c0_i32_0 : i32, i32
  }
  func.func @transform_4(%arg0: i32) -> (i32, i32) {
    %c0_i32 = arith.constant 0 : i32
    %c0_i32_0 = arith.constant 0 : i32
    %c0_i32_1 = arith.constant 0 : i32
    return %c0_i32, %c0_i32_0 : i32, i32
  }
  func.func @transform_5(%arg0: i32) -> (i32, i32) {
    %c0_i32 = arith.constant 0 : i32
    %c0_i32_0 = arith.constant 0 : i32
    %c0_i32_1 = arith.constant 0 : i32
    return %c0_i32, %c0_i32_0 : i32, i32
  }
  func.func @transform_6(%arg0: i32) -> (i32, i32) {
    %c0_i32 = arith.constant 0 : i32
    %c0_i32_0 = arith.constant 0 : i32
    %c0_i32_1 = arith.constant 0 : i32
    return %c0_i32, %c0_i32_0 : i32, i32
  }
  func.func @transform_7(%arg0: i32) -> (i32, i32) {
    %c0_i32 = arith.constant 0 : i32
    %c0_i32_0 = arith.constant 0 : i32
    %c0_i32_1 = arith.constant 0 : i32
    return %c0_i32, %c0_i32_0 : i32, i32
  }
  func.func @transform_8(%arg0: i32) -> (i32, i32) {
    %c0_i32 = arith.constant 0 : i32
    %c0_i32_0 = arith.constant 0 : i32
    %c0_i32_1 = arith.constant 0 : i32
    return %c0_i32, %c0_i32_0 : i32, i32
  }
  func.func @transform_9(%arg0: i32) -> (i32, i32) {
    %c0_i32 = arith.constant 0 : i32
    %c0_i32_0 = arith.constant 0 : i32
    %c0_i32_1 = arith.constant 0 : i32
    return %c0_i32, %c0_i32_0 : i32, i32
  }
  func.func @transform_10(%arg0: i32) -> (i32, i32) {
    %c0_i32 = arith.constant 0 : i32
    %c0_i32_0 = arith.constant 0 : i32
    %c0_i32_1 = arith.constant 0 : i32
    return %c0_i32, %c0_i32_0 : i32, i32
  }
  func.func @transform_11(%arg0: i32) -> (i32, i32) {
    %c0_i32 = arith.constant 0 : i32
    %c0_i32_0 = arith.constant 0 : i32
    %c0_i32_1 = arith.constant 0 : i32
    return %c0_i32, %c0_i32_0 : i32, i32
  }
  func.func @transform_12(%arg0: i32) -> (i32, i32) {
    %c0_i32 = arith.constant 0 : i32
    %c0_i32_0 = arith.constant 0 : i32
    %c0_i32_1 = arith.constant 0 : i32
    return %c0_i32, %c0_i32_0 : i32, i32
  }
  func.func @transform_13(%arg0: i32) -> (i32, i32) {
    %c0_i32 = arith.constant 0 : i32
    %c0_i32_0 = arith.constant 0 : i32
    %c0_i32_1 = arith.constant 0 : i32
    return %c0_i32, %c0_i32_0 : i32, i32
  }
  func.func @transform_14(%arg0: i32) -> (i32, i32) {
    %c0_i32 = arith.constant 0 : i32
    %c0_i32_0 = arith.constant 0 : i32
    %c0_i32_1 = arith.constant 0 : i32
    return %c0_i32, %c0_i32_0 : i32, i32
  }
  func.func @transform_15(%arg0: i32) -> (i32, i32) {
    %c0_i32 = arith.constant 0 : i32
    %c0_i32_0 = arith.constant 0 : i32
    %c0_i32_1 = arith.constant 0 : i32
    return %c0_i32, %c0_i32_0 : i32, i32
  }
  func.func @transform_16(%arg0: i32) -> (i32, i32) {
    %c0_i32 = arith.constant 0 : i32
    %c0_i32_0 = arith.constant 0 : i32
    %c0_i32_1 = arith.constant 0 : i32
    return %c0_i32, %c0_i32_0 : i32, i32
  }
  func.func @transform_17(%arg0: i32) -> (i32, i32) {
    %c0_i32 = arith.constant 0 : i32
    %c0_i32_0 = arith.constant 0 : i32
    %c0_i32_1 = arith.constant 0 : i32
    return %c0_i32, %c0_i32_0 : i32, i32
  }
  func.func @transform_18(%arg0: i32) -> (i32, i32) {
    %c0_i32 = arith.constant 0 : i32
    %c0_i32_0 = arith.constant 0 : i32
    %c0_i32_1 = arith.constant 0 : i32
    return %c0_i32, %c0_i32_0 : i32, i32
  }
  func.func @transform_19(%arg0: i32) -> (i32, i32) {
    %c0_i32 = arith.constant 0 : i32
    %c0_i32_0 = arith.constant 0 : i32
    %c0_i32_1 = arith.constant 0 : i32
    return %c0_i32, %c0_i32_0 : i32, i32
  }
  func.func @transform_20(%arg0: i32) -> (i32, i32) {
    %c0_i32 = arith.constant 0 : i32
    %c0_i32_0 = arith.constant 0 : i32
    %c0_i32_1 = arith.constant 0 : i32
    return %c0_i32, %c0_i32_0 : i32, i32
  }
  func.func @transform_21(%arg0: i32) -> (i32, i32) {
    %c0_i32 = arith.constant 0 : i32
    %c0_i32_0 = arith.constant 0 : i32
    %c0_i32_1 = arith.constant 0 : i32
    return %c0_i32, %c0_i32_0 : i32, i32
  }
  func.func @transform_22(%arg0: i32) -> (i32, i32) {
    %c0_i32 = arith.constant 0 : i32
    %c0_i32_0 = arith.constant 0 : i32
    %c0_i32_1 = arith.constant 0 : i32
    return %c0_i32, %c0_i32_0 : i32, i32
  }
  func.func @transform_23(%arg0: i32) -> (i32, i32) {
    %c0_i32 = arith.constant 0 : i32
    %c0_i32_0 = arith.constant 0 : i32
    %c0_i32_1 = arith.constant 0 : i32
    return %c0_i32, %c0_i32_0 : i32, i32
  }
  func.func @transform_24(%arg0: i32) -> (i32, i32) {
    %c0_i32 = arith.constant 0 : i32
    %c0_i32_0 = arith.constant 0 : i32
    %c0_i32_1 = arith.constant 0 : i32
    return %c0_i32, %c0_i32_0 : i32, i32
  }
  func.func @transform_25(%arg0: i32) -> (i32, i32) {
    %c0_i32 = arith.constant 0 : i32
    %c0_i32_0 = arith.constant 0 : i32
    %c0_i32_1 = arith.constant 0 : i32
    return %c0_i32, %c0_i32_0 : i32, i32
  }
  func.func @transform_26(%arg0: i32) -> (i32, i32) {
    %c0_i32 = arith.constant 0 : i32
    %c0_i32_0 = arith.constant 0 : i32
    %c0_i32_1 = arith.constant 0 : i32
    return %c0_i32, %c0_i32_0 : i32, i32
  }
  func.func @transform_27(%arg0: i32) -> (i32, i32) {
    %c0_i32 = arith.constant 0 : i32
    %c0_i32_0 = arith.constant 0 : i32
    return %arg0, %c0_i32 : i32, i32
  }
}

</mosaic_0001>

<llo_original>
// kernel: tpu_custom_call.1
$region0: #{tpu_custom_call.1}
  #allocation0 [shape = 'u32[]', space=smem, size = 0x4, offset = 0x4, fixed_abs, tag = 'smem constant byte address 0x4 - core index']
  #allocation1 [shape = 'u32[72,128]{1,0:T(1,128)}', space=vmem, size = 0x9000, scoped, tag = 'internal scratch']
  %s0 = inlined_call_operand.vmem [shape: f32[64,6], index: 0, kind: input, shape index: {}]
  %s1 = inlined_call_operand.vmem [shape: f32[64,5], index: 1, kind: input, shape index: {}]
  %s2 = inlined_call_operand.vmem [shape: f32[16,4], index: 2, kind: input, shape index: {}]
  %s3 = inlined_call_operand.vmem [shape: f32[6,64], index: 3, kind: input, shape index: {}]
  %s4 = inlined_call_operand.vmem [shape: f32[1,64], index: 4, kind: input, shape index: {}]
  %s5 = inlined_call_operand.vmem [shape: f32[64,192], index: 5, kind: input, shape index: {}]
  %s6 = inlined_call_operand.vmem [shape: f32[1,192], index: 6, kind: input, shape index: {}]
  %s7 = inlined_call_operand.vmem [shape: f32[6,192], index: 7, kind: input, shape index: {}]
  %s8 = inlined_call_operand.vmem [shape: f32[192,32], index: 8, kind: input, shape index: {}]
  %s9 = inlined_call_operand.vmem [shape: f32[5,64], index: 9, kind: input, shape index: {}]
  %s10 = inlined_call_operand.vmem [shape: f32[1,64], index: 10, kind: input, shape index: {}]
  %s11 = inlined_call_operand.vmem [shape: f32[64,160], index: 11, kind: input, shape index: {}]
  %s12 = inlined_call_operand.vmem [shape: f32[1,160], index: 12, kind: input, shape index: {}]
  %s13 = inlined_call_operand.vmem [shape: f32[5,160], index: 13, kind: input, shape index: {}]
  %s14 = inlined_call_operand.vmem [shape: f32[160,32], index: 14, kind: input, shape index: {}]
  %s15 = inlined_call_operand.vmem [shape: f32[1,64], index: 15, kind: input, shape index: {}]
  %s16 = inlined_call_operand.vmem [shape: f32[1,64], index: 16, kind: input, shape index: {}]
  %s17 = inlined_call_operand.vmem [shape: f32[64,1024], index: 17, kind: input, shape index: {}]
  %s18 = inlined_call_operand.vmem [shape: f32[1,1024], index: 18, kind: input, shape index: {}]
  %s19 = inlined_call_operand.vmem [shape: f32[32,1024], index: 19, kind: input, shape index: {}]
  %s20 = inlined_call_operand.vmem [shape: f32[1024,32], index: 20, kind: input, shape index: {}]
  %s21 = inlined_call_operand.vmem [shape: f32[32,33], index: 21, kind: input, shape index: {}]
  %s22 = inlined_call_operand.vmem [shape: f32[1,33], index: 22, kind: input, shape index: {}]
  %s23 = inlined_call_operand.vmem [shape: f32[8,32], index: 23, kind: input, shape index: {}]
  %s24 = inlined_call_operand.vmem [shape: f32[8,32], index: 24, kind: input, shape index: {}]
  %s25 = inlined_call_operand.vmem [shape: f32[32,8], index: 25, kind: input, shape index: {}]
  %s26 = inlined_call_operand.vmem [shape: f32[4,32], index: 26, kind: input, shape index: {}]
  %s27 = inlined_call_operand.vmem [shape: f32[16,1], index: 27, kind: output, shape index: {}]
  %s28 = sld [smem:[#allocation0]]
  $region141: #{tpu_custom_call.1} parent=0
    _
  %s30 = ssub.s32 1, %s28
  %s31 = scalar_select 0, %s30, %s28
  loop: start=0, step=1, limit=4
  $region2: #{tpu_custom_call.1} parent=0 // loop_pre_header
    _
  $region3: #{tpu_custom_call.1} parent=0 // loop_header
    %s33 = sphi 0, %s37
    %p34 = scmp.ge.s32.totalorder %s33, 4
    %s43 = sphi 0, %s45
    %s46 = sphi 0, %s43
    %s47 = sphi 0, %s46
    %s63 = sphi 0, %s47
    %s69 = sphi 0, %s71
    %s72 = sphi 0, %s69
    %s73 = sphi 0, %s72
    %s89 = sphi 0, %s73
    %s95 = sphi 0, %s97
    %s98 = sphi 0, %s95
    %s99 = sphi 0, %s98
    %s115 = sphi 0, %s99
    %s119 = sphi 0, %s119
    %s121 = sphi 0, %s119
    %s122 = sphi 0, %s121
    %s136 = sphi 0, %s122
    %s140 = sphi 0, %s140
    %s142 = sphi 0, %s140
    %s143 = sphi 0, %s142
    %s157 = sphi 0, %s143
    %s161 = sphi 0, %s161
    %s163 = sphi 0, %s161
    %s164 = sphi 0, %s163
    %s178 = sphi 0, %s164
    %s182 = sphi 0, %s182
    %s184 = sphi 0, %s182
    %s185 = sphi 0, %s184
    %s199 = sphi 0, %s185
    %s203 = sphi 0, %s203
    %s205 = sphi 0, %s203
    %s206 = sphi 0, %s205
    %s220 = sphi 0, %s206
    %s224 = sphi 0, %s224
    %s226 = sphi 0, %s224
    %s227 = sphi 0, %s226
    %s241 = sphi 0, %s227
    %s245 = sphi 0, %s245
    %s247 = sphi 0, %s245
    %s248 = sphi 0, %s247
    %s262 = sphi 0, %s248
    %s266 = sphi 0, %s266
    %s268 = sphi 0, %s266
    %s269 = sphi 0, %s268
    %s283 = sphi 0, %s269
    %s287 = sphi 0, %s287
    %s289 = sphi 0, %s287
    %s290 = sphi 0, %s289
    %s304 = sphi 0, %s290
    %s308 = sphi 0, %s308
    %s310 = sphi 0, %s308
    %s311 = sphi 0, %s310
    %s325 = sphi 0, %s311
    %s329 = sphi 0, %s329
    %s331 = sphi 0, %s329
    %s332 = sphi 0, %s331
    %s346 = sphi 0, %s332
    %s350 = sphi 0, %s350
    %s352 = sphi 0, %s350
    %s353 = sphi 0, %s352
    %s367 = sphi 0, %s353
    %s371 = sphi 0, %s371
    %s373 = sphi 0, %s371
    %s374 = sphi 0, %s373
    %s388 = sphi 0, %s374
    %s392 = sphi 0, %s392
    %s394 = sphi 0, %s392
    %s395 = sphi 0, %s394
    %s409 = sphi 0, %s395
    %s413 = sphi 0, %s413
    %s415 = sphi 0, %s413
    %s416 = sphi 0, %s415
    %s430 = sphi 0, %s416
    %s434 = sphi 0, %s434
    %s436 = sphi 0, %s434
    %s437 = sphi 0, %s436
    %s451 = sphi 0, %s437
    %s455 = sphi 0, %s455
    %s457 = sphi 0, %s455
    %s458 = sphi 0, %s457
    %s472 = sphi 0, %s458
    %s476 = sphi 0, %s476
    %s478 = sphi 0, %s476
    %s479 = sphi 0, %s478
    %s493 = sphi 0, %s479
    %s497 = sphi 0, %s497
    %s499 = sphi 0, %s497
    %s500 = sphi 0, %s499
    %s514 = sphi 0, %s500
    %s518 = sphi 0, %s518
    %s520 = sphi 0, %s518
    %s521 = sphi 0, %s520
    %s535 = sphi 0, %s521
    %s539 = sphi 0, %s539
    %s541 = sphi 0, %s539
    %s542 = sphi 0, %s541
    %s556 = sphi 0, %s542
    %s560 = sphi 0, %s560
    %s562 = sphi 0, %s560
    %s563 = sphi 0, %s562
    %s577 = sphi 0, %s563
    %s581 = sphi 0, %s581
    %s583 = sphi 0, %s581
    %s584 = sphi 0, %s583
    %s598 = sphi 0, %s584
    %s602 = sphi 0, %s602
    %s604 = sphi 0, %s602
    %s605 = sphi 0, %s604
    %s619 = sphi 0, %s605
    %s625 = sphi 0, %s627
    %s628 = sphi 0, %s625
    %s629 = sphi 0, %s628
    %s645 = sphi 0, %s629
  $region4: #{tpu_custom_call.1} parent=0 // loop_header_branch
    %36 = sbr.rel (%p34) target = $region8
  $region5: #{tpu_custom_call.1} parent=0 // loop_body
    %s38 = ssub.s32 %s33, 1
    %s39 = ssub.s32 %s33, 2
    %s40 = sadd.s32 %s33, 1
    %s41 = ssub.s32 %s33, %s40
    %p42 = scmp.eq.s32.totalorder %s41, 0
    %s44 = sadd.s32 %s43, 1
    %s45 = scalar_select %p42, %s43, %s44
    %p48 = pneg %p42
    %p49 = scmp.eq.s32.totalorder %s33, 1
    %p50 = por %p48, %p49
    %p51 = scmp.ne.s32.totalorder %s43, %s46
    %p52 = scmp.eq.s32.totalorder %s33, 0
    %p53 = por %p51, %p52
    %p54 = scmp.ne.s32.totalorder %s43, %s46
    %p55 = scmp.eq.s32.totalorder %s38, 1
    %p56 = por %p54, %p55
    %p57 = scmp.ne.s32.totalorder %s46, %s47
    %p58 = scmp.eq.s32.totalorder %s38, 0
    %p59 = por %p57, %p58
    %p60 = scmp.ne.s32.totalorder %s46, %s47
    %p61 = scmp.eq.s32.totalorder %s39, 1
    %p62 = por %p60, %p61
    %p64 = scmp.ne.s32.totalorder %s47, %s63
    %p65 = scmp.eq.s32.totalorder %s39, 0
    %p66 = por %p64, %p65
    %s67 = ssub.s32 %s33, %s40
    %p68 = scmp.eq.s32.totalorder %s67, 0
    %s70 = sadd.s32 %s69, 1
    %s71 = scalar_select %p68, %s69, %s70
    %p74 = pneg %p68
    %p75 = scmp.eq.s32.totalorder %s33, 1
    %p76 = por %p74, %p75
    %p77 = scmp.ne.s32.totalorder %s69, %s72
    %p78 = scmp.eq.s32.totalorder %s33, 0
    %p79 = por %p77, %p78
    %p80 = scmp.ne.s32.totalorder %s69, %s72
    %p81 = scmp.eq.s32.totalorder %s38, 1
    %p82 = por %p80, %p81
    %p83 = scmp.ne.s32.totalorder %s72, %s73
    %p84 = scmp.eq.s32.totalorder %s38, 0
    %p85 = por %p83, %p84
    %p86 = scmp.ne.s32.totalorder %s72, %s73
    %p87 = scmp.eq.s32.totalorder %s39, 1
    %p88 = por %p86, %p87
    %p90 = scmp.ne.s32.totalorder %s73, %s89
    %p91 = scmp.eq.s32.totalorder %s39, 0
    %p92 = por %p90, %p91
    %s93 = ssub.s32 %s33, %s40
    %p94 = scmp.eq.s32.totalorder %s93, 0
    %s96 = sadd.s32 %s95, 1
    %s97 = scalar_select %p94, %s95, %s96
    %p100 = pneg %p94
    %p101 = scmp.eq.s32.totalorder %s33, 1
    %p102 = por %p100, %p101
    %p103 = scmp.ne.s32.totalorder %s95, %s98
    %p104 = scmp.eq.s32.totalorder %s33, 0
    %p105 = por %p103, %p104
    %p106 = scmp.ne.s32.totalorder %s95, %s98
    %p107 = scmp.eq.s32.totalorder %s38, 1
    %p108 = por %p106, %p107
    %p109 = scmp.ne.s32.totalorder %s98, %s99
    %p110 = scmp.eq.s32.totalorder %s38, 0
    %p111 = por %p109, %p110
    %p112 = scmp.ne.s32.totalorder %s98, %s99
    %p113 = scmp.eq.s32.totalorder %s39, 1
    %p114 = por %p112, %p113
    %p116 = scmp.ne.s32.totalorder %s99, %s115
    %p117 = scmp.eq.s32.totalorder %s39, 0
    %p118 = por %p116, %p117
    %s120 = sadd.s32 %s119, 1
    %p123 = scmp.eq.s32.totalorder %s33, 1
    %p124 = scmp.ne.s32.totalorder %s119, %s121
    %p125 = scmp.eq.s32.totalorder %s33, 0
    %p126 = por %p124, %p125
    %p127 = scmp.ne.s32.totalorder %s119, %s121
    %p128 = scmp.eq.s32.totalorder %s38, 1
    %p129 = por %p127, %p128
    %p130 = scmp.ne.s32.totalorder %s121, %s122
    %p131 = scmp.eq.s32.totalorder %s38, 0
    %p132 = por %p130, %p131
    %p133 = scmp.ne.s32.totalorder %s121, %s122
    %p134 = scmp.eq.s32.totalorder %s39, 1
    %p135 = por %p133, %p134
    %p137 = scmp.ne.s32.totalorder %s122, %s136
    %p138 = scmp.eq.s32.totalorder %s39, 0
    %p139 = por %p137, %p138
    %s141 = sadd.s32 %s140, 1
    %p144 = scmp.eq.s32.totalorder %s33, 1
    %p145 = scmp.ne.s32.totalorder %s140, %s142
    %p146 = scmp.eq.s32.totalorder %s33, 0
    %p147 = por %p145, %p146
    %p148 = scmp.ne.s32.totalorder %s140, %s142
    %p149 = scmp.eq.s32.totalorder %s38, 1
    %p150 = por %p148, %p149
    %p151 = scmp.ne.s32.totalorder %s142, %s143
    %p152 = scmp.eq.s32.totalorder %s38, 0
    %p153 = por %p151, %p152
    %p154 = scmp.ne.s32.totalorder %s142, %s143
    %p155 = scmp.eq.s32.totalorder %s39, 1
    %p156 = por %p154, %p155
    %p158 = scmp.ne.s32.totalorder %s143, %s157
    %p159 = scmp.eq.s32.totalorder %s39, 0
    %p160 = por %p158, %p159
    %s162 = sadd.s32 %s161, 1
    %p165 = scmp.eq.s32.totalorder %s33, 1
    %p166 = scmp.ne.s32.totalorder %s161, %s163
    %p167 = scmp.eq.s32.totalorder %s33, 0
    %p168 = por %p166, %p167
    %p169 = scmp.ne.s32.totalorder %s161, %s163
    %p170 = scmp.eq.s32.totalorder %s38, 1
    %p171 = por %p169, %p170
    %p172 = scmp.ne.s32.totalorder %s163, %s164
    %p173 = scmp.eq.s32.totalorder %s38, 0
    %p174 = por %p172, %p173
    %p175 = scmp.ne.s32.totalorder %s163, %s164
    %p176 = scmp.eq.s32.totalorder %s39, 1
    %p177 = por %p175, %p176
    %p179 = scmp.ne.s32.totalorder %s164, %s178
    %p180 = scmp.eq.s32.totalorder %s39, 0
    %p181 = por %p179, %p180
    %s183 = sadd.s32 %s182, 1
    %p186 = scmp.eq.s32.totalorder %s33, 1
    %p187 = scmp.ne.s32.totalorder %s182, %s184
    %p188 = scmp.eq.s32.totalorder %s33, 0
    %p189 = por %p187, %p188
    %p190 = scmp.ne.s32.totalorder %s182, %s184
    %p191 = scmp.eq.s32.totalorder %s38, 1
    %p192 = por %p190, %p191
    %p193 = scmp.ne.s32.totalorder %s184, %s185
    %p194 = scmp.eq.s32.totalorder %s38, 0
    %p195 = por %p193, %p194
    %p196 = scmp.ne.s32.totalorder %s184, %s185
    %p197 = scmp.eq.s32.totalorder %s39, 1
    %p198 = por %p196, %p197
    %p200 = scmp.ne.s32.totalorder %s185, %s199
    %p201 = scmp.eq.s32.totalorder %s39, 0
    %p202 = por %p200, %p201
    %s204 = sadd.s32 %s203, 1
    %p207 = scmp.eq.s32.totalorder %s33, 1
    %p208 = scmp.ne.s32.totalorder %s203, %s205
    %p209 = scmp.eq.s32.totalorder %s33, 0
    %p210 = por %p208, %p209
    %p211 = scmp.ne.s32.totalorder %s203, %s205
    %p212 = scmp.eq.s32.totalorder %s38, 1
    %p213 = por %p211, %p212
    %p214 = scmp.ne.s32.totalorder %s205, %s206
    %p215 = scmp.eq.s32.totalorder %s38, 0
    %p216 = por %p214, %p215
    %p217 = scmp.ne.s32.totalorder %s205, %s206
    %p218 = scmp.eq.s32.totalorder %s39, 1
    %p219 = por %p217, %p218
    %p221 = scmp.ne.s32.totalorder %s206, %s220
    %p222 = scmp.eq.s32.totalorder %s39, 0
    %p223 = por %p221, %p222
    %s225 = sadd.s32 %s224, 1
    %p228 = scmp.eq.s32.totalorder %s33, 1
    %p229 = scmp.ne.s32.totalorder %s224, %s226
    %p230 = scmp.eq.s32.totalorder %s33, 0
    %p231 = por %p229, %p230
    %p232 = scmp.ne.s32.totalorder %s224, %s226
    %p233 = scmp.eq.s32.totalorder %s38, 1
    %p234 = por %p232, %p233
    %p235 = scmp.ne.s32.totalorder %s226, %s227
    %p236 = scmp.eq.s32.totalorder %s38, 0
    %p237 = por %p235, %p236
    %p238 = scmp.ne.s32.totalorder %s226, %s227
    %p239 = scmp.eq.s32.totalorder %s39, 1
    %p240 = por %p238, %p239
    %p242 = scmp.ne.s32.totalorder %s227, %s241
    %p243 = scmp.eq.s32.totalorder %s39, 0
    %p244 = por %p242, %p243
    %s246 = sadd.s32 %s245, 1
    %p249 = scmp.eq.s32.totalorder %s33, 1
    %p250 = scmp.ne.s32.totalorder %s245, %s247
    %p251 = scmp.eq.s32.totalorder %s33, 0
    %p252 = por %p250, %p251
    %p253 = scmp.ne.s32.totalorder %s245, %s247
    %p254 = scmp.eq.s32.totalorder %s38, 1
    %p255 = por %p253, %p254
    %p256 = scmp.ne.s32.totalorder %s247, %s248
    %p257 = scmp.eq.s32.totalorder %s38, 0
    %p258 = por %p256, %p257
    %p259 = scmp.ne.s32.totalorder %s247, %s248
    %p260 = scmp.eq.s32.totalorder %s39, 1
    %p261 = por %p259, %p260
    %p263 = scmp.ne.s32.totalorder %s248, %s262
    %p264 = scmp.eq.s32.totalorder %s39, 0
    %p265 = por %p263, %p264
    %s267 = sadd.s32 %s266, 1
    %p270 = scmp.eq.s32.totalorder %s33, 1
    %p271 = scmp.ne.s32.totalorder %s266, %s268
    %p272 = scmp.eq.s32.totalorder %s33, 0
    %p273 = por %p271, %p272
    %p274 = scmp.ne.s32.totalorder %s266, %s268
    %p275 = scmp.eq.s32.totalorder %s38, 1
    %p276 = por %p274, %p275
    %p277 = scmp.ne.s32.totalorder %s268, %s269
    %p278 = scmp.eq.s32.totalorder %s38, 0
    %p279 = por %p277, %p278
    %p280 = scmp.ne.s32.totalorder %s268, %s269
    %p281 = scmp.eq.s32.totalorder %s39, 1
    %p282 = por %p280, %p281
    %p284 = scmp.ne.s32.totalorder %s269, %s283
    %p285 = scmp.eq.s32.totalorder %s39, 0
    %p286 = por %p284, %p285
    %s288 = sadd.s32 %s287, 1
    %p291 = scmp.eq.s32.totalorder %s33, 1
    %p292 = scmp.ne.s32.totalorder %s287, %s289
    %p293 = scmp.eq.s32.totalorder %s33, 0
    %p294 = por %p292, %p293
    %p295 = scmp.ne.s32.totalorder %s287, %s289
    %p296 = scmp.eq.s32.totalorder %s38, 1
    %p297 = por %p295, %p296
    %p298 = scmp.ne.s32.totalorder %s289, %s290
    %p299 = scmp.eq.s32.totalorder %s38, 0
    %p300 = por %p298, %p299
    %p301 = scmp.ne.s32.totalorder %s289, %s290
    %p302 = scmp.eq.s32.totalorder %s39, 1
    %p303 = por %p301, %p302
    %p305 = scmp.ne.s32.totalorder %s290, %s304
    %p306 = scmp.eq.s32.totalorder %s39, 0
    %p307 = por %p305, %p306
    %s309 = sadd.s32 %s308, 1
    %p312 = scmp.eq.s32.totalorder %s33, 1
    %p313 = scmp.ne.s32.totalorder %s308, %s310
    %p314 = scmp.eq.s32.totalorder %s33, 0
    %p315 = por %p313, %p314
    %p316 = scmp.ne.s32.totalorder %s308, %s310
    %p317 = scmp.eq.s32.totalorder %s38, 1
    %p318 = por %p316, %p317
    %p319 = scmp.ne.s32.totalorder %s310, %s311
    %p320 = scmp.eq.s32.totalorder %s38, 0
    %p321 = por %p319, %p320
    %p322 = scmp.ne.s32.totalorder %s310, %s311
    %p323 = scmp.eq.s32.totalorder %s39, 1
    %p324 = por %p322, %p323
    %p326 = scmp.ne.s32.totalorder %s311, %s325
    %p327 = scmp.eq.s32.totalorder %s39, 0
    %p328 = por %p326, %p327
    %s330 = sadd.s32 %s329, 1
    %p333 = scmp.eq.s32.totalorder %s33, 1
    %p334 = scmp.ne.s32.totalorder %s329, %s331
    %p335 = scmp.eq.s32.totalorder %s33, 0
    %p336 = por %p334, %p335
    %p337 = scmp.ne.s32.totalorder %s329, %s331
    %p338 = scmp.eq.s32.totalorder %s38, 1
    %p339 = por %p337, %p338
    %p340 = scmp.ne.s32.totalorder %s331, %s332
    %p341 = scmp.eq.s32.totalorder %s38, 0
    %p342 = por %p340, %p341
    %p343 = scmp.ne.s32.totalorder %s331, %s332
    %p344 = scmp.eq.s32.totalorder %s39, 1
    %p345 = por %p343, %p344
    %p347 = scmp.ne.s32.totalorder %s332, %s346
    %p348 = scmp.eq.s32.totalorder %s39, 0
    %p349 = por %p347, %p348
    %s351 = sadd.s32 %s350, 1
    %p354 = scmp.eq.s32.totalorder %s33, 1
    %p355 = scmp.ne.s32.totalorder %s350, %s352
    %p356 = scmp.eq.s32.totalorder %s33, 0
    %p357 = por %p355, %p356
    %p358 = scmp.ne.s32.totalorder %s350, %s352
    %p359 = scmp.eq.s32.totalorder %s38, 1
    %p360 = por %p358, %p359
    %p361 = scmp.ne.s32.totalorder %s352, %s353
    %p362 = scmp.eq.s32.totalorder %s38, 0
    %p363 = por %p361, %p362
    %p364 = scmp.ne.s32.totalorder %s352, %s353
    %p365 = scmp.eq.s32.totalorder %s39, 1
    %p366 = por %p364, %p365
    %p368 = scmp.ne.s32.totalorder %s353, %s367
    %p369 = scmp.eq.s32.totalorder %s39, 0
    %p370 = por %p368, %p369
    %s372 = sadd.s32 %s371, 1
    %p375 = scmp.eq.s32.totalorder %s33, 1
    %p376 = scmp.ne.s32.totalorder %s371, %s373
    %p377 = scmp.eq.s32.totalorder %s33, 0
    %p378 = por %p376, %p377
    %p379 = scmp.ne.s32.totalorder %s371, %s373
    %p380 = scmp.eq.s32.totalorder %s38, 1
    %p381 = por %p379, %p380
    %p382 = scmp.ne.s32.totalorder %s373, %s374
    %p383 = scmp.eq.s32.totalorder %s38, 0
    %p384 = por %p382, %p383
    %p385 = scmp.ne.s32.totalorder %s373, %s374
    %p386 = scmp.eq.s32.totalorder %s39, 1
    %p387 = por %p385, %p386
    %p389 = scmp.ne.s32.totalorder %s374, %s388
    %p390 = scmp.eq.s32.totalorder %s39, 0
    %p391 = por %p389, %p390
    %s393 = sadd.s32 %s392, 1
    %p396 = scmp.eq.s32.totalorder %s33, 1
    %p397 = scmp.ne.s32.totalorder %s392, %s394
    %p398 = scmp.eq.s32.totalorder %s33, 0
    %p399 = por %p397, %p398
    %p400 = scmp.ne.s32.totalorder %s392, %s394
    %p401 = scmp.eq.s32.totalorder %s38, 1
    %p402 = por %p400, %p401
    %p403 = scmp.ne.s32.totalorder %s394, %s395
    %p404 = scmp.eq.s32.totalorder %s38, 0
    %p405 = por %p403, %p404
    %p406 = scmp.ne.s32.totalorder %s394, %s395
    %p407 = scmp.eq.s32.totalorder %s39, 1
    %p408 = por %p406, %p407
    %p410 = scmp.ne.s32.totalorder %s395, %s409
    %p411 = scmp.eq.s32.totalorder %s39, 0
    %p412 = por %p410, %p411
    %s414 = sadd.s32 %s413, 1
    %p417 = scmp.eq.s32.totalorder %s33, 1
    %p418 = scmp.ne.s32.totalorder %s413, %s415
    %p419 = scmp.eq.s32.totalorder %s33, 0
    %p420 = por %p418, %p419
    %p421 = scmp.ne.s32.totalorder %s413, %s415
    %p422 = scmp.eq.s32.totalorder %s38, 1
    %p423 = por %p421, %p422
    %p424 = scmp.ne.s32.totalorder %s415, %s416
    %p425 = scmp.eq.s32.totalorder %s38, 0
    %p426 = por %p424, %p425
    %p427 = scmp.ne.s32.totalorder %s415, %s416
    %p428 = scmp.eq.s32.totalorder %s39, 1
    %p429 = por %p427, %p428
    %p431 = scmp.ne.s32.totalorder %s416, %s430
    %p432 = scmp.eq.s32.totalorder %s39, 0
    %p433 = por %p431, %p432
    %s435 = sadd.s32 %s434, 1
    %p438 = scmp.eq.s32.totalorder %s33, 1
    %p439 = scmp.ne.s32.totalorder %s434, %s436
    %p440 = scmp.eq.s32.totalorder %s33, 0
    %p441 = por %p439, %p440
    %p442 = scmp.ne.s32.totalorder %s434, %s436
    %p443 = scmp.eq.s32.totalorder %s38, 1
    %p444 = por %p442, %p443
    %p445 = scmp.ne.s32.totalorder %s436, %s437
    %p446 = scmp.eq.s32.totalorder %s38, 0
    %p447 = por %p445, %p446
    %p448 = scmp.ne.s32.totalorder %s436, %s437
    %p449 = scmp.eq.s32.totalorder %s39, 1
    %p450 = por %p448, %p449
    %p452 = scmp.ne.s32.totalorder %s437, %s451
    %p453 = scmp.eq.s32.totalorder %s39, 0
    %p454 = por %p452, %p453
    %s456 = sadd.s32 %s455, 1
    %p459 = scmp.eq.s32.totalorder %s33, 1
    %p460 = scmp.ne.s32.totalorder %s455, %s457
    %p461 = scmp.eq.s32.totalorder %s33, 0
    %p462 = por %p460, %p461
    %p463 = scmp.ne.s32.totalorder %s455, %s457
    %p464 = scmp.eq.s32.totalorder %s38, 1
    %p465 = por %p463, %p464
    %p466 = scmp.ne.s32.totalorder %s457, %s458
    %p467 = scmp.eq.s32.totalorder %s38, 0
    %p468 = por %p466, %p467
    %p469 = scmp.ne.s32.totalorder %s457, %s458
    %p470 = scmp.eq.s32.totalorder %s39, 1
    %p471 = por %p469, %p470
    %p473 = scmp.ne.s32.totalorder %s458, %s472
    %p474 = scmp.eq.s32.totalorder %s39, 0
    %p475 = por %p473, %p474
    %s477 = sadd.s32 %s476, 1
    %p480 = scmp.eq.s32.totalorder %s33, 1
    %p481 = scmp.ne.s32.totalorder %s476, %s478
    %p482 = scmp.eq.s32.totalorder %s33, 0
    %p483 = por %p481, %p482
    %p484 = scmp.ne.s32.totalorder %s476, %s478
    %p485 = scmp.eq.s32.totalorder %s38, 1
    %p486 = por %p484, %p485
    %p487 = scmp.ne.s32.totalorder %s478, %s479
    %p488 = scmp.eq.s32.totalorder %s38, 0
    %p489 = por %p487, %p488
    %p490 = scmp.ne.s32.totalorder %s478, %s479
    %p491 = scmp.eq.s32.totalorder %s39, 1
    %p492 = por %p490, %p491
    %p494 = scmp.ne.s32.totalorder %s479, %s493
    %p495 = scmp.eq.s32.totalorder %s39, 0
    %p496 = por %p494, %p495
    %s498 = sadd.s32 %s497, 1
    %p501 = scmp.eq.s32.totalorder %s33, 1
    %p502 = scmp.ne.s32.totalorder %s497, %s499
    %p503 = scmp.eq.s32.totalorder %s33, 0
    %p504 = por %p502, %p503
    %p505 = scmp.ne.s32.totalorder %s497, %s499
    %p506 = scmp.eq.s32.totalorder %s38, 1
    %p507 = por %p505, %p506
    %p508 = scmp.ne.s32.totalorder %s499, %s500
    %p509 = scmp.eq.s32.totalorder %s38, 0
    %p510 = por %p508, %p509
    %p511 = scmp.ne.s32.totalorder %s499, %s500
    %p512 = scmp.eq.s32.totalorder %s39, 1
    %p513 = por %p511, %p512
    %p515 = scmp.ne.s32.totalorder %s500, %s514
    %p516 = scmp.eq.s32.totalorder %s39, 0
    %p517 = por %p515, %p516
    %s519 = sadd.s32 %s518, 1
    %p522 = scmp.eq.s32.totalorder %s33, 1
    %p523 = scmp.ne.s32.totalorder %s518, %s520
    %p524 = scmp.eq.s32.totalorder %s33, 0
    %p525 = por %p523, %p524
    %p526 = scmp.ne.s32.totalorder %s518, %s520
    %p527 = scmp.eq.s32.totalorder %s38, 1
    %p528 = por %p526, %p527
    %p529 = scmp.ne.s32.totalorder %s520, %s521
    %p530 = scmp.eq.s32.totalorder %s38, 0
    %p531 = por %p529, %p530
    %p532 = scmp.ne.s32.totalorder %s520, %s521
    %p533 = scmp.eq.s32.totalorder %s39, 1
    %p534 = por %p532, %p533
    %p536 = scmp.ne.s32.totalorder %s521, %s535
    %p537 = scmp.eq.s32.totalorder %s39, 0
    %p538 = por %p536, %p537
    %s540 = sadd.s32 %s539, 1
    %p543 = scmp.eq.s32.totalorder %s33, 1
    %p544 = scmp.ne.s32.totalorder %s539, %s541
    %p545 = scmp.eq.s32.totalorder %s33, 0
    %p546 = por %p544, %p545
    %p547 = scmp.ne.s32.totalorder %s539, %s541
    %p548 = scmp.eq.s32.totalorder %s38, 1
    %p549 = por %p547, %p548
    %p550 = scmp.ne.s32.totalorder %s541, %s542
    %p551 = scmp.eq.s32.totalorder %s38, 0
    %p552 = por %p550, %p551
    %p553 = scmp.ne.s32.totalorder %s541, %s542
    %p554 = scmp.eq.s32.totalorder %s39, 1
    %p555 = por %p553, %p554
    %p557 = scmp.ne.s32.totalorder %s542, %s556
    %p558 = scmp.eq.s32.totalorder %s39, 0
    %p559 = por %p557, %p558
    %s561 = sadd.s32 %s560, 1
    %p564 = scmp.eq.s32.totalorder %s33, 1
    %p565 = scmp.ne.s32.totalorder %s560, %s562
    %p566 = scmp.eq.s32.totalorder %s33, 0
    %p567 = por %p565, %p566
    %p568 = scmp.ne.s32.totalorder %s560, %s562
    %p569 = scmp.eq.s32.totalorder %s38, 1
    %p570 = por %p568, %p569
    %p571 = scmp.ne.s32.totalorder %s562, %s563
    %p572 = scmp.eq.s32.totalorder %s38, 0
    %p573 = por %p571, %p572
    %p574 = scmp.ne.s32.totalorder %s562, %s563
    %p575 = scmp.eq.s32.totalorder %s39, 1
    %p576 = por %p574, %p575
    %p578 = scmp.ne.s32.totalorder %s563, %s577
    %p579 = scmp.eq.s32.totalorder %s39, 0
    %p580 = por %p578, %p579
    %s582 = sadd.s32 %s581, 1
    %p585 = scmp.eq.s32.totalorder %s33, 1
    %p586 = scmp.ne.s32.totalorder %s581, %s583
    %p587 = scmp.eq.s32.totalorder %s33, 0
    %p588 = por %p586, %p587
    %p589 = scmp.ne.s32.totalorder %s581, %s583
    %p590 = scmp.eq.s32.totalorder %s38, 1
    %p591 = por %p589, %p590
    %p592 = scmp.ne.s32.totalorder %s583, %s584
    %p593 = scmp.eq.s32.totalorder %s38, 0
    %p594 = por %p592, %p593
    %p595 = scmp.ne.s32.totalorder %s583, %s584
    %p596 = scmp.eq.s32.totalorder %s39, 1
    %p597 = por %p595, %p596
    %p599 = scmp.ne.s32.totalorder %s584, %s598
    %p600 = scmp.eq.s32.totalorder %s39, 0
    %p601 = por %p599, %p600
    %s603 = sadd.s32 %s602, 1
    %p606 = scmp.eq.s32.totalorder %s33, 1
    %p607 = scmp.ne.s32.totalorder %s602, %s604
    %p608 = scmp.eq.s32.totalorder %s33, 0
    %p609 = por %p607, %p608
    %p610 = scmp.ne.s32.totalorder %s602, %s604
    %p611 = scmp.eq.s32.totalorder %s38, 1
    %p612 = por %p610, %p611
    %p613 = scmp.ne.s32.totalorder %s604, %s605
    %p614 = scmp.eq.s32.totalorder %s38, 0
    %p615 = por %p613, %p614
    %p616 = scmp.ne.s32.totalorder %s604, %s605
    %p617 = scmp.eq.s32.totalorder %s39, 1
    %p618 = por %p616, %p617
    %p620 = scmp.ne.s32.totalorder %s605, %s619
    %p621 = scmp.eq.s32.totalorder %s39, 0
    %p622 = por %p620, %p621
    %s623 = ssub.s32 %s33, %s40
    %p624 = scmp.eq.s32.totalorder %s623, 0
    %s626 = sadd.s32 %s625, 1
    %s627 = scalar_select %p624, %s625, %s626
    %p630 = pneg %p624
    %p631 = scmp.eq.s32.totalorder %s33, 1
    %p632 = por %p630, %p631
    %p633 = scmp.ne.s32.totalorder %s625, %s628
    %p634 = scmp.eq.s32.totalorder %s33, 0
    %p635 = por %p633, %p634
    %p636 = scmp.ne.s32.totalorder %s625, %s628
    %p637 = scmp.eq.s32.totalorder %s38, 1
    %p638 = por %p636, %p637
    %p639 = scmp.ne.s32.totalorder %s628, %s629
    %p640 = scmp.eq.s32.totalorder %s38, 0
    %p641 = por %p639, %p640
    %p642 = scmp.ne.s32.totalorder %s628, %s629
    %p643 = scmp.eq.s32.totalorder %s39, 1
    %p644 = por %p642, %p643
    %p646 = scmp.ne.s32.totalorder %s629, %s645
    %p647 = scmp.eq.s32.totalorder %s39, 0
    %p648 = por %p646, %p647
    %p649 = scmp.le.s32.totalorder 1, %s33
    %p650 = scmp.lt.s32.totalorder %s33, 3
    %p651 = pnand %p649, %p650
    %p652 = pneg %p651
    // Predicated region
    $region9: #{tpu_custom_call.1} parent=5 // pred_check
      _
    $region10: #{tpu_custom_call.1} parent=5 // pred_check_branch
      %654 = sbr.rel (%p651) target = $region12
    $region11: #{tpu_custom_call.1} parent=5 // pred_region
      %s655 = ssub.s32 %s33, 1
      // Predicated region
      $region13: #{tpu_custom_call.1} parent=11 // pred_check
        %p656 = pneg %p132
      $region14: #{tpu_custom_call.1} parent=11 // pred_check_branch
        %658 = sbr.rel (%p656) target = $region16
      $region15: #{tpu_custom_call.1} parent=11 // pred_region
        _
      $region16: #{tpu_custom_call.1} parent=11 // pred_fallthru
        _
      // Predicated region
      $region17: #{tpu_custom_call.1} parent=11 // pred_check
        %p659 = pneg %p153
      $region18: #{tpu_custom_call.1} parent=11 // pred_check_branch
        %661 = sbr.rel (%p659) target = $region20
      $region19: #{tpu_custom_call.1} parent=11 // pred_region
        _
      $region20: #{tpu_custom_call.1} parent=11 // pred_fallthru
        _
      // Predicated region
      $region21: #{tpu_custom_call.1} parent=11 // pred_check
        %p662 = pneg %p174
      $region22: #{tpu_custom_call.1} parent=11 // pred_check_branch
        %664 = sbr.rel (%p662) target = $region24
      $region23: #{tpu_custom_call.1} parent=11 // pred_region
        _
      $region24: #{tpu_custom_call.1} parent=11 // pred_fallthru
        _
      // Predicated region
      $region25: #{tpu_custom_call.1} parent=11 // pred_check
        %p665 = pneg %p195
      $region26: #{tpu_custom_call.1} parent=11 // pred_check_branch
        %667 = sbr.rel (%p665) target = $region28
      $region27: #{tpu_custom_call.1} parent=11 // pred_region
        _
      $region28: #{tpu_custom_call.1} parent=11 // pred_fallthru
        _
      // Predicated region
      $region29: #{tpu_custom_call.1} parent=11 // pred_check
        %p668 = pneg %p216
      $region30: #{tpu_custom_call.1} parent=11 // pred_check_branch
        %670 = sbr.rel (%p668) target = $region32
      $region31: #{tpu_custom_call.1} parent=11 // pred_region
        _
      $region32: #{tpu_custom_call.1} parent=11 // pred_fallthru
        _
      // Predicated region
      $region33: #{tpu_custom_call.1} parent=11 // pred_check
        %p671 = pneg %p237
      $region34: #{tpu_custom_call.1} parent=11 // pred_check_branch
        %673 = sbr.rel (%p671) target = $region36
      $region35: #{tpu_custom_call.1} parent=11 // pred_region
        _
      $region36: #{tpu_custom_call.1} parent=11 // pred_fallthru
        _
      // Predicated region
      $region37: #{tpu_custom_call.1} parent=11 // pred_check
        %p674 = pneg %p258
      $region38: #{tpu_custom_call.1} parent=11 // pred_check_branch
        %676 = sbr.rel (%p674) target = $region40
      $region39: #{tpu_custom_call.1} parent=11 // pred_region
        _
      $region40: #{tpu_custom_call.1} parent=11 // pred_fallthru
        _
      // Predicated region
      $region41: #{tpu_custom_call.1} parent=11 // pred_check
        %p677 = pneg %p279
      $region42: #{tpu_custom_call.1} parent=11 // pred_check_branch
        %679 = sbr.rel (%p677) target = $region44
      $region43: #{tpu_custom_call.1} parent=11 // pred_region
        _
      $region44: #{tpu_custom_call.1} parent=11 // pred_fallthru
        _
      // Predicated region
      $region45: #{tpu_custom_call.1} parent=11 // pred_check
        %p680 = pneg %p300
      $region46: #{tpu_custom_call.1} parent=11 // pred_check_branch
        %682 = sbr.rel (%p680) target = $region48
      $region47: #{tpu_custom_call.1} parent=11 // pred_region
        _
      $region48: #{tpu_custom_call.1} parent=11 // pred_fallthru
        _
      // Predicated region
      $region49: #{tpu_custom_call.1} parent=11 // pred_check
        %p683 = pneg %p321
      $region50: #{tpu_custom_call.1} parent=11 // pred_check_branch
        %685 = sbr.rel (%p683) target = $region52
      $region51: #{tpu_custom_call.1} parent=11 // pred_region
        _
      $region52: #{tpu_custom_call.1} parent=11 // pred_fallthru
        _
      // Predicated region
      $region53: #{tpu_custom_call.1} parent=11 // pred_check
        %p686 = pneg %p342
      $region54: #{tpu_custom_call.1} parent=11 // pred_check_branch
        %688 = sbr.rel (%p686) target = $region56
      $region55: #{tpu_custom_call.1} parent=11 // pred_region
        _
      $region56: #{tpu_custom_call.1} parent=11 // pred_fallthru
        _
      // Predicated region
      $region57: #{tpu_custom_call.1} parent=11 // pred_check
        %p689 = pneg %p363
      $region58: #{tpu_custom_call.1} parent=11 // pred_check_branch
        %691 = sbr.rel (%p689) target = $region60
      $region59: #{tpu_custom_call.1} parent=11 // pred_region
        _
      $region60: #{tpu_custom_call.1} parent=11 // pred_fallthru
        _
      // Predicated region
      $region61: #{tpu_custom_call.1} parent=11 // pred_check
        %p692 = pneg %p384
      $region62: #{tpu_custom_call.1} parent=11 // pred_check_branch
        %694 = sbr.rel (%p692) target = $region64
      $region63: #{tpu_custom_call.1} parent=11 // pred_region
        _
      $region64: #{tpu_custom_call.1} parent=11 // pred_fallthru
        _
      // Predicated region
      $region65: #{tpu_custom_call.1} parent=11 // pred_check
        %p695 = pneg %p405
      $region66: #{tpu_custom_call.1} parent=11 // pred_check_branch
        %697 = sbr.rel (%p695) target = $region68
      $region67: #{tpu_custom_call.1} parent=11 // pred_region
        _
      $region68: #{tpu_custom_call.1} parent=11 // pred_fallthru
        _
      // Predicated region
      $region69: #{tpu_custom_call.1} parent=11 // pred_check
        %p698 = pneg %p426
      $region70: #{tpu_custom_call.1} parent=11 // pred_check_branch
        %700 = sbr.rel (%p698) target = $region72
      $region71: #{tpu_custom_call.1} parent=11 // pred_region
        _
      $region72: #{tpu_custom_call.1} parent=11 // pred_fallthru
        _
      // Predicated region
      $region73: #{tpu_custom_call.1} parent=11 // pred_check
        %p701 = pneg %p447
      $region74: #{tpu_custom_call.1} parent=11 // pred_check_branch
        %703 = sbr.rel (%p701) target = $region76
      $region75: #{tpu_custom_call.1} parent=11 // pred_region
        _
      $region76: #{tpu_custom_call.1} parent=11 // pred_fallthru
        _
      // Predicated region
      $region77: #{tpu_custom_call.1} parent=11 // pred_check
        %p704 = pneg %p468
      $region78: #{tpu_custom_call.1} parent=11 // pred_check_branch
        %706 = sbr.rel (%p704) target = $region80
      $region79: #{tpu_custom_call.1} parent=11 // pred_region
        _
      $region80: #{tpu_custom_call.1} parent=11 // pred_fallthru
        _
      // Predicated region
      $region81: #{tpu_custom_call.1} parent=11 // pred_check
        %p707 = pneg %p489
      $region82: #{tpu_custom_call.1} parent=11 // pred_check_branch
        %709 = sbr.rel (%p707) target = $region84
      $region83: #{tpu_custom_call.1} parent=11 // pred_region
        _
      $region84: #{tpu_custom_call.1} parent=11 // pred_fallthru
        _
      // Predicated region
      $region85: #{tpu_custom_call.1} parent=11 // pred_check
        %p710 = pneg %p510
      $region86: #{tpu_custom_call.1} parent=11 // pred_check_branch
        %712 = sbr.rel (%p710) target = $region88
      $region87: #{tpu_custom_call.1} parent=11 // pred_region
        _
      $region88: #{tpu_custom_call.1} parent=11 // pred_fallthru
        _
      // Predicated region
      $region89: #{tpu_custom_call.1} parent=11 // pred_check
        %p713 = pneg %p531
      $region90: #{tpu_custom_call.1} parent=11 // pred_check_branch
        %715 = sbr.rel (%p713) target = $region92
      $region91: #{tpu_custom_call.1} parent=11 // pred_region
        _
      $region92: #{tpu_custom_call.1} parent=11 // pred_fallthru
        _
      // Predicated region
      $region93: #{tpu_custom_call.1} parent=11 // pred_check
        %p716 = pneg %p552
      $region94: #{tpu_custom_call.1} parent=11 // pred_check_branch
        %718 = sbr.rel (%p716) target = $region96
      $region95: #{tpu_custom_call.1} parent=11 // pred_region
        _
      $region96: #{tpu_custom_call.1} parent=11 // pred_fallthru
        _
      // Predicated region
      $region97: #{tpu_custom_call.1} parent=11 // pred_check
        %p719 = pneg %p573
      $region98: #{tpu_custom_call.1} parent=11 // pred_check_branch
        %721 = sbr.rel (%p719) target = $region100
      $region99: #{tpu_custom_call.1} parent=11 // pred_region
        _
      $region100: #{tpu_custom_call.1} parent=11 // pred_fallthru
        _
      // Predicated region
      $region101: #{tpu_custom_call.1} parent=11 // pred_check
        %p722 = pneg %p594
      $region102: #{tpu_custom_call.1} parent=11 // pred_check_branch
        %724 = sbr.rel (%p722) target = $region104
      $region103: #{tpu_custom_call.1} parent=11 // pred_region
        _
      $region104: #{tpu_custom_call.1} parent=11 // pred_fallthru
        _
      // Predicated region
      $region105: #{tpu_custom_call.1} parent=11 // pred_check
        %p725 = pneg %p615
      $region106: #{tpu_custom_call.1} parent=11 // pred_check_branch
        %727 = sbr.rel (%p725) target = $region108
      $region107: #{tpu_custom_call.1} parent=11 // pred_region
        _
      $region108: #{tpu_custom_call.1} parent=11 // pred_fallthru
        _
    $region12: #{tpu_custom_call.1} parent=5 // pred_fallthru
      _
    %p728 = scmp.lt.s32.totalorder %s33, 2
    // Predicated region
    $region109: #{tpu_custom_call.1} parent=5 // pred_check
      %p729 = pneg %p728
    $region110: #{tpu_custom_call.1} parent=5 // pred_check_branch
      %731 = sbr.rel (%p729) target = $region112
    $region111: #{tpu_custom_call.1} parent=5 // pred_region
      // Predicated region
      $region113: #{tpu_custom_call.1} parent=111 // pred_check
        %p732 = pneg %p53
      $region114: #{tpu_custom_call.1} parent=111 // pred_check_branch
        %734 = sbr.rel (%p732) target = $region116
      $region115: #{tpu_custom_call.1} parent=111 // pred_region
        %s735 = smul.u32 4, %s33
        %p736 = scmp.lt.s32.totalorder %s735, 7
        %s737 = scalar_select %p736, %s735, 7
        %s738 = smul.addr %s737, 8
        %s739 = scalar_lea.vmem %s0, %s738
        %s740 = smul.u32 4, %s33
      $region116: #{tpu_custom_call.1} parent=111 // pred_fallthru
        _
      // Predicated region
      $region117: #{tpu_custom_call.1} parent=111 // pred_check
        %p741 = pneg %p79
      $region118: #{tpu_custom_call.1} parent=111 // pred_check_branch
        %743 = sbr.rel (%p741) target = $region120
      $region119: #{tpu_custom_call.1} parent=111 // pred_region
        %s744 = smul.u32 4, %s33
        %p745 = scmp.lt.s32.totalorder %s744, 7
        %s746 = scalar_select %p745, %s744, 7
        %s747 = smul.addr %s746, 8
        %s748 = scalar_lea.vmem %s1, %s747
        %s749 = smul.u32 4, %s33
      $region120: #{tpu_custom_call.1} parent=111 // pred_fallthru
        _
      // Predicated region
      $region121: #{tpu_custom_call.1} parent=111 // pred_check
        %p750 = pneg %p105
      $region122: #{tpu_custom_call.1} parent=111 // pred_check_branch
        %752 = sbr.rel (%p750) target = $region124
      $region123: #{tpu_custom_call.1} parent=111 // pred_region
        %p753 = scmp.lt.s32.totalorder %s33, 1
        %s754 = scalar_select %p753, %s33, 1
        %s755 = smul.addr %s754, 8
        %s756 = scalar_lea.vmem %s2, %s755
      $region124: #{tpu_custom_call.1} parent=111 // pred_fallthru
        _
    $region112: #{tpu_custom_call.1} parent=5 // pred_fallthru
      _
    %p757 = scmp.le.s32.totalorder 1, %s33
    %p758 = scmp.lt.s32.totalorder %s33, 3
    %p759 = pnand %p757, %p758
    %p760 = pneg %p759
    // Predicated region
    $region125: #{tpu_custom_call.1} parent=5 // pred_check
      _
    $region126: #{tpu_custom_call.1} parent=5 // pred_check_branch
      %762 = sbr.rel (%p759) target = $region128
    $region127: #{tpu_custom_call.1} parent=5 // pred_region
      %s763 = ssub.s32 %s33, 1
      %s764 = smul.u32 4, %s38
      %p765 = scmp.lt.s32.totalorder %s764, 7
      %s766 = scalar_select %p765, %s764, 7
      %s767 = smul.addr %s766, 8
      %s768 = scalar_lea.vmem %s0, %s767
      %p769 = pneg %p59
      %p770 = pneg %p56
      %s771 = smul.u32 4, %s38
      %p772 = scmp.lt.s32.totalorder %s771, 7
      %s773 = scalar_select %p772, %s771, 7
      %s774 = smul.addr %s773, 8
      %s775 = scalar_lea.vmem %s1, %s774
      %p776 = pneg %p85
      %p777 = pneg %p82
      %p778 = scmp.lt.s32.totalorder %s38, 1
      %s779 = scalar_select %p778, %s38, 1
      %s780 = smul.addr %s779, 8
      %s781 = scalar_lea.vmem %s2, %s780
      %p782 = pneg %p111
      %p783 = pneg %p108
      %p784 = pneg %p132
      %p785 = pneg %p129
      %p786 = pneg %p153
      %p787 = pneg %p150
      %p788 = pneg %p174
      %p789 = pneg %p171
      %p790 = pneg %p195
      %p791 = pneg %p192
      %p792 = pneg %p216
      %p793 = pneg %p213
      %p794 = pneg %p237
      %p795 = pneg %p234
      %p796 = pneg %p258
      %p797 = pneg %p255
      %p798 = pneg %p279
      %p799 = pneg %p276
      %p800 = pneg %p300
      %p801 = pneg %p297
      %p802 = pneg %p321
      %p803 = pneg %p318
      %p804 = pneg %p342
      %p805 = pneg %p339
      %p806 = pneg %p363
      %p807 = pneg %p360
      %p808 = pneg %p384
      %p809 = pneg %p381
      %p810 = pneg %p405
      %p811 = pneg %p402
      %p812 = pneg %p426
      %p813 = pneg %p423
      %p814 = pneg %p447
      %p815 = pneg %p444
      %p816 = pneg %p468
      %p817 = pneg %p465
      %p818 = pneg %p489
      %p819 = pneg %p486
      %p820 = pneg %p510
      %p821 = pneg %p507
      %p822 = pneg %p531
      %p823 = pneg %p528
      %p824 = pneg %p552
      %p825 = pneg %p549
      %p826 = pneg %p573
      %p827 = pneg %p570
      %p828 = pneg %p594
      %p829 = pneg %p591
      %p830 = pneg %p615
      %p831 = pneg %p612
      %p832 = pneg %p641
      %p833 = pneg %p638
      %p834 = scmp.lt.s32.totalorder %s38, 1
      %s835 = scalar_select %p834, %s38, 1
      %s836 = smul.addr %s835, 8
      %s837 = scalar_lea.vmem %s27, %s836
      %s838 = smul.u32 4, %s38
      %p839 = scmp.lt.s32.totalorder %s838, 7
      %s840 = scalar_select %p839, %s838, 7
      %s841 = smul.addr %s840, 8
      %s842 = scalar_lea.vmem %s0, %s841
      %s843 = smul.u32 4, %s38
      %s844 = smul.u32 4, %s38
      %p845 = scmp.lt.s32.totalorder %s844, 7
      %s846 = scalar_select %p845, %s844, 7
      %s847 = smul.addr %s846, 8
      %s848 = scalar_lea.vmem %s1, %s847
      %s849 = smul.u32 4, %s38
      %p850 = scmp.lt.s32.totalorder %s38, 1
      %s851 = scalar_select %p850, %s38, 1
      %s852 = smul.addr %s851, 8
      %s853 = scalar_lea.vmem %s2, %s852
      %p854 = scmp.lt.s32.totalorder %s38, 1
      %s855 = scalar_select %p854, %s38, 1
      %s856 = smul.addr %s855, 8
      %s857 = scalar_lea.vmem %s27, %s856
      %v858 = vld [vmem:[%s842] sm:$0xff]
      %v859 = vld [vmem:[%s842 + $0x8] sm:$0xff]
      %v860 = vld [vmem:[%s842 + $0x10] sm:$0xff]
      %v861 = vld [vmem:[%s842 + $0x18] sm:$0xff]
      %v862 = vld [vmem:[%s848] sm:$0xff]
      %v863 = vld [vmem:[%s848 + $0x8] sm:$0xff]
      %v864 = vld [vmem:[%s848 + $0x10] sm:$0xff]
      %v865 = vld [vmem:[%s848 + $0x18] sm:$0xff]
      %v866 = vld [vmem:[%s853] sm:$0xff]
      %v867 = vld [vmem:[%s3] sm:$0x3f]
      %v868 = vld [vmem:[%s4] sm:$0x1]
      %v870 = vperm.slane %v868, 0
      %vm872 = vcmask 48128
      %v874 = vsel %vm872, %v858, 0
      %v877 = vsel %vm872, %v859, 0
      %v880 = vsel %vm872, %v860, 0
      %v883 = vsel %vm872, %v861, 0
      %vm885 = vcmask 1045504
      %v887 = vsel %vm885, %v867, 0
      %889 = vmatpush.msra.mxu0 0.0
      %890 = vmatpush.msra.mxu0 0.0
      %891 = vmatpush.msra.mxu0 0.0
      %892 = vmatpush.msra.mxu0 0.0
      %893 = vmatpush.msra.mxu0 0.0
      %894 = vmatpush.msra.mxu0 0.0
      %895 = vmatpush.msra.mxu0 0.0
      %896 = vmatpush.msra.mxu0 0.0
      %897 = vmatpush.msra.mxu0 0.0
      %898 = vmatpush.msra.mxu0 0.0
      %899 = vmatpush.msra.mxu0 0.0
      %900 = vmatpush.msra.mxu0 0.0
      %901 = vmatpush.msra.mxu0 0.0
      %902 = vmatpush.msra.mxu0 0.0
      %903 = vmatpush.msra.mxu0 0.0
      %904 = vmatpush.msra.mxu0 %v887
      %905 = vmatmul.f32.gmra.mxu0 %v874
      %v906 = vpop.f32.mrf.mxu0
      %v907 = vadd.f32 %v870, %v906
      %908 = vmatmul.f32.gmra.mxu0 %v877
      %v909 = vpop.f32.mrf.mxu0
      %v910 = vadd.f32 %v870, %v909
      %911 = vmatmul.f32.gmra.mxu0 %v880
      %v912 = vpop.f32.mrf.mxu0
      %v913 = vadd.f32 %v870, %v912
      %914 = vmatmul.f32.gmra.mxu0 %v883
      %v915 = vpop.f32.mrf.mxu0
      %v916 = vadd.f32 %v870, %v915
      %917 = vdwg.mxu0
      %v918 = vmax.f32 %v907, 0.0
      %v919 = vmax.f32 %v910, 0.0
      %v920 = vmax.f32 %v913, 0.0
      %v921 = vmax.f32 %v916, 0.0
      %v922 = vld [vmem:[%s5] sm:$0xff]
      %v923 = vld [vmem:[%s5 + $0x8] sm:$0xff]
      %v924 = vld [vmem:[%s5 + $0x10] sm:$0xff]
      %v925 = vld [vmem:[%s5 + $0x18] sm:$0xff]
      %v926 = vld [vmem:[%s5 + $0x20] sm:$0xff]
      %v927 = vld [vmem:[%s5 + $0x28] sm:$0xff]
      %v928 = vld [vmem:[%s5 + $0x30] sm:$0xff]
      %v929 = vld [vmem:[%s5 + $0x38] sm:$0xff]
      %v930 = vld [vmem:[%s5 + $0x40] sm:$0xff]
      %v931 = vld [vmem:[%s5 + $0x48] sm:$0xff]
      %v932 = vld [vmem:[%s5 + $0x50] sm:$0xff]
      %v933 = vld [vmem:[%s5 + $0x58] sm:$0xff]
      %v934 = vld [vmem:[%s5 + $0x60] sm:$0xff]
      %v935 = vld [vmem:[%s5 + $0x68] sm:$0xff]
      %v936 = vld [vmem:[%s5 + $0x70] sm:$0xff]
      %v937 = vld [vmem:[%s5 + $0x78] sm:$0xff]
      %v938 = vld [vmem:[%s6] sm:$0x3]
      %v940 = vperm.slane %v938, 0
      %v941 = vperm.slane %v938, 1
      %vm944 = vcmask 523264
      %v946 = vsel %vm944, %v918, 0
      %v949 = vsel %vm944, %v919, 0
      %v952 = vsel %vm944, %v920, 0
      %v955 = vsel %vm944, %v921, 0
      %957 = vmatpush.msra.mxu0 0.0
      %958 = vmatpush.msra.mxu0 0.0
      %959 = vmatpush.msra.mxu0 0.0
      %960 = vmatpush.msra.mxu0 0.0
      %961 = vmatpush.msra.mxu0 0.0
      %962 = vmatpush.msra.mxu0 0.0
      %963 = vmatpush.msra.mxu0 0.0
      %964 = vmatpush.msra.mxu0 0.0
      %965 = vmatpush.msra.mxu0 %v936
      %966 = vmatpush.msra.mxu0 %v934
      %967 = vmatpush.msra.mxu0 %v932
      %968 = vmatpush.msra.mxu0 %v930
      %969 = vmatpush.msra.mxu0 %v928
      %970 = vmatpush.msra.mxu0 %v926
      %971 = vmatpush.msra.mxu0 %v924
      %972 = vmatpush.msra.mxu0 %v922
      %973 = vmatmul.f32.gmra.mxu0 %v946
      %v974 = vpop.f32.mrf.mxu0
      %v975 = vadd.f32 %v940, %v974
      %976 = vmatmul.f32.gmra.mxu0 %v949
      %v977 = vpop.f32.mrf.mxu0
      %v978 = vadd.f32 %v940, %v977
      %979 = vmatmul.f32.gmra.mxu0 %v952
      %v980 = vpop.f32.mrf.mxu0
      %v981 = vadd.f32 %v940, %v980
      %982 = vmatmul.f32.gmra.mxu0 %v955
      %v983 = vpop.f32.mrf.mxu0
      %v984 = vadd.f32 %v940, %v983
      %985 = vdwg.mxu0
      %986 = vmatpush.msra.mxu0 0.0
      %987 = vmatpush.msra.mxu0 0.0
      %988 = vmatpush.msra.mxu0 0.0
      %989 = vmatpush.msra.mxu0 0.0
      %990 = vmatpush.msra.mxu0 0.0
      %991 = vmatpush.msra.mxu0 0.0
      %992 = vmatpush.msra.mxu0 0.0
      %993 = vmatpush.msra.mxu0 0.0
      %994 = vmatpush.msra.mxu0 %v937
      %995 = vmatpush.msra.mxu0 %v935
      %996 = vmatpush.msra.mxu0 %v933
      %997 = vmatpush.msra.mxu0 %v931
      %998 = vmatpush.msra.mxu0 %v929
      %999 = vmatpush.msra.mxu0 %v927
      %1000 = vmatpush.msra.mxu0 %v925
      %1001 = vmatpush.msra.mxu0 %v923
      %1002 = vmatmul.f32.gmra.mxu0 %v946
      %v1003 = vpop.f32.mrf.mxu0
      %v1004 = vadd.f32 %v941, %v1003
      %1005 = vmatmul.f32.gmra.mxu0 %v949
      %v1006 = vpop.f32.mrf.mxu0
      %v1007 = vadd.f32 %v941, %v1006
      %1008 = vmatmul.f32.gmra.mxu0 %v952
      %v1009 = vpop.f32.mrf.mxu0
      %v1010 = vadd.f32 %v941, %v1009
      %1011 = vmatmul.f32.gmra.mxu0 %v955
      %v1012 = vpop.f32.mrf.mxu0
      %v1013 = vadd.f32 %v941, %v1012
      %1014 = vdwg.mxu0
      %v1015 = vld [vmem:[%s7] sm:$0x3f]
      %v1016 = vld [vmem:[%s7 + $0x8] sm:$0x3f]
      %v1018 = vsel %vm885, %v1015, 0
      %v1021 = vsel %vm885, %v1016, 0
      %1023 = vmatpush.msra.mxu0 0.0
      %1024 = vmatpush.msra.mxu0 0.0
      %1025 = vmatpush.msra.mxu0 0.0
      %1026 = vmatpush.msra.mxu0 0.0
      %1027 = vmatpush.msra.mxu0 0.0
      %1028 = vmatpush.msra.mxu0 0.0
      %1029 = vmatpush.msra.mxu0 0.0
      %1030 = vmatpush.msra.mxu0 0.0
      %1031 = vmatpush.msra.mxu0 0.0
      %1032 = vmatpush.msra.mxu0 0.0
      %1033 = vmatpush.msra.mxu0 0.0
      %1034 = vmatpush.msra.mxu0 0.0
      %1035 = vmatpush.msra.mxu0 0.0
      %1036 = vmatpush.msra.mxu0 0.0
      %1037 = vmatpush.msra.mxu0 0.0
      %1038 = vmatpush.msra.mxu0 %v1018
      %1039 = vmatmul.f32.gmra.mxu0 %v874
      %v1040 = vpop.f32.mrf.mxu0
      %v1041 = vadd.f32 0.0, %v1040
      %1042 = vmatmul.f32.gmra.mxu0 %v877
      %v1043 = vpop.f32.mrf.mxu0
      %v1044 = vadd.f32 0.0, %v1043
      %1045 = vmatmul.f32.gmra.mxu0 %v880
      %v1046 = vpop.f32.mrf.mxu0
      %v1047 = vadd.f32 0.0, %v1046
      %1048 = vmatmul.f32.gmra.mxu0 %v883
      %v1049 = vpop.f32.mrf.mxu0
      %v1050 = vadd.f32 0.0, %v1049
      %1051 = vdwg.mxu0
      %1052 = vmatpush.msra.mxu0 0.0
      %1053 = vmatpush.msra.mxu0 0.0
      %1054 = vmatpush.msra.mxu0 0.0
      %1055 = vmatpush.msra.mxu0 0.0
      %1056 = vmatpush.msra.mxu0 0.0
      %1057 = vmatpush.msra.mxu0 0.0
      %1058 = vmatpush.msra.mxu0 0.0
      %1059 = vmatpush.msra.mxu0 0.0
      %1060 = vmatpush.msra.mxu0 0.0
      %1061 = vmatpush.msra.mxu0 0.0
      %1062 = vmatpush.msra.mxu0 0.0
      %1063 = vmatpush.msra.mxu0 0.0
      %1064 = vmatpush.msra.mxu0 0.0
      %1065 = vmatpush.msra.mxu0 0.0
      %1066 = vmatpush.msra.mxu0 0.0
      %1067 = vmatpush.msra.mxu0 %v1021
      %1068 = vmatmul.f32.gmra.mxu0 %v874
      %v1069 = vpop.f32.mrf.mxu0
      %v1070 = vadd.f32 0.0, %v1069
      %1071 = vmatmul.f32.gmra.mxu0 %v877
      %v1072 = vpop.f32.mrf.mxu0
      %v1073 = vadd.f32 0.0, %v1072
      %1074 = vmatmul.f32.gmra.mxu0 %v880
      %v1075 = vpop.f32.mrf.mxu0
      %v1076 = vadd.f32 0.0, %v1075
      %1077 = vmatmul.f32.gmra.mxu0 %v883
      %v1078 = vpop.f32.mrf.mxu0
      %v1079 = vadd.f32 0.0, %v1078
      %1080 = vdwg.mxu0
      %v1081 = vmul.f32 %v1041, %v975
      %v1082 = vmul.f32 %v1070, %v1004
      %v1083 = vmul.f32 %v1044, %v978
      %v1084 = vmul.f32 %v1073, %v1007
      %v1085 = vmul.f32 %v1047, %v981
      %v1086 = vmul.f32 %v1076, %v1010
      %v1087 = vmul.f32 %v1050, %v984
      %v1088 = vmul.f32 %v1079, %v1013
      %v1089 = vld [vmem:[%s8] sm:$0xff]
      %v1090 = vld [vmem:[%s8 + $0x8] sm:$0xff]
      %v1091 = vld [vmem:[%s8 + $0x10] sm:$0xff]
      %v1092 = vld [vmem:[%s8 + $0x18] sm:$0xff]
      %v1093 = vld [vmem:[%s8 + $0x20] sm:$0xff]
      %v1094 = vld [vmem:[%s8 + $0x28] sm:$0xff]
      %v1095 = vld [vmem:[%s8 + $0x30] sm:$0xff]
      %v1096 = vld [vmem:[%s8 + $0x38] sm:$0xff]
      %v1097 = vld [vmem:[%s8 + $0x40] sm:$0xff]
      %v1098 = vld [vmem:[%s8 + $0x48] sm:$0xff]
      %v1099 = vld [vmem:[%s8 + $0x50] sm:$0xff]
      %v1100 = vld [vmem:[%s8 + $0x58] sm:$0xff]
      %v1101 = vld [vmem:[%s8 + $0x60] sm:$0xff]
      %v1102 = vld [vmem:[%s8 + $0x68] sm:$0xff]
      %v1103 = vld [vmem:[%s8 + $0x70] sm:$0xff]
      %v1104 = vld [vmem:[%s8 + $0x78] sm:$0xff]
      %v1105 = vld [vmem:[%s8 + $0x80] sm:$0xff]
      %v1106 = vld [vmem:[%s8 + $0x88] sm:$0xff]
      %v1107 = vld [vmem:[%s8 + $0x90] sm:$0xff]
      %v1108 = vld [vmem:[%s8 + $0x98] sm:$0xff]
      %v1109 = vld [vmem:[%s8 + $0xa0] sm:$0xff]
      %v1110 = vld [vmem:[%s8 + $0xa8] sm:$0xff]
      %v1111 = vld [vmem:[%s8 + $0xb0] sm:$0xff]
      %v1112 = vld [vmem:[%s8 + $0xb8] sm:$0xff]
      %v1114 = vsel %vm944, %v1082, 0
      %v1117 = vsel %vm944, %v1084, 0
      %v1120 = vsel %vm944, %v1086, 0
      %v1123 = vsel %vm944, %v1088, 0
      %1125 = vmatpush.msra.mxu0 %v1104
      %1126 = vmatpush.msra.mxu0 %v1103
      %1127 = vmatpush.msra.mxu0 %v1102
      %1128 = vmatpush.msra.mxu0 %v1101
      %1129 = vmatpush.msra.mxu0 %v1100
      %1130 = vmatpush.msra.mxu0 %v1099
      %1131 = vmatpush.msra.mxu0 %v1098
      %1132 = vmatpush.msra.mxu0 %v1097
      %1133 = vmatpush.msra.mxu0 %v1096
      %1134 = vmatpush.msra.mxu0 %v1095
      %1135 = vmatpush.msra.mxu0 %v1094
      %1136 = vmatpush.msra.mxu0 %v1093
      %1137 = vmatpush.msra.mxu0 %v1092
      %1138 = vmatpush.msra.mxu0 %v1091
      %1139 = vmatpush.msra.mxu0 %v1090
      %1140 = vmatpush.msra.mxu0 %v1089
      %1141 = vmatmul.f32.gmra.mxu0 %v1081
      %v1142 = vpop.f32.mrf.mxu0
      %v1143 = vadd.f32 0.0, %v1142
      %1144 = vmatmul.f32.gmra.mxu0 %v1083
      %v1145 = vpop.f32.mrf.mxu0
      %v1146 = vadd.f32 0.0, %v1145
      %1147 = vmatmul.f32.gmra.mxu0 %v1085
      %v1148 = vpop.f32.mrf.mxu0
      %v1149 = vadd.f32 0.0, %v1148
      %1150 = vmatmul.f32.gmra.mxu0 %v1087
      %v1151 = vpop.f32.mrf.mxu0
      %v1152 = vadd.f32 0.0, %v1151
      %1153 = vdwg.mxu0
      %1154 = vmatpush.msra.mxu0 0.0
      %1155 = vmatpush.msra.mxu0 0.0
      %1156 = vmatpush.msra.mxu0 0.0
      %1157 = vmatpush.msra.mxu0 0.0
      %1158 = vmatpush.msra.mxu0 0.0
      %1159 = vmatpush.msra.mxu0 0.0
      %1160 = vmatpush.msra.mxu0 0.0
      %1161 = vmatpush.msra.mxu0 0.0
      %1162 = vmatpush.msra.mxu0 %v1112
      %1163 = vmatpush.msra.mxu0 %v1111
      %1164 = vmatpush.msra.mxu0 %v1110
      %1165 = vmatpush.msra.mxu0 %v1109
      %1166 = vmatpush.msra.mxu0 %v1108
      %1167 = vmatpush.msra.mxu0 %v1107
      %1168 = vmatpush.msra.mxu0 %v1106
      %1169 = vmatpush.msra.mxu0 %v1105
      %1170 = vmatmul.f32.gmra.mxu0 %v1114
      %v1171 = vpop.f32.mrf.mxu0
      %v1172 = vadd.f32 %v1143, %v1171
      %1173 = vmatmul.f32.gmra.mxu0 %v1117
      %v1174 = vpop.f32.mrf.mxu0
      %v1175 = vadd.f32 %v1146, %v1174
      %1176 = vmatmul.f32.gmra.mxu0 %v1120
      %v1177 = vpop.f32.mrf.mxu0
      %v1178 = vadd.f32 %v1149, %v1177
      %1179 = vmatmul.f32.gmra.mxu0 %v1123
      %v1180 = vpop.f32.mrf.mxu0
      %v1181 = vadd.f32 %v1152, %v1180
      %1182 = vdwg.mxu0
      %v1183 = vld [vmem:[%s23] sm:$0xff]
      %v1184 = vld [vmem:[%s9] sm:$0x1f]
      %v1185 = vld [vmem:[%s10] sm:$0x1]
      %v1187 = vperm.slane %v1185, 0
      %vm1189 = vcmask 39936
      %v1191 = vsel %vm1189, %v862, 0
      %v1194 = vsel %vm1189, %v863, 0
      %v1197 = vsel %vm1189, %v864, 0
      %v1200 = vsel %vm1189, %v865, 0
      %vm1202 = vcmask 1044480
      %v1204 = vsel %vm1202, %v1184, 0
      %1206 = vmatpush.msra.mxu0 0.0
      %1207 = vmatpush.msra.mxu0 0.0
      %1208 = vmatpush.msra.mxu0 0.0
      %1209 = vmatpush.msra.mxu0 0.0
      %1210 = vmatpush.msra.mxu0 0.0
      %1211 = vmatpush.msra.mxu0 0.0
      %1212 = vmatpush.msra.mxu0 0.0
      %1213 = vmatpush.msra.mxu0 0.0
      %1214 = vmatpush.msra.mxu0 0.0
      %1215 = vmatpush.msra.mxu0 0.0
      %1216 = vmatpush.msra.mxu0 0.0
      %1217 = vmatpush.msra.mxu0 0.0
      %1218 = vmatpush.msra.mxu0 0.0
      %1219 = vmatpush.msra.mxu0 0.0
      %1220 = vmatpush.msra.mxu0 0.0
      %1221 = vmatpush.msra.mxu0 %v1204
      %1222 = vmatmul.f32.gmra.mxu0 %v1191
      %v1223 = vpop.f32.mrf.mxu0
      %v1224 = vadd.f32 %v1187, %v1223
      %1225 = vmatmul.f32.gmra.mxu0 %v1194
      %v1226 = vpop.f32.mrf.mxu0
      %v1227 = vadd.f32 %v1187, %v1226
      %1228 = vmatmul.f32.gmra.mxu0 %v1197
      %v1229 = vpop.f32.mrf.mxu0
      %v1230 = vadd.f32 %v1187, %v1229
      %1231 = vmatmul.f32.gmra.mxu0 %v1200
      %v1232 = vpop.f32.mrf.mxu0
      %v1233 = vadd.f32 %v1187, %v1232
      %1234 = vdwg.mxu0
      %v1235 = vmax.f32 %v1224, 0.0
      %v1236 = vmax.f32 %v1227, 0.0
      %v1237 = vmax.f32 %v1230, 0.0
      %v1238 = vmax.f32 %v1233, 0.0
      %v1239 = vld [vmem:[%s11] sm:$0xff]
      %v1240 = vld [vmem:[%s11 + $0x8] sm:$0xff]
      %v1241 = vld [vmem:[%s11 + $0x10] sm:$0xff]
      %v1242 = vld [vmem:[%s11 + $0x18] sm:$0xff]
      %v1243 = vld [vmem:[%s11 + $0x20] sm:$0xff]
      %v1244 = vld [vmem:[%s11 + $0x28] sm:$0xff]
      %v1245 = vld [vmem:[%s11 + $0x30] sm:$0xff]
      %v1246 = vld [vmem:[%s11 + $0x38] sm:$0xff]
      %v1247 = vld [vmem:[%s11 + $0x40] sm:$0xff]
      %v1248 = vld [vmem:[%s11 + $0x48] sm:$0xff]
      %v1249 = vld [vmem:[%s11 + $0x50] sm:$0xff]
      %v1250 = vld [vmem:[%s11 + $0x58] sm:$0xff]
      %v1251 = vld [vmem:[%s11 + $0x60] sm:$0xff]
      %v1252 = vld [vmem:[%s11 + $0x68] sm:$0xff]
      %v1253 = vld [vmem:[%s11 + $0x70] sm:$0xff]
      %v1254 = vld [vmem:[%s11 + $0x78] sm:$0xff]
      %v1255 = vld [vmem:[%s12] sm:$0x3]
      %v1257 = vperm.slane %v1255, 0
      %v1258 = vperm.slane %v1255, 1
      %v1262 = vsel %vm944, %v1235, 0
      %v1265 = vsel %vm944, %v1236, 0
      %v1268 = vsel %vm944, %v1237, 0
      %v1271 = vsel %vm944, %v1238, 0
      %1273 = vmatpush.msra.mxu0 0.0
      %1274 = vmatpush.msra.mxu0 0.0
      %1275 = vmatpush.msra.mxu0 0.0
      %1276 = vmatpush.msra.mxu0 0.0
      %1277 = vmatpush.msra.mxu0 0.0
      %1278 = vmatpush.msra.mxu0 0.0
      %1279 = vmatpush.msra.mxu0 0.0
      %1280 = vmatpush.msra.mxu0 0.0
      %1281 = vmatpush.msra.mxu0 %v1253
      %1282 = vmatpush.msra.mxu0 %v1251
      %1283 = vmatpush.msra.mxu0 %v1249
      %1284 = vmatpush.msra.mxu0 %v1247
      %1285 = vmatpush.msra.mxu0 %v1245
      %1286 = vmatpush.msra.mxu0 %v1243
      %1287 = vmatpush.msra.mxu0 %v1241
      %1288 = vmatpush.msra.mxu0 %v1239
      %1289 = vmatmul.f32.gmra.mxu0 %v1262
      %v1290 = vpop.f32.mrf.mxu0
      %v1291 = vadd.f32 %v1257, %v1290
      %1292 = vmatmul.f32.gmra.mxu0 %v1265
      %v1293 = vpop.f32.mrf.mxu0
      %v1294 = vadd.f32 %v1257, %v1293
      %1295 = vmatmul.f32.gmra.mxu0 %v1268
      %v1296 = vpop.f32.mrf.mxu0
      %v1297 = vadd.f32 %v1257, %v1296
      %1298 = vmatmul.f32.gmra.mxu0 %v1271
      %v1299 = vpop.f32.mrf.mxu0
      %v1300 = vadd.f32 %v1257, %v1299
      %1301 = vdwg.mxu0
      %1302 = vmatpush.msra.mxu0 0.0
      %1303 = vmatpush.msra.mxu0 0.0
      %1304 = vmatpush.msra.mxu0 0.0
      %1305 = vmatpush.msra.mxu0 0.0
      %1306 = vmatpush.msra.mxu0 0.0
      %1307 = vmatpush.msra.mxu0 0.0
      %1308 = vmatpush.msra.mxu0 0.0
      %1309 = vmatpush.msra.mxu0 0.0
      %1310 = vmatpush.msra.mxu0 %v1254
      %1311 = vmatpush.msra.mxu0 %v1252
      %1312 = vmatpush.msra.mxu0 %v1250
      %1313 = vmatpush.msra.mxu0 %v1248
      %1314 = vmatpush.msra.mxu0 %v1246
      %1315 = vmatpush.msra.mxu0 %v1244
      %1316 = vmatpush.msra.mxu0 %v1242
      %1317 = vmatpush.msra.mxu0 %v1240
      %1318 = vmatmul.f32.gmra.mxu0 %v1262
      %v1319 = vpop.f32.mrf.mxu0
      %v1320 = vadd.f32 %v1258, %v1319
      %1321 = vmatmul.f32.gmra.mxu0 %v1265
      %v1322 = vpop.f32.mrf.mxu0
      %v1323 = vadd.f32 %v1258, %v1322
      %1324 = vmatmul.f32.gmra.mxu0 %v1268
      %v1325 = vpop.f32.mrf.mxu0
      %v1326 = vadd.f32 %v1258, %v1325
      %1327 = vmatmul.f32.gmra.mxu0 %v1271
      %v1328 = vpop.f32.mrf.mxu0
      %v1329 = vadd.f32 %v1258, %v1328
      %1330 = vdwg.mxu0
      %v1331 = vld [vmem:[%s13] sm:$0x1f]
      %v1332 = vld [vmem:[%s13 + $0x8] sm:$0x1f]
      %v1334 = vsel %vm1202, %v1331, 0
      %v1337 = vsel %vm1202, %v1332, 0
      %1339 = vmatpush.msra.mxu0 0.0
      %1340 = vmatpush.msra.mxu0 0.0
      %1341 = vmatpush.msra.mxu0 0.0
      %1342 = vmatpush.msra.mxu0 0.0
      %1343 = vmatpush.msra.mxu0 0.0
      %1344 = vmatpush.msra.mxu0 0.0
      %1345 = vmatpush.msra.mxu0 0.0
      %1346 = vmatpush.msra.mxu0 0.0
      %1347 = vmatpush.msra.mxu0 0.0
      %1348 = vmatpush.msra.mxu0 0.0
      %1349 = vmatpush.msra.mxu0 0.0
      %1350 = vmatpush.msra.mxu0 0.0
      %1351 = vmatpush.msra.mxu0 0.0
      %1352 = vmatpush.msra.mxu0 0.0
      %1353 = vmatpush.msra.mxu0 0.0
      %1354 = vmatpush.msra.mxu0 %v1334
      %1355 = vmatmul.f32.gmra.mxu0 %v1191
      %v1356 = vpop.f32.mrf.mxu0
      %v1357 = vadd.f32 0.0, %v1356
      %1358 = vmatmul.f32.gmra.mxu0 %v1194
      %v1359 = vpop.f32.mrf.mxu0
      %v1360 = vadd.f32 0.0, %v1359
      %1361 = vmatmul.f32.gmra.mxu0 %v1197
      %v1362 = vpop.f32.mrf.mxu0
      %v1363 = vadd.f32 0.0, %v1362
      %1364 = vmatmul.f32.gmra.mxu0 %v1200
      %v1365 = vpop.f32.mrf.mxu0
      %v1366 = vadd.f32 0.0, %v1365
      %1367 = vdwg.mxu0
      %1368 = vmatpush.msra.mxu0 0.0
      %1369 = vmatpush.msra.mxu0 0.0
      %1370 = vmatpush.msra.mxu0 0.0
      %1371 = vmatpush.msra.mxu0 0.0
      %1372 = vmatpush.msra.mxu0 0.0
      %1373 = vmatpush.msra.mxu0 0.0
      %1374 = vmatpush.msra.mxu0 0.0
      %1375 = vmatpush.msra.mxu0 0.0
      %1376 = vmatpush.msra.mxu0 0.0
      %1377 = vmatpush.msra.mxu0 0.0
      %1378 = vmatpush.msra.mxu0 0.0
      %1379 = vmatpush.msra.mxu0 0.0
      %1380 = vmatpush.msra.mxu0 0.0
      %1381 = vmatpush.msra.mxu0 0.0
      %1382 = vmatpush.msra.mxu0 0.0
      %1383 = vmatpush.msra.mxu0 %v1337
      %1384 = vmatmul.f32.gmra.mxu0 %v1191
      %v1385 = vpop.f32.mrf.mxu0
      %v1386 = vadd.f32 0.0, %v1385
      %1387 = vmatmul.f32.gmra.mxu0 %v1194
      %v1388 = vpop.f32.mrf.mxu0
      %v1389 = vadd.f32 0.0, %v1388
      %1390 = vmatmul.f32.gmra.mxu0 %v1197
      %v1391 = vpop.f32.mrf.mxu0
      %v1392 = vadd.f32 0.0, %v1391
      %1393 = vmatmul.f32.gmra.mxu0 %v1200
      %v1394 = vpop.f32.mrf.mxu0
      %v1395 = vadd.f32 0.0, %v1394
      %1396 = vdwg.mxu0
      %v1397 = vmul.f32 %v1357, %v1291
      %v1398 = vmul.f32 %v1386, %v1320
      %v1399 = vmul.f32 %v1360, %v1294
      %v1400 = vmul.f32 %v1389, %v1323
      %v1401 = vmul.f32 %v1363, %v1297
      %v1402 = vmul.f32 %v1392, %v1326
      %v1403 = vmul.f32 %v1366, %v1300
      %v1404 = vmul.f32 %v1395, %v1329
      %v1405 = vld [vmem:[%s14] sm:$0xff]
      %v1406 = vld [vmem:[%s14 + $0x8] sm:$0xff]
      %v1407 = vld [vmem:[%s14 + $0x10] sm:$0xff]
      %v1408 = vld [vmem:[%s14 + $0x18] sm:$0xff]
      %v1409 = vld [vmem:[%s14 + $0x20] sm:$0xff]
      %v1410 = vld [vmem:[%s14 + $0x28] sm:$0xff]
      %v1411 = vld [vmem:[%s14 + $0x30] sm:$0xff]
      %v1412 = vld [vmem:[%s14 + $0x38] sm:$0xff]
      %v1413 = vld [vmem:[%s14 + $0x40] sm:$0xff]
      %v1414 = vld [vmem:[%s14 + $0x48] sm:$0xff]
      %v1415 = vld [vmem:[%s14 + $0x50] sm:$0xff]
      %v1416 = vld [vmem:[%s14 + $0x58] sm:$0xff]
      %v1417 = vld [vmem:[%s14 + $0x60] sm:$0xff]
      %v1418 = vld [vmem:[%s14 + $0x68] sm:$0xff]
      %v1419 = vld [vmem:[%s14 + $0x70] sm:$0xff]
      %v1420 = vld [vmem:[%s14 + $0x78] sm:$0xff]
      %v1421 = vld [vmem:[%s14 + $0x80] sm:$0xff]
      %v1422 = vld [vmem:[%s14 + $0x88] sm:$0xff]
      %v1423 = vld [vmem:[%s14 + $0x90] sm:$0xff]
      %v1424 = vld [vmem:[%s14 + $0x98] sm:$0xff]
      %vm1425 = vcmask 261120
      %v1427 = vsel %vm1425, %v1398, 0
      %v1430 = vsel %vm1425, %v1400, 0
      %v1433 = vsel %vm1425, %v1402, 0
      %v1436 = vsel %vm1425, %v1404, 0
      %1438 = vmatpush.msra.mxu0 %v1420
      %1439 = vmatpush.msra.mxu0 %v1419
      %1440 = vmatpush.msra.mxu0 %v1418
      %1441 = vmatpush.msra.mxu0 %v1417
      %1442 = vmatpush.msra.mxu0 %v1416
      %1443 = vmatpush.msra.mxu0 %v1415
      %1444 = vmatpush.msra.mxu0 %v1414
      %1445 = vmatpush.msra.mxu0 %v1413
      %1446 = vmatpush.msra.mxu0 %v1412
      %1447 = vmatpush.msra.mxu0 %v1411
      %1448 = vmatpush.msra.mxu0 %v1410
      %1449 = vmatpush.msra.mxu0 %v1409
      %1450 = vmatpush.msra.mxu0 %v1408
      %1451 = vmatpush.msra.mxu0 %v1407
      %1452 = vmatpush.msra.mxu0 %v1406
      %1453 = vmatpush.msra.mxu0 %v1405
      %1454 = vmatmul.f32.gmra.mxu0 %v1397
      %v1455 = vpop.f32.mrf.mxu0
      %v1456 = vadd.f32 0.0, %v1455
      %1457 = vmatmul.f32.gmra.mxu0 %v1399
      %v1458 = vpop.f32.mrf.mxu0
      %v1459 = vadd.f32 0.0, %v1458
      %1460 = vmatmul.f32.gmra.mxu0 %v1401
      %v1461 = vpop.f32.mrf.mxu0
      %v1462 = vadd.f32 0.0, %v1461
      %1463 = vmatmul.f32.gmra.mxu0 %v1403
      %v1464 = vpop.f32.mrf.mxu0
      %v1465 = vadd.f32 0.0, %v1464
      %1466 = vdwg.mxu0
      %1467 = vmatpush.msra.mxu0 0.0
      %1468 = vmatpush.msra.mxu0 0.0
      %1469 = vmatpush.msra.mxu0 0.0
      %1470 = vmatpush.msra.mxu0 0.0
      %1471 = vmatpush.msra.mxu0 0.0
      %1472 = vmatpush.msra.mxu0 0.0
      %1473 = vmatpush.msra.mxu0 0.0
      %1474 = vmatpush.msra.mxu0 0.0
      %1475 = vmatpush.msra.mxu0 0.0
      %1476 = vmatpush.msra.mxu0 0.0
      %1477 = vmatpush.msra.mxu0 0.0
      %1478 = vmatpush.msra.mxu0 0.0
      %1479 = vmatpush.msra.mxu0 %v1424
      %1480 = vmatpush.msra.mxu0 %v1423
      %1481 = vmatpush.msra.mxu0 %v1422
      %1482 = vmatpush.msra.mxu0 %v1421
      %1483 = vmatmul.f32.gmra.mxu0 %v1427
      %v1484 = vpop.f32.mrf.mxu0
      %v1485 = vadd.f32 %v1456, %v1484
      %1486 = vmatmul.f32.gmra.mxu0 %v1430
      %v1487 = vpop.f32.mrf.mxu0
      %v1488 = vadd.f32 %v1459, %v1487
      %1489 = vmatmul.f32.gmra.mxu0 %v1433
      %v1490 = vpop.f32.mrf.mxu0
      %v1491 = vadd.f32 %v1462, %v1490
      %1492 = vmatmul.f32.gmra.mxu0 %v1436
      %v1493 = vpop.f32.mrf.mxu0
      %v1494 = vadd.f32 %v1465, %v1493
      %1495 = vdwg.mxu0
      %v1496 = vld [vmem:[%s24] sm:$0xff]
      %v1498 = vsel %vm1425, %v1496, 0
      %1500 = vmatpush.msra.mxu0 0.0
      %1501 = vmatpush.msra.mxu0 0.0
      %1502 = vmatpush.msra.mxu0 0.0
      %1503 = vmatpush.msra.mxu0 0.0
      %1504 = vmatpush.msra.mxu0 0.0
      %1505 = vmatpush.msra.mxu0 0.0
      %1506 = vmatpush.msra.mxu0 0.0
      %1507 = vmatpush.msra.mxu0 0.0
      %1508 = vmatpush.msra.mxu0 0.0
      %1509 = vmatpush.msra.mxu0 0.0
      %1510 = vmatpush.msra.mxu0 0.0
      %1511 = vmatpush.msra.mxu0 0.0
      %1512 = vmatpush.msra.mxu0 %v1494
      %1513 = vmatpush.msra.mxu0 %v1491
      %1514 = vmatpush.msra.mxu0 %v1488
      %1515 = vmatpush.msra.mxu0 %v1485
      %1516 = vmatmul.f32.gmra.mxu0 %v1498
      %v1517 = vpop.f32.mrf.mxu0
      %v1518 = vadd.f32 0.0, %v1517
      %1519 = vdwg.mxu0
      %v1521 = vsel %vm1425, %v1183, 0
      %1523 = vmatpush.msra.mxu0 0.0
      %1524 = vmatpush.msra.mxu0 0.0
      %1525 = vmatpush.msra.mxu0 0.0
      %1526 = vmatpush.msra.mxu0 0.0
      %1527 = vmatpush.msra.mxu0 0.0
      %1528 = vmatpush.msra.mxu0 0.0
      %1529 = vmatpush.msra.mxu0 0.0
      %1530 = vmatpush.msra.mxu0 0.0
      %1531 = vmatpush.msra.mxu0 0.0
      %1532 = vmatpush.msra.mxu0 0.0
      %1533 = vmatpush.msra.mxu0 0.0
      %1534 = vmatpush.msra.mxu0 0.0
      %1535 = vmatpush.msra.mxu0 %v1181
      %1536 = vmatpush.msra.mxu0 %v1178
      %1537 = vmatpush.msra.mxu0 %v1175
      %1538 = vmatpush.msra.mxu0 %v1172
      %1539 = vmatmul.f32.gmra.mxu0 %v1521
      %v1540 = vpop.f32.mrf.mxu0
      %v1541 = vadd.f32 %v1518, %v1540
      %1542 = vdwg.mxu0
      %vm1543 = vcmask 31744
      %v1544 = vsel %vm1543, %v866, -inf
      %1545 = vmax.xlane.f32.xlu0 %v1544
      %v1546 = vpop.xlane.xlu0 %1545
      %v1547 = vsub.f32 %v866, %v1546
      %v1548 = vmul.f32 %v1547, 1.442695
      %v1549 = vpow.pop %v1548
      %v1550 = vsel %vm1543, %v1549, 0.0
      %1551 = vadd.xlane.f32.xlu0 %v1550
      %v1552 = vpop.xlane.xlu0 %1551
      %v1553 = vrcp.pop %v1552
      %v1554 = vmul.f32 %v1549, %v1553
      %v1555 = vperm.slane %v1554, 0
      %v1556 = vlaneseq
      %v1557 = vshrl.u32 %v1556, 7
      %1559 = vset.pattern.permute.xlu0 %v1557
      %1560 = vperm.xlu0 %1559, %v1555
      %v1561 = vpop.permute.xlu0 %1560
      %v1562 = vperm.slane %v1554, 1
      %v1563 = vlaneseq
      %v1564 = vshrl.u32 %v1563, 7
      %1566 = vset.pattern.permute.xlu0 %v1564
      %1567 = vperm.xlu0 %1566, %v1562
      %v1568 = vpop.permute.xlu0 %1567
      %v1569 = vperm.slane %v1554, 2
      %v1570 = vlaneseq
      %v1571 = vshrl.u32 %v1570, 7
      %1573 = vset.pattern.permute.xlu0 %v1571
      %1574 = vperm.xlu0 %1573, %v1569
      %v1575 = vpop.permute.xlu0 %1574
      %v1576 = vperm.slane %v1554, 3
      %v1577 = vlaneseq
      %v1578 = vshrl.u32 %v1577, 7
      %1580 = vset.pattern.permute.xlu0 %v1578
      %1581 = vperm.xlu0 %1580, %v1576
      %v1582 = vpop.permute.xlu0 %1581
      %v1583 = vperm.slane %v1554, 4
      %v1584 = vlaneseq
      %v1585 = vshrl.u32 %v1584, 7
      %1587 = vset.pattern.permute.xlu0 %v1585
      %1588 = vperm.xlu0 %1587, %v1583
      %v1589 = vpop.permute.xlu0 %1588
      %v1590 = vperm.slane %v1554, 5
      %v1591 = vlaneseq
      %v1592 = vshrl.u32 %v1591, 7
      %1594 = vset.pattern.permute.xlu0 %v1592
      %1595 = vperm.xlu0 %1594, %v1590
      %v1596 = vpop.permute.xlu0 %1595
      %v1597 = vperm.slane %v1554, 6
      %v1598 = vlaneseq
      %v1599 = vshrl.u32 %v1598, 7
      %1601 = vset.pattern.permute.xlu0 %v1599
      %1602 = vperm.xlu0 %1601, %v1597
      %v1603 = vpop.permute.xlu0 %1602
      %v1604 = vperm.slane %v1554, 7
      %v1605 = vlaneseq
      %v1606 = vshrl.u32 %v1605, 7
      %1608 = vset.pattern.permute.xlu0 %v1606
      %1609 = vperm.xlu0 %1608, %v1604
      %v1610 = vpop.permute.xlu0 %1609
      %v1611 = vld [vmem:[%s15] sm:$0x1]
      %v1613 = vperm.slane %v1611, 0
      %v1615 = vmul.f32 %v1561, %v1613
      %v1616 = vmul.f32 %v1568, %v1613
      %v1617 = vmul.f32 %v1575, %v1613
      %v1618 = vmul.f32 %v1582, %v1613
      %v1619 = vmul.f32 %v1589, %v1613
      %v1620 = vmul.f32 %v1596, %v1613
      %v1621 = vmul.f32 %v1603, %v1613
      %v1622 = vmul.f32 %v1610, %v1613
      %v1623 = vld [vmem:[%s16] sm:$0x1]
      %v1625 = vperm.slane %v1623, 0
      %v1627 = vadd.f32 %v1615, %v1625
      %v1628 = vadd.f32 %v1616, %v1625
      %v1629 = vadd.f32 %v1617, %v1625
      %v1630 = vadd.f32 %v1618, %v1625
      %v1631 = vadd.f32 %v1619, %v1625
      %v1632 = vadd.f32 %v1620, %v1625
      %v1633 = vadd.f32 %v1621, %v1625
      %v1634 = vadd.f32 %v1622, %v1625
      %v1635 = vmax.f32 %v1627, 0.0
      %v1636 = vmax.f32 %v1628, 0.0
      %v1637 = vmax.f32 %v1629, 0.0
      %v1638 = vmax.f32 %v1630, 0.0
      %v1639 = vmax.f32 %v1631, 0.0
      %v1640 = vmax.f32 %v1632, 0.0
      %v1641 = vmax.f32 %v1633, 0.0
      %v1642 = vmax.f32 %v1634, 0.0
      %v1643 = vld [vmem:[%s17] sm:$0xff]
      %v1644 = vld [vmem:[%s17 + $0x8] sm:$0xff]
      %v1645 = vld [vmem:[%s17 + $0x10] sm:$0xff]
      %v1646 = vld [vmem:[%s17 + $0x18] sm:$0xff]
      %v1647 = vld [vmem:[%s17 + $0x20] sm:$0xff]
      %v1648 = vld [vmem:[%s17 + $0x28] sm:$0xff]
      %v1649 = vld [vmem:[%s17 + $0x30] sm:$0xff]
      %v1650 = vld [vmem:[%s17 + $0x38] sm:$0xff]
      %v1651 = vld [vmem:[%s17 + $0x40] sm:$0xff]
      %v1652 = vld [vmem:[%s17 + $0x48] sm:$0xff]
      %v1653 = vld [vmem:[%s17 + $0x50] sm:$0xff]
      %v1654 = vld [vmem:[%s17 + $0x58] sm:$0xff]
      %v1655 = vld [vmem:[%s17 + $0x60] sm:$0xff]
      %v1656 = vld [vmem:[%s17 + $0x68] sm:$0xff]
      %v1657 = vld [vmem:[%s17 + $0x70] sm:$0xff]
      %v1658 = vld [vmem:[%s17 + $0x78] sm:$0xff]
      %v1659 = vld [vmem:[%s17 + $0x80] sm:$0xff]
      %v1660 = vld [vmem:[%s17 + $0x88] sm:$0xff]
      %v1661 = vld [vmem:[%s17 + $0x90] sm:$0xff]
      %v1662 = vld [vmem:[%s17 + $0x98] sm:$0xff]
      %v1663 = vld [vmem:[%s17 + $0xa0] sm:$0xff]
      %v1664 = vld [vmem:[%s17 + $0xa8] sm:$0xff]
      %v1665 = vld [vmem:[%s17 + $0xb0] sm:$0xff]
      %v1666 = vld [vmem:[%s17 + $0xb8] sm:$0xff]
      %v1667 = vld [vmem:[%s17 + $0xc0] sm:$0xff]
      %v1668 = vld [vmem:[%s17 + $0xc8] sm:$0xff]
      %v1669 = vld [vmem:[%s17 + $0xd0] sm:$0xff]
      %v1670 = vld [vmem:[%s17 + $0xd8] sm:$0xff]
      %v1671 = vld [vmem:[%s17 + $0xe0] sm:$0xff]
      %v1672 = vld [vmem:[%s17 + $0xe8] sm:$0xff]
      %v1673 = vld [vmem:[%s17 + $0xf0] sm:$0xff]
      %v1674 = vld [vmem:[%s17 + $0xf8] sm:$0xff]
      %v1675 = vld [vmem:[%s17 + $0x100] sm:$0xff]
      %v1676 = vld [vmem:[%s17 + $0x108] sm:$0xff]
      %v1677 = vld [vmem:[%s17 + $0x110] sm:$0xff]
      %v1678 = vld [vmem:[%s17 + $0x118] sm:$0xff]
      %v1679 = vld [vmem:[%s17 + $0x120] sm:$0xff]
      %v1680 = vld [vmem:[%s17 + $0x128] sm:$0xff]
      %v1681 = vld [vmem:[%s17 + $0x130] sm:$0xff]
      %v1682 = vld [vmem:[%s17 + $0x138] sm:$0xff]
      %v1683 = vld [vmem:[%s17 + $0x140] sm:$0xff]
      %v1684 = vld [vmem:[%s17 + $0x148] sm:$0xff]
      %v1685 = vld [vmem:[%s17 + $0x150] sm:$0xff]
      %v1686 = vld [vmem:[%s17 + $0x158] sm:$0xff]
      %v1687 = vld [vmem:[%s17 + $0x160] sm:$0xff]
      %v1688 = vld [vmem:[%s17 + $0x168] sm:$0xff]
      %v1689 = vld [vmem:[%s17 + $0x170] sm:$0xff]
      %v1690 = vld [vmem:[%s17 + $0x178] sm:$0xff]
      %v1691 = vld [vmem:[%s17 + $0x180] sm:$0xff]
      %v1692 = vld [vmem:[%s17 + $0x188] sm:$0xff]
      %v1693 = vld [vmem:[%s17 + $0x190] sm:$0xff]
      %v1694 = vld [vmem:[%s17 + $0x198] sm:$0xff]
      %v1695 = vld [vmem:[%s17 + $0x1a0] sm:$0xff]
      %v1696 = vld [vmem:[%s17 + $0x1a8] sm:$0xff]
      %v1697 = vld [vmem:[%s17 + $0x1b0] sm:$0xff]
      %v1698 = vld [vmem:[%s17 + $0x1b8] sm:$0xff]
      %v1699 = vld [vmem:[%s17 + $0x1c0] sm:$0xff]
      %v1700 = vld [vmem:[%s17 + $0x1c8] sm:$0xff]
      %v1701 = vld [vmem:[%s17 + $0x1d0] sm:$0xff]
      %v1702 = vld [vmem:[%s17 + $0x1d8] sm:$0xff]
      %v1703 = vld [vmem:[%s17 + $0x1e0] sm:$0xff]
      %v1704 = vld [vmem:[%s17 + $0x1e8] sm:$0xff]
      %v1705 = vld [vmem:[%s17 + $0x1f0] sm:$0xff]
      %v1706 = vld [vmem:[%s17 + $0x1f8] sm:$0xff]
      %v1707 = vld [vmem:[%s18] sm:$0xff]
      %v1709 = vperm.slane %v1707, 0
      %v1710 = vperm.slane %v1707, 1
      %v1711 = vperm.slane %v1707, 2
      %v1712 = vperm.slane %v1707, 3
      %v1713 = vperm.slane %v1707, 4
      %v1714 = vperm.slane %v1707, 5
      %v1715 = vperm.slane %v1707, 6
      %v1716 = vperm.slane %v1707, 7
      %1733 = vst [vmem:[#allocation1] ss:$2 sm:$0xff] %v1635
      %s1734 = scalar_lea.vmem [#allocation1], 1
      %1735 = vst [vmem:[%s1734] ss:$2 sm:$0xff] %v1636
      %s1736 = scalar_lea.vmem [#allocation1], 16
      %1737 = vst [vmem:[%s1736] ss:$2 sm:$0xff] %v1637
      %s1738 = scalar_lea.vmem [#allocation1], 17
      %1739 = vst [vmem:[%s1738] ss:$2 sm:$0xff] %v1638
      %s1740 = scalar_lea.vmem [#allocation1], 32
      %1741 = vst [vmem:[%s1740] ss:$2 sm:$0xff] %v1639
      %s1742 = scalar_lea.vmem [#allocation1], 33
      %1743 = vst [vmem:[%s1742] ss:$2 sm:$0xff] %v1640
      %s1744 = scalar_lea.vmem [#allocation1], 48
      %1745 = vst [vmem:[%s1744] ss:$2 sm:$0xff] %v1641
      %s1746 = scalar_lea.vmem [#allocation1], 49
      %1747 = vst [vmem:[%s1746] ss:$2 sm:$0xff] %v1642
      %v1748 = vld.sshfl [vmem:[#allocation1] sm:$0xff pattern:$0x75316420]
      %v1749 = vld.sshfl [vmem:[#allocation1 + $0x10] sm:$0xff pattern:$0x75316420]
      %v1750 = vld.sshfl [vmem:[#allocation1 + $0x20] sm:$0xff pattern:$0x75316420]
      %v1751 = vld.sshfl [vmem:[#allocation1 + $0x30] sm:$0xff pattern:$0x75316420]
      %v1752 = vsel %vm944, %v1748, 0
      %v1754 = vsel %vm944, %v1749, 0
      %v1756 = vsel %vm944, %v1750, 0
      %v1758 = vsel %vm944, %v1751, 0
      %1760 = vmatpush.msra.mxu0 0.0
      %1761 = vmatpush.msra.mxu0 0.0
      %1762 = vmatpush.msra.mxu0 0.0
      %1763 = vmatpush.msra.mxu0 0.0
      %1764 = vmatpush.msra.mxu0 0.0
      %1765 = vmatpush.msra.mxu0 0.0
      %1766 = vmatpush.msra.mxu0 0.0
      %1767 = vmatpush.msra.mxu0 0.0
      %1768 = vmatpush.msra.mxu0 %v1699
      %1769 = vmatpush.msra.mxu0 %v1691
      %1770 = vmatpush.msra.mxu0 %v1683
      %1771 = vmatpush.msra.mxu0 %v1675
      %1772 = vmatpush.msra.mxu0 %v1667
      %1773 = vmatpush.msra.mxu0 %v1659
      %1774 = vmatpush.msra.mxu0 %v1651
      %1775 = vmatpush.msra.mxu0 %v1643
      %1776 = vmatmul.f32.gmra.mxu0 %v1752
      %v1777 = vpop.f32.mrf.mxu0
      %v1778 = vadd.f32 %v1709, %v1777
      %1779 = vmatmul.f32.gmra.mxu0 %v1754
      %v1780 = vpop.f32.mrf.mxu0
      %v1781 = vadd.f32 %v1709, %v1780
      %1782 = vmatmul.f32.gmra.mxu0 %v1756
      %v1783 = vpop.f32.mrf.mxu0
      %v1784 = vadd.f32 %v1709, %v1783
      %1785 = vmatmul.f32.gmra.mxu0 %v1758
      %v1786 = vpop.f32.mrf.mxu0
      %v1787 = vadd.f32 %v1709, %v1786
      %1788 = vdwg.mxu0
      %1789 = vmatpush.msra.mxu0 0.0
      %1790 = vmatpush.msra.mxu0 0.0
      %1791 = vmatpush.msra.mxu0 0.0
      %1792 = vmatpush.msra.mxu0 0.0
      %1793 = vmatpush.msra.mxu0 0.0
      %1794 = vmatpush.msra.mxu0 0.0
      %1795 = vmatpush.msra.mxu0 0.0
      %1796 = vmatpush.msra.mxu0 0.0
      %1797 = vmatpush.msra.mxu0 %v1700
      %1798 = vmatpush.msra.mxu0 %v1692
      %1799 = vmatpush.msra.mxu0 %v1684
      %1800 = vmatpush.msra.mxu0 %v1676
      %1801 = vmatpush.msra.mxu0 %v1668
      %1802 = vmatpush.msra.mxu0 %v1660
      %1803 = vmatpush.msra.mxu0 %v1652
      %1804 = vmatpush.msra.mxu0 %v1644
      %1805 = vmatmul.f32.gmra.mxu0 %v1752
      %v1806 = vpop.f32.mrf.mxu0
      %v1807 = vadd.f32 %v1710, %v1806
      %1808 = vmatmul.f32.gmra.mxu0 %v1754
      %v1809 = vpop.f32.mrf.mxu0
      %v1810 = vadd.f32 %v1710, %v1809
      %1811 = vmatmul.f32.gmra.mxu0 %v1756
      %v1812 = vpop.f32.mrf.mxu0
      %v1813 = vadd.f32 %v1710, %v1812
      %1814 = vmatmul.f32.gmra.mxu0 %v1758
      %v1815 = vpop.f32.mrf.mxu0
      %v1816 = vadd.f32 %v1710, %v1815
      %1817 = vdwg.mxu0
      %1818 = vmatpush.msra.mxu0 0.0
      %1819 = vmatpush.msra.mxu0 0.0
      %1820 = vmatpush.msra.mxu0 0.0
      %1821 = vmatpush.msra.mxu0 0.0
      %1822 = vmatpush.msra.mxu0 0.0
      %1823 = vmatpush.msra.mxu0 0.0
      %1824 = vmatpush.msra.mxu0 0.0
      %1825 = vmatpush.msra.mxu0 0.0
      %1826 = vmatpush.msra.mxu0 %v1701
      %1827 = vmatpush.msra.mxu0 %v1693
      %1828 = vmatpush.msra.mxu0 %v1685
      %1829 = vmatpush.msra.mxu0 %v1677
      %1830 = vmatpush.msra.mxu0 %v1669
      %1831 = vmatpush.msra.mxu0 %v1661
      %1832 = vmatpush.msra.mxu0 %v1653
      %1833 = vmatpush.msra.mxu0 %v1645
      %1834 = vmatmul.f32.gmra.mxu0 %v1752
      %v1835 = vpop.f32.mrf.mxu0
      %v1836 = vadd.f32 %v1711, %v1835
      %1837 = vmatmul.f32.gmra.mxu0 %v1754
      %v1838 = vpop.f32.mrf.mxu0
      %v1839 = vadd.f32 %v1711, %v1838
      %1840 = vmatmul.f32.gmra.mxu0 %v1756
      %v1841 = vpop.f32.mrf.mxu0
      %v1842 = vadd.f32 %v1711, %v1841
      %1843 = vmatmul.f32.gmra.mxu0 %v1758
      %v1844 = vpop.f32.mrf.mxu0
      %v1845 = vadd.f32 %v1711, %v1844
      %1846 = vdwg.mxu0
      %1847 = vmatpush.msra.mxu0 0.0
      %1848 = vmatpush.msra.mxu0 0.0
      %1849 = vmatpush.msra.mxu0 0.0
      %1850 = vmatpush.msra.mxu0 0.0
      %1851 = vmatpush.msra.mxu0 0.0
      %1852 = vmatpush.msra.mxu0 0.0
      %1853 = vmatpush.msra.mxu0 0.0
      %1854 = vmatpush.msra.mxu0 0.0
      %1855 = vmatpush.msra.mxu0 %v1702
      %1856 = vmatpush.msra.mxu0 %v1694
      %1857 = vmatpush.msra.mxu0 %v1686
      %1858 = vmatpush.msra.mxu0 %v1678
      %1859 = vmatpush.msra.mxu0 %v1670
      %1860 = vmatpush.msra.mxu0 %v1662
      %1861 = vmatpush.msra.mxu0 %v1654
      %1862 = vmatpush.msra.mxu0 %v1646
      %1863 = vmatmul.f32.gmra.mxu0 %v1752
      %v1864 = vpop.f32.mrf.mxu0
      %v1865 = vadd.f32 %v1712, %v1864
      %1866 = vmatmul.f32.gmra.mxu0 %v1754
      %v1867 = vpop.f32.mrf.mxu0
      %v1868 = vadd.f32 %v1712, %v1867
      %1869 = vmatmul.f32.gmra.mxu0 %v1756
      %v1870 = vpop.f32.mrf.mxu0
      %v1871 = vadd.f32 %v1712, %v1870
      %1872 = vmatmul.f32.gmra.mxu0 %v1758
      %v1873 = vpop.f32.mrf.mxu0
      %v1874 = vadd.f32 %v1712, %v1873
      %1875 = vdwg.mxu0
      %1876 = vmatpush.msra.mxu0 0.0
      %1877 = vmatpush.msra.mxu0 0.0
      %1878 = vmatpush.msra.mxu0 0.0
      %1879 = vmatpush.msra.mxu0 0.0
      %1880 = vmatpush.msra.mxu0 0.0
      %1881 = vmatpush.msra.mxu0 0.0
      %1882 = vmatpush.msra.mxu0 0.0
      %1883 = vmatpush.msra.mxu0 0.0
      %1884 = vmatpush.msra.mxu0 %v1703
      %1885 = vmatpush.msra.mxu0 %v1695
      %1886 = vmatpush.msra.mxu0 %v1687
      %1887 = vmatpush.msra.mxu0 %v1679
      %1888 = vmatpush.msra.mxu0 %v1671
      %1889 = vmatpush.msra.mxu0 %v1663
      %1890 = vmatpush.msra.mxu0 %v1655
      %1891 = vmatpush.msra.mxu0 %v1647
      %1892 = vmatmul.f32.gmra.mxu0 %v1752
      %v1893 = vpop.f32.mrf.mxu0
      %v1894 = vadd.f32 %v1713, %v1893
      %1895 = vmatmul.f32.gmra.mxu0 %v1754
      %v1896 = vpop.f32.mrf.mxu0
      %v1897 = vadd.f32 %v1713, %v1896
      %1898 = vmatmul.f32.gmra.mxu0 %v1756
      %v1899 = vpop.f32.mrf.mxu0
      %v1900 = vadd.f32 %v1713, %v1899
      %1901 = vmatmul.f32.gmra.mxu0 %v1758
      %v1902 = vpop.f32.mrf.mxu0
      %v1903 = vadd.f32 %v1713, %v1902
      %1904 = vdwg.mxu0
      %1905 = vmatpush.msra.mxu0 0.0
      %1906 = vmatpush.msra.mxu0 0.0
      %1907 = vmatpush.msra.mxu0 0.0
      %1908 = vmatpush.msra.mxu0 0.0
      %1909 = vmatpush.msra.mxu0 0.0
      %1910 = vmatpush.msra.mxu0 0.0
      %1911 = vmatpush.msra.mxu0 0.0
      %1912 = vmatpush.msra.mxu0 0.0
      %1913 = vmatpush.msra.mxu0 %v1704
      %1914 = vmatpush.msra.mxu0 %v1696
      %1915 = vmatpush.msra.mxu0 %v1688
      %1916 = vmatpush.msra.mxu0 %v1680
      %1917 = vmatpush.msra.mxu0 %v1672
      %1918 = vmatpush.msra.mxu0 %v1664
      %1919 = vmatpush.msra.mxu0 %v1656
      %1920 = vmatpush.msra.mxu0 %v1648
      %1921 = vmatmul.f32.gmra.mxu0 %v1752
      %v1922 = vpop.f32.mrf.mxu0
      %v1923 = vadd.f32 %v1714, %v1922
      %1924 = vmatmul.f32.gmra.mxu0 %v1754
      %v1925 = vpop.f32.mrf.mxu0
      %v1926 = vadd.f32 %v1714, %v1925
      %1927 = vmatmul.f32.gmra.mxu0 %v1756
      %v1928 = vpop.f32.mrf.mxu0
      %v1929 = vadd.f32 %v1714, %v1928
      %1930 = vmatmul.f32.gmra.mxu0 %v1758
      %v1931 = vpop.f32.mrf.mxu0
      %v1932 = vadd.f32 %v1714, %v1931
      %1933 = vdwg.mxu0
      %1934 = vmatpush.msra.mxu0 0.0
      %1935 = vmatpush.msra.mxu0 0.0
      %1936 = vmatpush.msra.mxu0 0.0
      %1937 = vmatpush.msra.mxu0 0.0
      %1938 = vmatpush.msra.mxu0 0.0
      %1939 = vmatpush.msra.mxu0 0.0
      %1940 = vmatpush.msra.mxu0 0.0
      %1941 = vmatpush.msra.mxu0 0.0
      %1942 = vmatpush.msra.mxu0 %v1705
      %1943 = vmatpush.msra.mxu0 %v1697
      %1944 = vmatpush.msra.mxu0 %v1689
      %1945 = vmatpush.msra.mxu0 %v1681
      %1946 = vmatpush.msra.mxu0 %v1673
      %1947 = vmatpush.msra.mxu0 %v1665
      %1948 = vmatpush.msra.mxu0 %v1657
      %1949 = vmatpush.msra.mxu0 %v1649
      %1950 = vmatmul.f32.gmra.mxu0 %v1752
      %v1951 = vpop.f32.mrf.mxu0
      %v1952 = vadd.f32 %v1715, %v1951
      %1953 = vmatmul.f32.gmra.mxu0 %v1754
      %v1954 = vpop.f32.mrf.mxu0
      %v1955 = vadd.f32 %v1715, %v1954
      %1956 = vmatmul.f32.gmra.mxu0 %v1756
      %v1957 = vpop.f32.mrf.mxu0
      %v1958 = vadd.f32 %v1715, %v1957
      %1959 = vmatmul.f32.gmra.mxu0 %v1758
      %v1960 = vpop.f32.mrf.mxu0
      %v1961 = vadd.f32 %v1715, %v1960
      %1962 = vdwg.mxu0
      %1963 = vmatpush.msra.mxu0 0.0
      %1964 = vmatpush.msra.mxu0 0.0
      %1965 = vmatpush.msra.mxu0 0.0
      %1966 = vmatpush.msra.mxu0 0.0
      %1967 = vmatpush.msra.mxu0 0.0
      %1968 = vmatpush.msra.mxu0 0.0
      %1969 = vmatpush.msra.mxu0 0.0
      %1970 = vmatpush.msra.mxu0 0.0
      %1971 = vmatpush.msra.mxu0 %v1706
      %1972 = vmatpush.msra.mxu0 %v1698
      %1973 = vmatpush.msra.mxu0 %v1690
      %1974 = vmatpush.msra.mxu0 %v1682
      %1975 = vmatpush.msra.mxu0 %v1674
      %1976 = vmatpush.msra.mxu0 %v1666
      %1977 = vmatpush.msra.mxu0 %v1658
      %1978 = vmatpush.msra.mxu0 %v1650
      %1979 = vmatmul.f32.gmra.mxu0 %v1752
      %v1980 = vpop.f32.mrf.mxu0
      %v1981 = vadd.f32 %v1716, %v1980
      %1982 = vmatmul.f32.gmra.mxu0 %v1754
      %v1983 = vpop.f32.mrf.mxu0
      %v1984 = vadd.f32 %v1716, %v1983
      %1985 = vmatmul.f32.gmra.mxu0 %v1756
      %v1986 = vpop.f32.mrf.mxu0
      %v1987 = vadd.f32 %v1716, %v1986
      %1988 = vmatmul.f32.gmra.mxu0 %v1758
      %v1989 = vpop.f32.mrf.mxu0
      %v1990 = vadd.f32 %v1716, %v1989
      %1991 = vdwg.mxu0
      %v1992 = vld [vmem:[%s25] sm:$0xff]
      %v1993 = vld [vmem:[%s25 + $0x8] sm:$0xff]
      %v1994 = vld [vmem:[%s25 + $0x10] sm:$0xff]
      %v1995 = vld [vmem:[%s25 + $0x18] sm:$0xff]
      %vm1996 = vcmask 64512
      %v1998 = vsel %vm1996, %v1992, 0
      %v2001 = vsel %vm1996, %v1993, 0
      %v2004 = vsel %vm1996, %v1994, 0
      %v2007 = vsel %vm1996, %v1995, 0
      %2009 = vmatpush.msra.mxu0 0.0
      %2010 = vmatpush.msra.mxu0 0.0
      %2011 = vmatpush.msra.mxu0 0.0
      %2012 = vmatpush.msra.mxu0 0.0
      %2013 = vmatpush.msra.mxu0 0.0
      %2014 = vmatpush.msra.mxu0 0.0
      %2015 = vmatpush.msra.mxu0 0.0
      %2016 = vmatpush.msra.mxu0 0.0
      %2017 = vmatpush.msra.mxu0 0.0
      %2018 = vmatpush.msra.mxu0 0.0
      %2019 = vmatpush.msra.mxu0 0.0
      %2020 = vmatpush.msra.mxu0 0.0
      %2021 = vmatpush.msra.mxu0 0.0
      %2022 = vmatpush.msra.mxu0 0.0
      %2023 = vmatpush.msra.mxu0 0.0
      %2024 = vmatpush.msra.mxu0 %v1541
      %2025 = vmatmul.f32.gmra.mxu0 %v1998
      %v2026 = vpop.f32.mrf.mxu0
      %v2027 = vadd.f32 0.0, %v2026
      %2028 = vmatmul.f32.gmra.mxu0 %v2001
      %v2029 = vpop.f32.mrf.mxu0
      %v2030 = vadd.f32 0.0, %v2029
      %2031 = vmatmul.f32.gmra.mxu0 %v2004
      %v2032 = vpop.f32.mrf.mxu0
      %v2033 = vadd.f32 0.0, %v2032
      %2034 = vmatmul.f32.gmra.mxu0 %v2007
      %v2035 = vpop.f32.mrf.mxu0
      %v2036 = vadd.f32 0.0, %v2035
      %2037 = vdwg.mxu0
      %v2038 = vld [vmem:[%s19] sm:$0xff]
      %v2039 = vld [vmem:[%s19 + $0x8] sm:$0xff]
      %v2040 = vld [vmem:[%s19 + $0x10] sm:$0xff]
      %v2041 = vld [vmem:[%s19 + $0x18] sm:$0xff]
      %v2042 = vld [vmem:[%s19 + $0x20] sm:$0xff]
      %v2043 = vld [vmem:[%s19 + $0x28] sm:$0xff]
      %v2044 = vld [vmem:[%s19 + $0x30] sm:$0xff]
      %v2045 = vld [vmem:[%s19 + $0x38] sm:$0xff]
      %v2046 = vld [vmem:[%s19 + $0x40] sm:$0xff]
      %v2047 = vld [vmem:[%s19 + $0x48] sm:$0xff]
      %v2048 = vld [vmem:[%s19 + $0x50] sm:$0xff]
      %v2049 = vld [vmem:[%s19 + $0x58] sm:$0xff]
      %v2050 = vld [vmem:[%s19 + $0x60] sm:$0xff]
      %v2051 = vld [vmem:[%s19 + $0x68] sm:$0xff]
      %v2052 = vld [vmem:[%s19 + $0x70] sm:$0xff]
      %v2053 = vld [vmem:[%s19 + $0x78] sm:$0xff]
      %v2054 = vld [vmem:[%s19 + $0x80] sm:$0xff]
      %v2055 = vld [vmem:[%s19 + $0x88] sm:$0xff]
      %v2056 = vld [vmem:[%s19 + $0x90] sm:$0xff]
      %v2057 = vld [vmem:[%s19 + $0x98] sm:$0xff]
      %v2058 = vld [vmem:[%s19 + $0xa0] sm:$0xff]
      %v2059 = vld [vmem:[%s19 + $0xa8] sm:$0xff]
      %v2060 = vld [vmem:[%s19 + $0xb0] sm:$0xff]
      %v2061 = vld [vmem:[%s19 + $0xb8] sm:$0xff]
      %v2062 = vld [vmem:[%s19 + $0xc0] sm:$0xff]
      %v2063 = vld [vmem:[%s19 + $0xc8] sm:$0xff]
      %v2064 = vld [vmem:[%s19 + $0xd0] sm:$0xff]
      %v2065 = vld [vmem:[%s19 + $0xd8] sm:$0xff]
      %v2066 = vld [vmem:[%s19 + $0xe0] sm:$0xff]
      %v2067 = vld [vmem:[%s19 + $0xe8] sm:$0xff]
      %v2068 = vld [vmem:[%s19 + $0xf0] sm:$0xff]
      %v2069 = vld [vmem:[%s19 + $0xf8] sm:$0xff]
      %v2071 = vsel %vm1425, %v2027, 0
      %v2074 = vsel %vm1425, %v2030, 0
      %v2077 = vsel %vm1425, %v2033, 0
      %v2080 = vsel %vm1425, %v2036, 0
      %2082 = vmatpush.msra.mxu0 0.0
      %2083 = vmatpush.msra.mxu0 0.0
      %2084 = vmatpush.msra.mxu0 0.0
      %2085 = vmatpush.msra.mxu0 0.0
      %2086 = vmatpush.msra.mxu0 0.0
      %2087 = vmatpush.msra.mxu0 0.0
      %2088 = vmatpush.msra.mxu0 0.0
      %2089 = vmatpush.msra.mxu0 0.0
      %2090 = vmatpush.msra.mxu0 0.0
      %2091 = vmatpush.msra.mxu0 0.0
      %2092 = vmatpush.msra.mxu0 0.0
      %2093 = vmatpush.msra.mxu0 0.0
      %2094 = vmatpush.msra.mxu0 %v2062
      %2095 = vmatpush.msra.mxu0 %v2054
      %2096 = vmatpush.msra.mxu0 %v2046
      %2097 = vmatpush.msra.mxu0 %v2038
      %2098 = vmatmul.f32.gmra.mxu0 %v2071
      %v2099 = vpop.f32.mrf.mxu0
      %v2100 = vadd.f32 0.0, %v2099
      %2101 = vmatmul.f32.gmra.mxu0 %v2074
      %v2102 = vpop.f32.mrf.mxu0
      %v2103 = vadd.f32 0.0, %v2102
      %2104 = vmatmul.f32.gmra.mxu0 %v2077
      %v2105 = vpop.f32.mrf.mxu0
      %v2106 = vadd.f32 0.0, %v2105
      %2107 = vmatmul.f32.gmra.mxu0 %v2080
      %v2108 = vpop.f32.mrf.mxu0
      %v2109 = vadd.f32 0.0, %v2108
      %2110 = vdwg.mxu0
      %2111 = vmatpush.msra.mxu0 0.0
      %2112 = vmatpush.msra.mxu0 0.0
      %2113 = vmatpush.msra.mxu0 0.0
      %2114 = vmatpush.msra.mxu0 0.0
      %2115 = vmatpush.msra.mxu0 0.0
      %2116 = vmatpush.msra.mxu0 0.0
      %2117 = vmatpush.msra.mxu0 0.0
      %2118 = vmatpush.msra.mxu0 0.0
      %2119 = vmatpush.msra.mxu0 0.0
      %2120 = vmatpush.msra.mxu0 0.0
      %2121 = vmatpush.msra.mxu0 0.0
      %2122 = vmatpush.msra.mxu0 0.0
      %2123 = vmatpush.msra.mxu0 %v2063
      %2124 = vmatpush.msra.mxu0 %v2055
      %2125 = vmatpush.msra.mxu0 %v2047
      %2126 = vmatpush.msra.mxu0 %v2039
      %2127 = vmatmul.f32.gmra.mxu0 %v2071
      %v2128 = vpop.f32.mrf.mxu0
      %v2129 = vadd.f32 0.0, %v2128
      %2130 = vmatmul.f32.gmra.mxu0 %v2074
      %v2131 = vpop.f32.mrf.mxu0
      %v2132 = vadd.f32 0.0, %v2131
      %2133 = vmatmul.f32.gmra.mxu0 %v2077
      %v2134 = vpop.f32.mrf.mxu0
      %v2135 = vadd.f32 0.0, %v2134
      %2136 = vmatmul.f32.gmra.mxu0 %v2080
      %v2137 = vpop.f32.mrf.mxu0
      %v2138 = vadd.f32 0.0, %v2137
      %2139 = vdwg.mxu0
      %2140 = vmatpush.msra.mxu0 0.0
      %2141 = vmatpush.msra.mxu0 0.0
      %2142 = vmatpush.msra.mxu0 0.0
      %2143 = vmatpush.msra.mxu0 0.0
      %2144 = vmatpush.msra.mxu0 0.0
      %2145 = vmatpush.msra.mxu0 0.0
      %2146 = vmatpush.msra.mxu0 0.0
      %2147 = vmatpush.msra.mxu0 0.0
      %2148 = vmatpush.msra.mxu0 0.0
      %2149 = vmatpush.msra.mxu0 0.0
      %2150 = vmatpush.msra.mxu0 0.0
      %2151 = vmatpush.msra.mxu0 0.0
      %2152 = vmatpush.msra.mxu0 %v2064
      %2153 = vmatpush.msra.mxu0 %v2056
      %2154 = vmatpush.msra.mxu0 %v2048
      %2155 = vmatpush.msra.mxu0 %v2040
      %2156 = vmatmul.f32.gmra.mxu0 %v2071
      %v2157 = vpop.f32.mrf.mxu0
      %v2158 = vadd.f32 0.0, %v2157
      %2159 = vmatmul.f32.gmra.mxu0 %v2074
      %v2160 = vpop.f32.mrf.mxu0
      %v2161 = vadd.f32 0.0, %v2160
      %2162 = vmatmul.f32.gmra.mxu0 %v2077
      %v2163 = vpop.f32.mrf.mxu0
      %v2164 = vadd.f32 0.0, %v2163
      %2165 = vmatmul.f32.gmra.mxu0 %v2080
      %v2166 = vpop.f32.mrf.mxu0
      %v2167 = vadd.f32 0.0, %v2166
      %2168 = vdwg.mxu0
      %2169 = vmatpush.msra.mxu0 0.0
      %2170 = vmatpush.msra.mxu0 0.0
      %2171 = vmatpush.msra.mxu0 0.0
      %2172 = vmatpush.msra.mxu0 0.0
      %2173 = vmatpush.msra.mxu0 0.0
      %2174 = vmatpush.msra.mxu0 0.0
      %2175 = vmatpush.msra.mxu0 0.0
      %2176 = vmatpush.msra.mxu0 0.0
      %2177 = vmatpush.msra.mxu0 0.0
      %2178 = vmatpush.msra.mxu0 0.0
      %2179 = vmatpush.msra.mxu0 0.0
      %2180 = vmatpush.msra.mxu0 0.0
      %2181 = vmatpush.msra.mxu0 %v2065
      %2182 = vmatpush.msra.mxu0 %v2057
      %2183 = vmatpush.msra.mxu0 %v2049
      %2184 = vmatpush.msra.mxu0 %v2041
      %2185 = vmatmul.f32.gmra.mxu0 %v2071
      %v2186 = vpop.f32.mrf.mxu0
      %v2187 = vadd.f32 0.0, %v2186
      %2188 = vmatmul.f32.gmra.mxu0 %v2074
      %v2189 = vpop.f32.mrf.mxu0
      %v2190 = vadd.f32 0.0, %v2189
      %2191 = vmatmul.f32.gmra.mxu0 %v2077
      %v2192 = vpop.f32.mrf.mxu0
      %v2193 = vadd.f32 0.0, %v2192
      %2194 = vmatmul.f32.gmra.mxu0 %v2080
      %v2195 = vpop.f32.mrf.mxu0
      %v2196 = vadd.f32 0.0, %v2195
      %2197 = vdwg.mxu0
      %2198 = vmatpush.msra.mxu0 0.0
      %2199 = vmatpush.msra.mxu0 0.0
      %2200 = vmatpush.msra.mxu0 0.0
      %2201 = vmatpush.msra.mxu0 0.0
      %2202 = vmatpush.msra.mxu0 0.0
      %2203 = vmatpush.msra.mxu0 0.0
      %2204 = vmatpush.msra.mxu0 0.0
      %2205 = vmatpush.msra.mxu0 0.0
      %2206 = vmatpush.msra.mxu0 0.0
      %2207 = vmatpush.msra.mxu0 0.0
      %2208 = vmatpush.msra.mxu0 0.0
      %2209 = vmatpush.msra.mxu0 0.0
      %2210 = vmatpush.msra.mxu0 %v2066
      %2211 = vmatpush.msra.mxu0 %v2058
      %2212 = vmatpush.msra.mxu0 %v2050
      %2213 = vmatpush.msra.mxu0 %v2042
      %2214 = vmatmul.f32.gmra.mxu0 %v2071
      %v2215 = vpop.f32.mrf.mxu0
      %v2216 = vadd.f32 0.0, %v2215
      %2217 = vmatmul.f32.gmra.mxu0 %v2074
      %v2218 = vpop.f32.mrf.mxu0
      %v2219 = vadd.f32 0.0, %v2218
      %2220 = vmatmul.f32.gmra.mxu0 %v2077
      %v2221 = vpop.f32.mrf.mxu0
      %v2222 = vadd.f32 0.0, %v2221
      %2223 = vmatmul.f32.gmra.mxu0 %v2080
      %v2224 = vpop.f32.mrf.mxu0
      %v2225 = vadd.f32 0.0, %v2224
      %2226 = vdwg.mxu0
      %2227 = vmatpush.msra.mxu0 0.0
      %2228 = vmatpush.msra.mxu0 0.0
      %2229 = vmatpush.msra.mxu0 0.0
      %2230 = vmatpush.msra.mxu0 0.0
      %2231 = vmatpush.msra.mxu0 0.0
      %2232 = vmatpush.msra.mxu0 0.0
      %2233 = vmatpush.msra.mxu0 0.0
      %2234 = vmatpush.msra.mxu0 0.0
      %2235 = vmatpush.msra.mxu0 0.0
      %2236 = vmatpush.msra.mxu0 0.0
      %2237 = vmatpush.msra.mxu0 0.0
      %2238 = vmatpush.msra.mxu0 0.0
      %2239 = vmatpush.msra.mxu0 %v2067
      %2240 = vmatpush.msra.mxu0 %v2059
      %2241 = vmatpush.msra.mxu0 %v2051
      %2242 = vmatpush.msra.mxu0 %v2043
      %2243 = vmatmul.f32.gmra.mxu0 %v2071
      %v2244 = vpop.f32.mrf.mxu0
      %v2245 = vadd.f32 0.0, %v2244
      %2246 = vmatmul.f32.gmra.mxu0 %v2074
      %v2247 = vpop.f32.mrf.mxu0
      %v2248 = vadd.f32 0.0, %v2247
      %2249 = vmatmul.f32.gmra.mxu0 %v2077
      %v2250 = vpop.f32.mrf.mxu0
      %v2251 = vadd.f32 0.0, %v2250
      %2252 = vmatmul.f32.gmra.mxu0 %v2080
      %v2253 = vpop.f32.mrf.mxu0
      %v2254 = vadd.f32 0.0, %v2253
      %2255 = vdwg.mxu0
      %2256 = vmatpush.msra.mxu0 0.0
      %2257 = vmatpush.msra.mxu0 0.0
      %2258 = vmatpush.msra.mxu0 0.0
      %2259 = vmatpush.msra.mxu0 0.0
      %2260 = vmatpush.msra.mxu0 0.0
      %2261 = vmatpush.msra.mxu0 0.0
      %2262 = vmatpush.msra.mxu0 0.0
      %2263 = vmatpush.msra.mxu0 0.0
      %2264 = vmatpush.msra.mxu0 0.0
      %2265 = vmatpush.msra.mxu0 0.0
      %2266 = vmatpush.msra.mxu0 0.0
      %2267 = vmatpush.msra.mxu0 0.0
      %2268 = vmatpush.msra.mxu0 %v2068
      %2269 = vmatpush.msra.mxu0 %v2060
      %2270 = vmatpush.msra.mxu0 %v2052
      %2271 = vmatpush.msra.mxu0 %v2044
      %2272 = vmatmul.f32.gmra.mxu0 %v2071
      %v2273 = vpop.f32.mrf.mxu0
      %v2274 = vadd.f32 0.0, %v2273
      %2275 = vmatmul.f32.gmra.mxu0 %v2074
      %v2276 = vpop.f32.mrf.mxu0
      %v2277 = vadd.f32 0.0, %v2276
      %2278 = vmatmul.f32.gmra.mxu0 %v2077
      %v2279 = vpop.f32.mrf.mxu0
      %v2280 = vadd.f32 0.0, %v2279
      %2281 = vmatmul.f32.gmra.mxu0 %v2080
      %v2282 = vpop.f32.mrf.mxu0
      %v2283 = vadd.f32 0.0, %v2282
      %2284 = vdwg.mxu0
      %2285 = vmatpush.msra.mxu0 0.0
      %2286 = vmatpush.msra.mxu0 0.0
      %2287 = vmatpush.msra.mxu0 0.0
      %2288 = vmatpush.msra.mxu0 0.0
      %2289 = vmatpush.msra.mxu0 0.0
      %2290 = vmatpush.msra.mxu0 0.0
      %2291 = vmatpush.msra.mxu0 0.0
      %2292 = vmatpush.msra.mxu0 0.0
      %2293 = vmatpush.msra.mxu0 0.0
      %2294 = vmatpush.msra.mxu0 0.0
      %2295 = vmatpush.msra.mxu0 0.0
      %2296 = vmatpush.msra.mxu0 0.0
      %2297 = vmatpush.msra.mxu0 %v2069
      %2298 = vmatpush.msra.mxu0 %v2061
      %2299 = vmatpush.msra.mxu0 %v2053
      %2300 = vmatpush.msra.mxu0 %v2045
      %2301 = vmatmul.f32.gmra.mxu0 %v2071
      %v2302 = vpop.f32.mrf.mxu0
      %v2303 = vadd.f32 0.0, %v2302
      %2304 = vmatmul.f32.gmra.mxu0 %v2074
      %v2305 = vpop.f32.mrf.mxu0
      %v2306 = vadd.f32 0.0, %v2305
      %2307 = vmatmul.f32.gmra.mxu0 %v2077
      %v2308 = vpop.f32.mrf.mxu0
      %v2309 = vadd.f32 0.0, %v2308
      %2310 = vmatmul.f32.gmra.mxu0 %v2080
      %v2311 = vpop.f32.mrf.mxu0
      %v2312 = vadd.f32 0.0, %v2311
      %2313 = vdwg.mxu0
      %v2314 = vmul.f32 %v2100, %v1778
      %v2315 = vmul.f32 %v2129, %v1807
      %v2316 = vmul.f32 %v2158, %v1836
      %v2317 = vmul.f32 %v2187, %v1865
      %v2318 = vmul.f32 %v2216, %v1894
      %v2319 = vmul.f32 %v2245, %v1923
      %v2320 = vmul.f32 %v2274, %v1952
      %v2321 = vmul.f32 %v2303, %v1981
      %v2322 = vmul.f32 %v2103, %v1781
      %v2323 = vmul.f32 %v2132, %v1810
      %v2324 = vmul.f32 %v2161, %v1839
      %v2325 = vmul.f32 %v2190, %v1868
      %v2326 = vmul.f32 %v2219, %v1897
      %v2327 = vmul.f32 %v2248, %v1926
      %v2328 = vmul.f32 %v2277, %v1955
      %v2329 = vmul.f32 %v2306, %v1984
      %v2330 = vmul.f32 %v2106, %v1784
      %v2331 = vmul.f32 %v2135, %v1813
      %v2332 = vmul.f32 %v2164, %v1842
      %v2333 = vmul.f32 %v2193, %v1871
      %v2334 = vmul.f32 %v2222, %v1900
      %v2335 = vmul.f32 %v2251, %v1929
      %v2336 = vmul.f32 %v2280, %v1958
      %v2337 = vmul.f32 %v2309, %v1987
      %v2338 = vmul.f32 %v2109, %v1787
      %v2339 = vmul.f32 %v2138, %v1816
      %v2340 = vmul.f32 %v2167, %v1845
      %v2341 = vmul.f32 %v2196, %v1874
      %v2342 = vmul.f32 %v2225, %v1903
      %v2343 = vmul.f32 %v2254, %v1932
      %v2344 = vmul.f32 %v2283, %v1961
      %v2345 = vmul.f32 %v2312, %v1990
      %v2346 = vld [vmem:[%s20] sm:$0xff]
      %v2347 = vld [vmem:[%s20 + $0x8] sm:$0xff]
      %v2348 = vld [vmem:[%s20 + $0x10] sm:$0xff]
      %v2349 = vld [vmem:[%s20 + $0x18] sm:$0xff]
      %v2350 = vld [vmem:[%s20 + $0x20] sm:$0xff]
      %v2351 = vld [vmem:[%s20 + $0x28] sm:$0xff]
      %v2352 = vld [vmem:[%s20 + $0x30] sm:$0xff]
      %v2353 = vld [vmem:[%s20 + $0x38] sm:$0xff]
      %v2354 = vld [vmem:[%s20 + $0x40] sm:$0xff]
      %v2355 = vld [vmem:[%s20 + $0x48] sm:$0xff]
      %v2356 = vld [vmem:[%s20 + $0x50] sm:$0xff]
      %v2357 = vld [vmem:[%s20 + $0x58] sm:$0xff]
      %v2358 = vld [vmem:[%s20 + $0x60] sm:$0xff]
      %v2359 = vld [vmem:[%s20 + $0x68] sm:$0xff]
      %v2360 = vld [vmem:[%s20 + $0x70] sm:$0xff]
      %v2361 = vld [vmem:[%s20 + $0x78] sm:$0xff]
      %v2362 = vld [vmem:[%s20 + $0x80] sm:$0xff]
      %v2363 = vld [vmem:[%s20 + $0x88] sm:$0xff]
      %v2364 = vld [vmem:[%s20 + $0x90] sm:$0xff]
      %v2365 = vld [vmem:[%s20 + $0x98] sm:$0xff]
      %v2366 = vld [vmem:[%s20 + $0xa0] sm:$0xff]
      %v2367 = vld [vmem:[%s20 + $0xa8] sm:$0xff]
      %v2368 = vld [vmem:[%s20 + $0xb0] sm:$0xff]
      %v2369 = vld [vmem:[%s20 + $0xb8] sm:$0xff]
      %v2370 = vld [vmem:[%s20 + $0xc0] sm:$0xff]
      %v2371 = vld [vmem:[%s20 + $0xc8] sm:$0xff]
      %v2372 = vld [vmem:[%s20 + $0xd0] sm:$0xff]
      %v2373 = vld [vmem:[%s20 + $0xd8] sm:$0xff]
      %v2374 = vld [vmem:[%s20 + $0xe0] sm:$0xff]
      %v2375 = vld [vmem:[%s20 + $0xe8] sm:$0xff]
      %v2376 = vld [vmem:[%s20 + $0xf0] sm:$0xff]
      %v2377 = vld [vmem:[%s20 + $0xf8] sm:$0xff]
      %v2378 = vld [vmem:[%s20 + $0x100] sm:$0xff]
      %v2379 = vld [vmem:[%s20 + $0x108] sm:$0xff]
      %v2380 = vld [vmem:[%s20 + $0x110] sm:$0xff]
      %v2381 = vld [vmem:[%s20 + $0x118] sm:$0xff]
      %v2382 = vld [vmem:[%s20 + $0x120] sm:$0xff]
      %v2383 = vld [vmem:[%s20 + $0x128] sm:$0xff]
      %v2384 = vld [vmem:[%s20 + $0x130] sm:$0xff]
      %v2385 = vld [vmem:[%s20 + $0x138] sm:$0xff]
      %v2386 = vld [vmem:[%s20 + $0x140] sm:$0xff]
      %v2387 = vld [vmem:[%s20 + $0x148] sm:$0xff]
      %v2388 = vld [vmem:[%s20 + $0x150] sm:$0xff]
      %v2389 = vld [vmem:[%s20 + $0x158] sm:$0xff]
      %v2390 = vld [vmem:[%s20 + $0x160] sm:$0xff]
      %v2391 = vld [vmem:[%s20 + $0x168] sm:$0xff]
      %v2392 = vld [vmem:[%s20 + $0x170] sm:$0xff]
      %v2393 = vld [vmem:[%s20 + $0x178] sm:$0xff]
      %v2394 = vld [vmem:[%s20 + $0x180] sm:$0xff]
      %v2395 = vld [vmem:[%s20 + $0x188] sm:$0xff]
      %v2396 = vld [vmem:[%s20 + $0x190] sm:$0xff]
      %v2397 = vld [vmem:[%s20 + $0x198] sm:$0xff]
      %v2398 = vld [vmem:[%s20 + $0x1a0] sm:$0xff]
      %v2399 = vld [vmem:[%s20 + $0x1a8] sm:$0xff]
      %v2400 = vld [vmem:[%s20 + $0x1b0] sm:$0xff]
      %v2401 = vld [vmem:[%s20 + $0x1b8] sm:$0xff]
      %v2402 = vld [vmem:[%s20 + $0x1c0] sm:$0xff]
      %v2403 = vld [vmem:[%s20 + $0x1c8] sm:$0xff]
      %v2404 = vld [vmem:[%s20 + $0x1d0] sm:$0xff]
      %v2405 = vld [vmem:[%s20 + $0x1d8] sm:$0xff]
      %v2406 = vld [vmem:[%s20 + $0x1e0] sm:$0xff]
      %v2407 = vld [vmem:[%s20 + $0x1e8] sm:$0xff]
      %v2408 = vld [vmem:[%s20 + $0x1f0] sm:$0xff]
      %v2409 = vld [vmem:[%s20 + $0x1f8] sm:$0xff]
      %v2410 = vld [vmem:[%s20 + $0x200] sm:$0xff]
      %v2411 = vld [vmem:[%s20 + $0x208] sm:$0xff]
      %v2412 = vld [vmem:[%s20 + $0x210] sm:$0xff]
      %v2413 = vld [vmem:[%s20 + $0x218] sm:$0xff]
      %v2414 = vld [vmem:[%s20 + $0x220] sm:$0xff]
      %v2415 = vld [vmem:[%s20 + $0x228] sm:$0xff]
      %v2416 = vld [vmem:[%s20 + $0x230] sm:$0xff]
      %v2417 = vld [vmem:[%s20 + $0x238] sm:$0xff]
      %v2418 = vld [vmem:[%s20 + $0x240] sm:$0xff]
      %v2419 = vld [vmem:[%s20 + $0x248] sm:$0xff]
      %v2420 = vld [vmem:[%s20 + $0x250] sm:$0xff]
      %v2421 = vld [vmem:[%s20 + $0x258] sm:$0xff]
      %v2422 = vld [vmem:[%s20 + $0x260] sm:$0xff]
      %v2423 = vld [vmem:[%s20 + $0x268] sm:$0xff]
      %v2424 = vld [vmem:[%s20 + $0x270] sm:$0xff]
      %v2425 = vld [vmem:[%s20 + $0x278] sm:$0xff]
      %v2426 = vld [vmem:[%s20 + $0x280] sm:$0xff]
      %v2427 = vld [vmem:[%s20 + $0x288] sm:$0xff]
      %v2428 = vld [vmem:[%s20 + $0x290] sm:$0xff]
      %v2429 = vld [vmem:[%s20 + $0x298] sm:$0xff]
      %v2430 = vld [vmem:[%s20 + $0x2a0] sm:$0xff]
      %v2431 = vld [vmem:[%s20 + $0x2a8] sm:$0xff]
      %v2432 = vld [vmem:[%s20 + $0x2b0] sm:$0xff]
      %v2433 = vld [vmem:[%s20 + $0x2b8] sm:$0xff]
      %v2434 = vld [vmem:[%s20 + $0x2c0] sm:$0xff]
      %v2435 = vld [vmem:[%s20 + $0x2c8] sm:$0xff]
      %v2436 = vld [vmem:[%s20 + $0x2d0] sm:$0xff]
      %v2437 = vld [vmem:[%s20 + $0x2d8] sm:$0xff]
      %v2438 = vld [vmem:[%s20 + $0x2e0] sm:$0xff]
      %v2439 = vld [vmem:[%s20 + $0x2e8] sm:$0xff]
      %v2440 = vld [vmem:[%s20 + $0x2f0] sm:$0xff]
      %v2441 = vld [vmem:[%s20 + $0x2f8] sm:$0xff]
      %v2442 = vld [vmem:[%s20 + $0x300] sm:$0xff]
      %v2443 = vld [vmem:[%s20 + $0x308] sm:$0xff]
      %v2444 = vld [vmem:[%s20 + $0x310] sm:$0xff]
      %v2445 = vld [vmem:[%s20 + $0x318] sm:$0xff]
      %v2446 = vld [vmem:[%s20 + $0x320] sm:$0xff]
      %v2447 = vld [vmem:[%s20 + $0x328] sm:$0xff]
      %v2448 = vld [vmem:[%s20 + $0x330] sm:$0xff]
      %v2449 = vld [vmem:[%s20 + $0x338] sm:$0xff]
      %v2450 = vld [vmem:[%s20 + $0x340] sm:$0xff]
      %v2451 = vld [vmem:[%s20 + $0x348] sm:$0xff]
      %v2452 = vld [vmem:[%s20 + $0x350] sm:$0xff]
      %v2453 = vld [vmem:[%s20 + $0x358] sm:$0xff]
      %v2454 = vld [vmem:[%s20 + $0x360] sm:$0xff]
      %v2455 = vld [vmem:[%s20 + $0x368] sm:$0xff]
      %v2456 = vld [vmem:[%s20 + $0x370] sm:$0xff]
      %v2457 = vld [vmem:[%s20 + $0x378] sm:$0xff]
      %v2458 = vld [vmem:[%s20 + $0x380] sm:$0xff]
      %v2459 = vld [vmem:[%s20 + $0x388] sm:$0xff]
      %v2460 = vld [vmem:[%s20 + $0x390] sm:$0xff]
      %v2461 = vld [vmem:[%s20 + $0x398] sm:$0xff]
      %v2462 = vld [vmem:[%s20 + $0x3a0] sm:$0xff]
      %v2463 = vld [vmem:[%s20 + $0x3a8] sm:$0xff]
      %v2464 = vld [vmem:[%s20 + $0x3b0] sm:$0xff]
      %v2465 = vld [vmem:[%s20 + $0x3b8] sm:$0xff]
      %v2466 = vld [vmem:[%s20 + $0x3c0] sm:$0xff]
      %v2467 = vld [vmem:[%s20 + $0x3c8] sm:$0xff]
      %v2468 = vld [vmem:[%s20 + $0x3d0] sm:$0xff]
      %v2469 = vld [vmem:[%s20 + $0x3d8] sm:$0xff]
      %v2470 = vld [vmem:[%s20 + $0x3e0] sm:$0xff]
      %v2471 = vld [vmem:[%s20 + $0x3e8] sm:$0xff]
      %v2472 = vld [vmem:[%s20 + $0x3f0] sm:$0xff]
      %v2473 = vld [vmem:[%s20 + $0x3f8] sm:$0xff]
      %2474 = vmatpush.msra.mxu0 %v2361
      %2475 = vmatpush.msra.mxu0 %v2360
      %2476 = vmatpush.msra.mxu0 %v2359
      %2477 = vmatpush.msra.mxu0 %v2358
      %2478 = vmatpush.msra.mxu0 %v2357
      %2479 = vmatpush.msra.mxu0 %v2356
      %2480 = vmatpush.msra.mxu0 %v2355
      %2481 = vmatpush.msra.mxu0 %v2354
      %2482 = vmatpush.msra.mxu0 %v2353
      %2483 = vmatpush.msra.mxu0 %v2352
      %2484 = vmatpush.msra.mxu0 %v2351
      %2485 = vmatpush.msra.mxu0 %v2350
      %2486 = vmatpush.msra.mxu0 %v2349
      %2487 = vmatpush.msra.mxu0 %v2348
      %2488 = vmatpush.msra.mxu0 %v2347
      %2489 = vmatpush.msra.mxu0 %v2346
      %2490 = vmatmul.f32.gmra.mxu0 %v2314
      %v2491 = vpop.f32.mrf.mxu0
      %v2492 = vadd.f32 0.0, %v2491
      %2493 = vmatmul.f32.gmra.mxu0 %v2322
      %v2494 = vpop.f32.mrf.mxu0
      %v2495 = vadd.f32 0.0, %v2494
      %2496 = vmatmul.f32.gmra.mxu0 %v2330
      %v2497 = vpop.f32.mrf.mxu0
      %v2498 = vadd.f32 0.0, %v2497
      %2499 = vmatmul.f32.gmra.mxu0 %v2338
      %v2500 = vpop.f32.mrf.mxu0
      %v2501 = vadd.f32 0.0, %v2500
      %2502 = vdwg.mxu0
      %2503 = vmatpush.msra.mxu0 %v2377
      %2504 = vmatpush.msra.mxu0 %v2376
      %2505 = vmatpush.msra.mxu0 %v2375
      %2506 = vmatpush.msra.mxu0 %v2374
      %2507 = vmatpush.msra.mxu0 %v2373
      %2508 = vmatpush.msra.mxu0 %v2372
      %2509 = vmatpush.msra.mxu0 %v2371
      %2510 = vmatpush.msra.mxu0 %v2370
      %2511 = vmatpush.msra.mxu0 %v2369
      %2512 = vmatpush.msra.mxu0 %v2368
      %2513 = vmatpush.msra.mxu0 %v2367
      %2514 = vmatpush.msra.mxu0 %v2366
      %2515 = vmatpush.msra.mxu0 %v2365
      %2516 = vmatpush.msra.mxu0 %v2364
      %2517 = vmatpush.msra.mxu0 %v2363
      %2518 = vmatpush.msra.mxu0 %v2362
      %2519 = vmatmul.f32.gmra.mxu0 %v2315
      %v2520 = vpop.f32.mrf.mxu0
      %v2521 = vadd.f32 %v2492, %v2520
      %2522 = vmatmul.f32.gmra.mxu0 %v2323
      %v2523 = vpop.f32.mrf.mxu0
      %v2524 = vadd.f32 %v2495, %v2523
      %2525 = vmatmul.f32.gmra.mxu0 %v2331
      %v2526 = vpop.f32.mrf.mxu0
      %v2527 = vadd.f32 %v2498, %v2526
      %2528 = vmatmul.f32.gmra.mxu0 %v2339
      %v2529 = vpop.f32.mrf.mxu0
      %v2530 = vadd.f32 %v2501, %v2529
      %2531 = vdwg.mxu0
      %2532 = vmatpush.msra.mxu0 %v2393
      %2533 = vmatpush.msra.mxu0 %v2392
      %2534 = vmatpush.msra.mxu0 %v2391
      %2535 = vmatpush.msra.mxu0 %v2390
      %2536 = vmatpush.msra.mxu0 %v2389
      %2537 = vmatpush.msra.mxu0 %v2388
      %2538 = vmatpush.msra.mxu0 %v2387
      %2539 = vmatpush.msra.mxu0 %v2386
      %2540 = vmatpush.msra.mxu0 %v2385
      %2541 = vmatpush.msra.mxu0 %v2384
      %2542 = vmatpush.msra.mxu0 %v2383
      %2543 = vmatpush.msra.mxu0 %v2382
      %2544 = vmatpush.msra.mxu0 %v2381
      %2545 = vmatpush.msra.mxu0 %v2380
      %2546 = vmatpush.msra.mxu0 %v2379
      %2547 = vmatpush.msra.mxu0 %v2378
      %2548 = vmatmul.f32.gmra.mxu0 %v2316
      %v2549 = vpop.f32.mrf.mxu0
      %v2550 = vadd.f32 %v2521, %v2549
      %2551 = vmatmul.f32.gmra.mxu0 %v2324
      %v2552 = vpop.f32.mrf.mxu0
      %v2553 = vadd.f32 %v2524, %v2552
      %2554 = vmatmul.f32.gmra.mxu0 %v2332
      %v2555 = vpop.f32.mrf.mxu0
      %v2556 = vadd.f32 %v2527, %v2555
      %2557 = vmatmul.f32.gmra.mxu0 %v2340
      %v2558 = vpop.f32.mrf.mxu0
      %v2559 = vadd.f32 %v2530, %v2558
      %2560 = vdwg.mxu0
      %2561 = vmatpush.msra.mxu0 %v2409
      %2562 = vmatpush.msra.mxu0 %v2408
      %2563 = vmatpush.msra.mxu0 %v2407
      %2564 = vmatpush.msra.mxu0 %v2406
      %2565 = vmatpush.msra.mxu0 %v2405
      %2566 = vmatpush.msra.mxu0 %v2404
      %2567 = vmatpush.msra.mxu0 %v2403
      %2568 = vmatpush.msra.mxu0 %v2402
      %2569 = vmatpush.msra.mxu0 %v2401
      %2570 = vmatpush.msra.mxu0 %v2400
      %2571 = vmatpush.msra.mxu0 %v2399
      %2572 = vmatpush.msra.mxu0 %v2398
      %2573 = vmatpush.msra.mxu0 %v2397
      %2574 = vmatpush.msra.mxu0 %v2396
      %2575 = vmatpush.msra.mxu0 %v2395
      %2576 = vmatpush.msra.mxu0 %v2394
      %2577 = vmatmul.f32.gmra.mxu0 %v2317
      %v2578 = vpop.f32.mrf.mxu0
      %v2579 = vadd.f32 %v2550, %v2578
      %2580 = vmatmul.f32.gmra.mxu0 %v2325
      %v2581 = vpop.f32.mrf.mxu0
      %v2582 = vadd.f32 %v2553, %v2581
      %2583 = vmatmul.f32.gmra.mxu0 %v2333
      %v2584 = vpop.f32.mrf.mxu0
      %v2585 = vadd.f32 %v2556, %v2584
      %2586 = vmatmul.f32.gmra.mxu0 %v2341
      %v2587 = vpop.f32.mrf.mxu0
      %v2588 = vadd.f32 %v2559, %v2587
      %2589 = vdwg.mxu0
      %2590 = vmatpush.msra.mxu0 %v2425
      %2591 = vmatpush.msra.mxu0 %v2424
      %2592 = vmatpush.msra.mxu0 %v2423
      %2593 = vmatpush.msra.mxu0 %v2422
      %2594 = vmatpush.msra.mxu0 %v2421
      %2595 = vmatpush.msra.mxu0 %v2420
      %2596 = vmatpush.msra.mxu0 %v2419
      %2597 = vmatpush.msra.mxu0 %v2418
      %2598 = vmatpush.msra.mxu0 %v2417
      %2599 = vmatpush.msra.mxu0 %v2416
      %2600 = vmatpush.msra.mxu0 %v2415
      %2601 = vmatpush.msra.mxu0 %v2414
      %2602 = vmatpush.msra.mxu0 %v2413
      %2603 = vmatpush.msra.mxu0 %v2412
      %2604 = vmatpush.msra.mxu0 %v2411
      %2605 = vmatpush.msra.mxu0 %v2410
      %2606 = vmatmul.f32.gmra.mxu0 %v2318
      %v2607 = vpop.f32.mrf.mxu0
      %v2608 = vadd.f32 %v2579, %v2607
      %2609 = vmatmul.f32.gmra.mxu0 %v2326
      %v2610 = vpop.f32.mrf.mxu0
      %v2611 = vadd.f32 %v2582, %v2610
      %2612 = vmatmul.f32.gmra.mxu0 %v2334
      %v2613 = vpop.f32.mrf.mxu0
      %v2614 = vadd.f32 %v2585, %v2613
      %2615 = vmatmul.f32.gmra.mxu0 %v2342
      %v2616 = vpop.f32.mrf.mxu0
      %v2617 = vadd.f32 %v2588, %v2616
      %2618 = vdwg.mxu0
      %2619 = vmatpush.msra.mxu0 %v2441
      %2620 = vmatpush.msra.mxu0 %v2440
      %2621 = vmatpush.msra.mxu0 %v2439
      %2622 = vmatpush.msra.mxu0 %v2438
      %2623 = vmatpush.msra.mxu0 %v2437
      %2624 = vmatpush.msra.mxu0 %v2436
      %2625 = vmatpush.msra.mxu0 %v2435
      %2626 = vmatpush.msra.mxu0 %v2434
      %2627 = vmatpush.msra.mxu0 %v2433
      %2628 = vmatpush.msra.mxu0 %v2432
      %2629 = vmatpush.msra.mxu0 %v2431
      %2630 = vmatpush.msra.mxu0 %v2430
      %2631 = vmatpush.msra.mxu0 %v2429
      %2632 = vmatpush.msra.mxu0 %v2428
      %2633 = vmatpush.msra.mxu0 %v2427
      %2634 = vmatpush.msra.mxu0 %v2426
      %2635 = vmatmul.f32.gmra.mxu0 %v2319
      %v2636 = vpop.f32.mrf.mxu0
      %v2637 = vadd.f32 %v2608, %v2636
      %2638 = vmatmul.f32.gmra.mxu0 %v2327
      %v2639 = vpop.f32.mrf.mxu0
      %v2640 = vadd.f32 %v2611, %v2639
      %2641 = vmatmul.f32.gmra.mxu0 %v2335
      %v2642 = vpop.f32.mrf.mxu0
      %v2643 = vadd.f32 %v2614, %v2642
      %2644 = vmatmul.f32.gmra.mxu0 %v2343
      %v2645 = vpop.f32.mrf.mxu0
      %v2646 = vadd.f32 %v2617, %v2645
      %2647 = vdwg.mxu0
      %2648 = vmatpush.msra.mxu0 %v2457
      %2649 = vmatpush.msra.mxu0 %v2456
      %2650 = vmatpush.msra.mxu0 %v2455
      %2651 = vmatpush.msra.mxu0 %v2454
      %2652 = vmatpush.msra.mxu0 %v2453
      %2653 = vmatpush.msra.mxu0 %v2452
      %2654 = vmatpush.msra.mxu0 %v2451
      %2655 = vmatpush.msra.mxu0 %v2450
      %2656 = vmatpush.msra.mxu0 %v2449
      %2657 = vmatpush.msra.mxu0 %v2448
      %2658 = vmatpush.msra.mxu0 %v2447
      %2659 = vmatpush.msra.mxu0 %v2446
      %2660 = vmatpush.msra.mxu0 %v2445
      %2661 = vmatpush.msra.mxu0 %v2444
      %2662 = vmatpush.msra.mxu0 %v2443
      %2663 = vmatpush.msra.mxu0 %v2442
      %2664 = vmatmul.f32.gmra.mxu0 %v2320
      %v2665 = vpop.f32.mrf.mxu0
      %v2666 = vadd.f32 %v2637, %v2665
      %2667 = vmatmul.f32.gmra.mxu0 %v2328
      %v2668 = vpop.f32.mrf.mxu0
      %v2669 = vadd.f32 %v2640, %v2668
      %2670 = vmatmul.f32.gmra.mxu0 %v2336
      %v2671 = vpop.f32.mrf.mxu0
      %v2672 = vadd.f32 %v2643, %v2671
      %2673 = vmatmul.f32.gmra.mxu0 %v2344
      %v2674 = vpop.f32.mrf.mxu0
      %v2675 = vadd.f32 %v2646, %v2674
      %2676 = vdwg.mxu0
      %2677 = vmatpush.msra.mxu0 %v2473
      %2678 = vmatpush.msra.mxu0 %v2472
      %2679 = vmatpush.msra.mxu0 %v2471
      %2680 = vmatpush.msra.mxu0 %v2470
      %2681 = vmatpush.msra.mxu0 %v2469
      %2682 = vmatpush.msra.mxu0 %v2468
      %2683 = vmatpush.msra.mxu0 %v2467
      %2684 = vmatpush.msra.mxu0 %v2466
      %2685 = vmatpush.msra.mxu0 %v2465
      %2686 = vmatpush.msra.mxu0 %v2464
      %2687 = vmatpush.msra.mxu0 %v2463
      %2688 = vmatpush.msra.mxu0 %v2462
      %2689 = vmatpush.msra.mxu0 %v2461
      %2690 = vmatpush.msra.mxu0 %v2460
      %2691 = vmatpush.msra.mxu0 %v2459
      %2692 = vmatpush.msra.mxu0 %v2458
      %2693 = vmatmul.f32.gmra.mxu0 %v2321
      %v2694 = vpop.f32.mrf.mxu0
      %v2695 = vadd.f32 %v2666, %v2694
      %2696 = vmatmul.f32.gmra.mxu0 %v2329
      %v2697 = vpop.f32.mrf.mxu0
      %v2698 = vadd.f32 %v2669, %v2697
      %2699 = vmatmul.f32.gmra.mxu0 %v2337
      %v2700 = vpop.f32.mrf.mxu0
      %v2701 = vadd.f32 %v2672, %v2700
      %2702 = vmatmul.f32.gmra.mxu0 %v2345
      %v2703 = vpop.f32.mrf.mxu0
      %v2704 = vadd.f32 %v2675, %v2703
      %2705 = vdwg.mxu0
      %v2706 = vand.u32 2147483647, %v2695
      %v2707 = vand.u32 2147483647, %v2698
      %v2708 = vand.u32 2147483647, %v2701
      %v2709 = vand.u32 2147483647, %v2704
      %v2710 = vld [vmem:[%s21] sm:$0xff]
      %v2711 = vld [vmem:[%s21 + $0x8] sm:$0xff]
      %v2712 = vld [vmem:[%s21 + $0x10] sm:$0xff]
      %v2713 = vld [vmem:[%s21 + $0x18] sm:$0xff]
      %v2714 = vld [vmem:[%s22] sm:$0x1]
      %v2716 = vperm.slane %v2714, 0
      %v2719 = vsel %vm1425, %v1541, 0
      %2721 = vmatpush.msra.mxu0 0.0
      %2722 = vmatpush.msra.mxu0 0.0
      %2723 = vmatpush.msra.mxu0 0.0
      %2724 = vmatpush.msra.mxu0 0.0
      %2725 = vmatpush.msra.mxu0 0.0
      %2726 = vmatpush.msra.mxu0 0.0
      %2727 = vmatpush.msra.mxu0 0.0
      %2728 = vmatpush.msra.mxu0 0.0
      %2729 = vmatpush.msra.mxu0 0.0
      %2730 = vmatpush.msra.mxu0 0.0
      %2731 = vmatpush.msra.mxu0 0.0
      %2732 = vmatpush.msra.mxu0 0.0
      %2733 = vmatpush.msra.mxu0 %v2713
      %2734 = vmatpush.msra.mxu0 %v2712
      %2735 = vmatpush.msra.mxu0 %v2711
      %2736 = vmatpush.msra.mxu0 %v2710
      %2737 = vmatmul.f32.gmra.mxu0 %v2719
      %v2738 = vpop.f32.mrf.mxu0
      %v2739 = vadd.f32 %v2716, %v2738
      %2740 = vdwg.mxu0
      %v2741 = vand.u32 2147483647, %v2739
      %v2742 = vld [vmem:[%s26] sm:$0xf]
      %v2744 = vsel %vm1543, %v866, 0
      %vm2746 = vcmask 1043456
      %v2748 = vsel %vm2746, %v2742, 0
      %2750 = vmatpush.msra.mxu0 0.0
      %2751 = vmatpush.msra.mxu0 0.0
      %2752 = vmatpush.msra.mxu0 0.0
      %2753 = vmatpush.msra.mxu0 0.0
      %2754 = vmatpush.msra.mxu0 0.0
      %2755 = vmatpush.msra.mxu0 0.0
      %2756 = vmatpush.msra.mxu0 0.0
      %2757 = vmatpush.msra.mxu0 0.0
      %2758 = vmatpush.msra.mxu0 0.0
      %2759 = vmatpush.msra.mxu0 0.0
      %2760 = vmatpush.msra.mxu0 0.0
      %2761 = vmatpush.msra.mxu0 0.0
      %2762 = vmatpush.msra.mxu0 0.0
      %2763 = vmatpush.msra.mxu0 0.0
      %2764 = vmatpush.msra.mxu0 0.0
      %2765 = vmatpush.msra.mxu0 %v2748
      %2766 = vmatmul.f32.gmra.mxu0 %v2744
      %v2767 = vpop.f32.mrf.mxu0
      %v2768 = vadd.f32 0.0, %v2767
      %2769 = vdwg.mxu0
      %v2770 = vmul.f32 %v1183, %v2768
      %v2772 = vsel %vm1425, %v2770, 0
      %2774 = vmatpush.msra.mxu0 0.0
      %2775 = vmatpush.msra.mxu0 0.0
      %2776 = vmatpush.msra.mxu0 0.0
      %2777 = vmatpush.msra.mxu0 0.0
      %2778 = vmatpush.msra.mxu0 0.0
      %2779 = vmatpush.msra.mxu0 0.0
      %2780 = vmatpush.msra.mxu0 0.0
      %2781 = vmatpush.msra.mxu0 0.0
      %2782 = vmatpush.msra.mxu0 0.0
      %2783 = vmatpush.msra.mxu0 0.0
      %2784 = vmatpush.msra.mxu0 0.0
      %2785 = vmatpush.msra.mxu0 0.0
      %2786 = vmatpush.msra.mxu0 %v2709
      %2787 = vmatpush.msra.mxu0 %v2708
      %2788 = vmatpush.msra.mxu0 %v2707
      %2789 = vmatpush.msra.mxu0 %v2706
      %2790 = vmatmul.f32.gmra.mxu0 %v2772
      %v2791 = vpop.f32.mrf.mxu0
      %v2792 = vadd.f32 0.0, %v2791
      %2793 = vdwg.mxu0
      %vm2794 = vcmp.gt.f32.partialorder %v2792, 0.0
      %v2795 = vmin.f32 %v2792, 0.0
      %v2796 = vmul.f32 %v2795, 1.442695
      %v2797 = vpow.pop %v2796
      %v2798 = vsub.f32 %v2797, 1.0
      %v2799 = vsel %vm2794, %v2792, %v2798
      %v2800 = vmul.f32 %v2799, %v2741
      %v2801 = vsel %vm1425, %v2800, 0.0
      %2802 = vadd.xlane.f32.xlu0 %v2801
      %v2803 = vpop.xlane.xlu0 %2802
      %v2804 = vadd.f32 %v2803, %v2739
      %2806 = vrot.lane.b32.xlu0 %v2804, 96
      %v2807 = vpop.permute.xlu0 %2806
      %vm2809 = vcmask 7168
      %2810 = vst.msk [vmem:[%s857] sm:$0xff] %vm2809, %v2807
      %p2811 = scmp.lt.s32.totalorder %s38, 1
      %s2812 = scalar_select %p2811, %s38, 1
      %s2813 = smul.addr %s2812, 8
      %s2814 = scalar_lea.vmem %s27, %s2813
      // Predicated region
      $region129: #{tpu_custom_call.1} parent=127 // pred_check
        %p2815 = pneg %p638
      $region130: #{tpu_custom_call.1} parent=127 // pred_check_branch
        %2817 = sbr.rel (%p2815) target = $region132
      $region131: #{tpu_custom_call.1} parent=127 // pred_region
        _
      $region132: #{tpu_custom_call.1} parent=127 // pred_fallthru
        _
    $region128: #{tpu_custom_call.1} parent=5 // pred_fallthru
      _
    %p2818 = scmp.le.s32.totalorder 2, %s33
    // Predicated region
    $region133: #{tpu_custom_call.1} parent=5 // pred_check
      %p2819 = pneg %p2818
    $region134: #{tpu_custom_call.1} parent=5 // pred_check_branch
      %2821 = sbr.rel (%p2819) target = $region136
    $region135: #{tpu_custom_call.1} parent=5 // pred_region
      %s2822 = ssub.s32 %s33, 2
      // Predicated region
      $region137: #{tpu_custom_call.1} parent=135 // pred_check
        %p2823 = pneg %p644
      $region138: #{tpu_custom_call.1} parent=135 // pred_check_branch
        %2825 = sbr.rel (%p2823) target = $region140
      $region139: #{tpu_custom_call.1} parent=135 // pred_region
        %p2826 = scmp.lt.s32.totalorder %s39, 1
        %s2827 = scalar_select %p2826, %s39, 1
        %s2828 = smul.addr %s2827, 8
        %s2829 = scalar_lea.vmem %s27, %s2828
      $region140: #{tpu_custom_call.1} parent=135 // pred_fallthru
        _
    $region136: #{tpu_custom_call.1} parent=5 // pred_fallthru
      _
  $region6: #{tpu_custom_call.1} parent=0 // loop_footer
    %s37 = sadd.s32 1, %s33
  $region7: #{tpu_custom_call.1} parent=0 // loop_footer_branch
    %32 = sbr.rel target = $region3
  $region8: #{tpu_custom_call.1} parent=0 // loop_exit
    _

</llo_original>
